<compile_context>
chip_gen: v5e
topology: v5e:2x2
jax: 0.10.0
libtpu: 0.0.40
codegen_flags: <defaults>
</compile_context>

<pallas_src>
import functools

import numpy as np

import jax
import jax.numpy as jnp
from jax.experimental import pallas as pl
from jax.experimental.pallas import tpu as pltpu

EPS = 1e-5  # InstanceNorm3d default eps


def _round_up(x, m):
    return (x + m - 1) // m * m


@functools.lru_cache(maxsize=1)
def _vmem_limit_bytes():
    # v5e/v6e (128 MiB VMEM) -> 64 MiB; v7x (64 MiB VMEM) -> 48 MiB (headroom for
    # double-buffering + compiler scratch).
    try:
        cap = int(pltpu.get_tpu_info().vmem_capacity_bytes)
    except Exception:  # pragma: no cover - conservative fallback
        cap = 64 * 1024 * 1024
    return int(min(64 * 1024 * 1024, (cap * 3) // 4))


# ----------------------------- Pallas kernels ------------------------------ #

def _make_layer_kernel(*, seg_terms, stack, k_rows, lseg, cout, count, norm):
    """Fused (grouped-GEMM conv  [+ InstanceNorm + PReLU | + bias]) kernel.

    seg_terms : per output segment, list of (weight_group_index, col_offset) GEMMs
    stack     : None -> each GEMM reads x rows [0:k_rows) at its own col offset
                (Cp, coffs) -> stack the shifted (Cp, Lseg) windows once in-kernel;
                each segment is a single GEMM against the stacked block
    k_rows    : contraction depth (rows of the activation operand)
    lseg      : lane-dense columns per output segment (multiple of 128)
    count     : number of valid spatial positions (for the norm statistics)
    norm      : True -> InstanceNorm + PReLU (bf16 out), False -> bias only (f32 out)
    """
    inv_count = 1.0 / float(count)
    n_seg = len(seg_terms)

    def _segments(x_ref, w_ref):
        xs = None
        if stack is not None:
            cp, coffs = stack
            # f32 pieces are sublane-tile aligned -> cheap, robust concat; single
            # cast back to bf16 feeds the MXU.
            xs = jnp.concatenate(
                [x_ref[0, 0:cp, c:c + lseg].astype(jnp.float32) for c in coffs],
                axis=0).astype(jnp.bfloat16)                       # (k_rows, lseg)
        for terms in seg_terms:
            acc = None
            for (g, coff) in terms:
                xin = xs if xs is not None else x_ref[0, 0:k_rows, coff:coff + lseg]
                y = jnp.dot(w_ref[g], xin, preferred_element_type=jnp.float32)
                acc = y if acc is None else acc + y
            yield acc

    if norm:
        def kernel(x_ref, w_ref, mask_ref, a_ref, o_ref, raw_ref):
            mask = mask_ref[...]                                   # (1, lseg) f32
            s1 = jnp.zeros((cout, 1), jnp.float32)
            s2 = jnp.zeros((cout, 1), jnp.float32)
            # pass 1: produce segments, park raw f32 values in VMEM, fuse moments
            for g, seg in enumerate(_segments(x_ref, w_ref)):
                sm = seg * mask
                s1 = s1 + jnp.sum(sm, axis=1, keepdims=True)
                s2 = s2 + jnp.sum(sm * seg, axis=1, keepdims=True)
                raw_ref[:, g * lseg:(g + 1) * lseg] = seg
            mean = s1 * inv_count
            var = jnp.maximum(s2 * inv_count - mean * mean, 0.0)
            inv_std = jax.lax.rsqrt(var + EPS)
            a = a_ref[0]                                           # PReLU slope (SMEM)
            # pass 2: normalize + PReLU, store bf16
            for g in range(n_seg):
                z = (raw_ref[:, g * lseg:(g + 1) * lseg] - mean) * inv_std
                z = jnp.where(z >= 0.0, z, a * z)
                o_ref[0, :, g * lseg:(g + 1) * lseg] = z.astype(o_ref.dtype)
        return kernel

    def kernel(x_ref, w_ref, b_ref, o_ref):
        b = b_ref[...]                                             # (cout, 1) f32
        for g, seg in enumerate(_segments(x_ref, w_ref)):
            o_ref[0, :, g * lseg:(g + 1) * lseg] = (seg + b).astype(o_ref.dtype)
    return kernel


def _fused_layer(xf, wstk, mask, prelu_a, bias, *, seg_terms, stack, k_rows,
                 lseg, cout, count, norm):
    """xf: (N, R, Lx) bf16; wstk: (NG, Cout, K) bf16; mask: (1, Lseg) f32."""
    N, R, Lx = xf.shape
    NG, _, Kw = wstk.shape
    n_seg = len(seg_terms)
    kernel = _make_layer_kernel(seg_terms=seg_terms, stack=stack, k_rows=k_rows,
                                lseg=lseg, cout=cout, count=count, norm=norm)

    in_specs = [
        pl.BlockSpec((1, R, Lx), lambda n: (n, 0, 0)),          # streamed activations
        pl.BlockSpec((NG, cout, Kw), lambda n: (0, 0, 0)),      # resident grouped weights
    ]
    args = [xf, wstk]
    scratch = []
    if norm:
        in_specs.append(pl.BlockSpec((1, lseg), lambda n: (0, 0)))
        args.append(mask)
        in_specs.append(pl.BlockSpec(memory_space=pltpu.MemorySpace.SMEM))
        args.append(jnp.asarray(prelu_a, jnp.float32).reshape(1))
        scratch = [pltpu.VMEM((cout, n_seg * lseg), jnp.float32)]   # raw segments
        out_dtype = jnp.bfloat16       # halve HBM writeback for normalized layers
    else:
        in_specs.append(pl.BlockSpec((cout, 1), lambda n: (0, 0)))
        args.append(bias.reshape(cout, 1).astype(jnp.float32))
        out_dtype = jnp.float32

    # TODO(synk): for realistic volumes add an S-tile grid axis ('parallel', sized
    # per-generation from get_tpu_info) with cross-tile moment accumulation, plus a
    # Cout-tile axis so v7x's two TensorCores stay busy when N is 1 or odd.
    return pl.pallas_call(
        kernel,
        out_shape=jax.ShapeDtypeStruct((N, cout, n_seg * lseg), out_dtype),
        grid=(N,),
        in_specs=in_specs,
        out_specs=pl.BlockSpec((1, cout, n_seg * lseg), lambda n: (n, 0, 0)),
        scratch_shapes=scratch,
        compiler_params=pltpu.CompilerParams(
            dimension_semantics=("parallel",),
            vmem_limit_bytes=_vmem_limit_bytes(),
        ),
    )(*args)


# ------------------------------- layer glue --------------------------------- #

def conv3d_down_block(x, w, prelu_a, stride):
    """Encode layer: Conv3d(k=3, pad=1, stride=s) + InstanceNorm + PReLU (bf16 out).

    x: (N, Cin, D, H, W);  w: torch Conv3d layout (Cout, Cin, 3, 3, 3).
    Strided conv via input-phase (space-to-depth) decomposition; taps sharing a
    column offset are fused into one deep-K GEMM.
    """
    N, Cin, D, H, W = x.shape
    Cout = w.shape[0]
    s = stride
    Do, Ho, Wo = [(d - 1) // s + 1 for d in (D, H, W)]
    Dp, Hp, Wp = D + 2, H + 2, W + 2
    Dq, Hq, Wq = [-(-p // s) for p in (Dp, Hp, Wp)]
    Cp = _round_up(Cin, 8)

    # all inter-layer glue in bf16
    xb = x.astype(jnp.bfloat16)
    xp = jnp.pad(xb, ((0, 0), (0, Cp - Cin),
                      (1, s * Dq - Dp + 1), (1, s * Hq - Hp + 1), (1, s * Wq - Wp + 1)))
    # space-to-depth phase split: rows = (phase, channel), cols = quotient grid
    # TODO(synk): at realistic sizes express this phase gather with strided-DMA
    # index maps instead of an XLA transpose (saves an HBM round trip per layer).
    xp = xp.reshape(N, Cp, Dq, s, Hq, s, Wq, s).transpose(0, 3, 5, 7, 1, 2, 4, 6)

    Lq = Dq * Hq * Wq
    Lseg = _round_up(Lq, 128)
    R = s * s * s * Cp

    # group taps by shared column offset (kd//s, kh//s, kw//s): one GEMM per group,
    # (Cout x s^3*Cp) @ (s^3*Cp x Lseg), with zero weight rows for missing phases.
    qs = -(-3 // s)
    zeros_blk = jnp.zeros((Cout, Cp), w.dtype)
    wmats, coffs = [], []
    for qd in range(qs):
        for qh in range(qs):
            for qw in range(qs):
                blocks = []
                for pd in range(s):
                    for ph in range(s):
                        for pw in range(s):
                            kd, kh, kw = qd * s + pd, qh * s + ph, qw * s + pw
                            if kd < 3 and kh < 3 and kw < 3:
                                blocks.append(jnp.pad(w[:, :, kd, kh, kw],
                                                      ((0, 0), (0, Cp - Cin))))
                            else:
                                blocks.append(zeros_blk)
                wmats.append(jnp.concatenate(blocks, axis=1))       # (Cout, R)
                coffs.append(qd * Hq * Wq + qh * Wq + qw)
    wstk = jnp.stack(wmats).astype(jnp.bfloat16)                    # (NG, Cout, R)
    seg_terms = [[(g, coffs[g]) for g in range(len(coffs))]]

    Lx = _round_up(max(coffs) + Lseg, 128)
    xf = jnp.pad(xp.reshape(N, R, Lq), ((0, 0), (0, 0), (0, Lx - Lq)))

    # mask of valid (non over-computed) output positions within the padded grid
    m = np.zeros((Dq, Hq, Wq), np.float32)
    m[:Do, :Ho, :Wo] = 1.0
    mask = jnp.asarray(np.pad(m.reshape(1, Lq), ((0, 0), (0, Lseg - Lq))))

    y = _fused_layer(xf, wstk, mask, prelu_a, None, seg_terms=seg_terms, stack=None,
                     k_rows=R, lseg=Lseg, cout=Cout, count=Do * Ho * Wo, norm=True)
    # crop over-computed border positions (bf16 glue)
    y = y[:, :, :Lq].reshape(N, Cout, Dq, Hq, Wq)[:, :, :Do, :Ho, :Wo]
    return y


def conv3d_up_block(x, w, prelu_a, bias, stride, conv_only):
    """Decode layer: ConvTranspose3d(k=3, pad=1, out_pad=s-1) [+ IN + PReLU].

    x: (N, Cin, D, H, W);  w: torch ConvTranspose3d layout (Cin, Cout, 3, 3, 3).
    Output-phase (sub-pixel) decomposition; the distinct shifted activation
    windows are stacked once in-kernel and each output phase is one deep-K GEMM.
    """
    N, Cin, D, H, W = x.shape
    Cout = w.shape[1]
    s = stride
    Dp, Hp, Wp = D + 2, H + 2, W + 2
    Cp = _round_up(Cin, 8)
    Lp = Dp * Hp * Wp
    Lseg = _round_up(Lp, 128)

    xb = x.astype(jnp.bfloat16)
    xp = jnp.pad(xb, ((0, 0), (0, Cp - Cin), (1, 1), (1, 1), (1, 1))).reshape(N, Cp, Lp)

    # distinct activation column offsets touched by any (output-phase, tap) pair
    od_vals = sorted({1 + (r + k - 1) // s
                      for r in range(s) for k in range(3) if (r + k - 1) % s == 0})
    coff_tuples = [(a, b, c) for a in od_vals for b in od_vals for c in od_vals]
    coffs = [(a * Hp + b) * Wp + c for (a, b, c) in coff_tuples]
    k_rows = len(coffs) * Cp

    Lx = _round_up(max(coffs) + Lseg, 128)
    xf = jnp.pad(xp, ((0, 0), (0, 0), (0, Lx - Lp)))

    # one GEMM per output phase against the stacked activations: weight
    # (Cout, n_coffs*Cp) with zero blocks where the phase has no tap at that offset
    zeros_blk = jnp.zeros((Cout, Cp), w.dtype)
    wmats, seg_terms = [], []
    for gi, (rd, rh, rw) in enumerate(
            [(a, b, c) for a in range(s) for b in range(s) for c in range(s)]):
        blocks = []
        for (od, oh, ow) in coff_tuples:
            kd = s * (od - 1) + 1 - rd
            kh = s * (oh - 1) + 1 - rh
            kw = s * (ow - 1) + 1 - rw
            if 0 <= kd <= 2 and 0 <= kh <= 2 and 0 <= kw <= 2:
                # flipped kernel tap, transposed to (Cout, Cin)
                blocks.append(jnp.pad(w[:, :, 2 - kd, 2 - kh, 2 - kw].T,
                                      ((0, 0), (0, Cp - Cin))))
            else:
                blocks.append(zeros_blk)
        wmats.append(jnp.concatenate(blocks, axis=1))               # (Cout, k_rows)
        seg_terms.append([(gi, 0)])
    wstk = jnp.stack(wmats).astype(jnp.bfloat16)                    # (G, Cout, k_rows)

    m = np.zeros((Dp, Hp, Wp), np.float32)
    m[:D, :H, :W] = 1.0
    mask = jnp.asarray(np.pad(m.reshape(1, Lp), ((0, 0), (0, Lseg - Lp))))

    G = s * s * s
    y = _fused_layer(xf, wstk, mask, prelu_a, bias, seg_terms=seg_terms,
                     stack=(Cp, coffs), k_rows=k_rows, lseg=Lseg, cout=Cout,
                     count=G * D * H * W, norm=not conv_only)

    # crop + depth-to-space phase interleave (bf16 for normalized layers)
    y = y.reshape(N, Cout, G, Lseg)[:, :, :, :Lp]
    y = y.reshape(N, Cout, s, s, s, Dp, Hp, Wp)[:, :, :, :, :, :D, :H, :W]
    y = y.transpose(0, 1, 5, 2, 6, 3, 7, 4).reshape(N, Cout, s * D, s * H, s * W)
    return y


# -------------------------- model params / forward -------------------------- #

def init_autoencoder3d_params(key, in_channels, out_channels, channels, strides):
    assert len(channels) == len(strides)
    params = {"encode": [], "decode": []}
    keys = iter(jax.random.split(key, 4 * (2 * len(channels) + 1)))
    c_prev = in_channels
    for c in channels:                                     # encode Conv3d layers
        w = 0.1 * jax.random.normal(next(keys), (c, c_prev, 3, 3, 3), jnp.float32)
        b = 0.01 * jax.random.normal(next(keys), (c,), jnp.float32)
        params["encode"].append((w, b, jnp.float32(0.25)))  # PReLU init a=0.25
        c_prev = c
    decode_channels = list(channels[-2::-1]) + [out_channels]
    for c in decode_channels:                              # decode ConvTranspose3d
        w = 0.1 * jax.random.normal(next(keys), (c_prev, c, 3, 3, 3), jnp.float32)
        b = 0.01 * jax.random.normal(next(keys), (c,), jnp.float32)
        params["decode"].append((w, b, jnp.float32(0.25)))
        c_prev = c
    return params


def autoencoder3d_forward(params, x_ncdhw, strides):
    x = x_ncdhw                                            # channel-major throughout
    for (w, b, a), s in zip(params["encode"], strides):    # encode (bias cancelled by IN)
        x = conv3d_down_block(x, w, a, s)                  # bf16 activations
    latent = x.astype(jnp.float32)                         # intermediate = Identity
    n_dec = len(params["decode"])
    for i, ((w, b, a), s) in enumerate(zip(params["decode"], strides[::-1])):
        conv_only = i == n_dec - 1                         # last layer: conv + bias only
        x = conv3d_up_block(x, w, a, b, s, conv_only)
    return latent, x


# --------------------------- pure-JAX reference ----------------------------- #
# Matches the kernel's precision choices (bf16 MXU operands + bf16 inter-layer
# activations, f32 accumulation / statistics) so the check validates the
# conv / phase / norm structure.

def _ref_forward(params, x_ncdhw, strides):
    dn = jax.lax.conv_dimension_numbers(
        (1, 1, 1, 1, 1), (1, 1, 1, 1, 1), ("NCDHW", "OIDHW", "NCDHW"))

    def inorm_prelu(y, a):
        mean = jnp.mean(y, axis=(2, 3, 4), keepdims=True)
        var = jnp.mean((y - mean) ** 2, axis=(2, 3, 4), keepdims=True)
        z = (y - mean) * jax.lax.rsqrt(var + EPS)
        return jnp.where(z >= 0, z, a * z)

    x = x_ncdhw
    for (w, b, a), s in zip(params["encode"], strides):
        y = jax.lax.conv_general_dilated(
            x.astype(jnp.bfloat16), w.astype(jnp.bfloat16), (s, s, s), [(1, 1)] * 3,
            dimension_numbers=dn, preferred_element_type=jnp.float32)
        y = y + b.reshape(1, -1, 1, 1, 1)
        x = inorm_prelu(y, a).astype(jnp.bfloat16)          # kernel stores bf16
    latent = x.astype(jnp.float32)
    n_dec = len(params["decode"])
    for i, ((w, b, a), s) in enumerate(zip(params["decode"], strides[::-1])):
        w_eq = jnp.flip(w, axis=(2, 3, 4)).transpose(1, 0, 2, 3, 4)  # (Cout, Cin, 3,3,3)
        y = jax.lax.conv_general_dilated(
            x.astype(jnp.bfloat16), w_eq.astype(jnp.bfloat16), (1, 1, 1), [(1, s)] * 3,
            lhs_dilation=(s, s, s), dimension_numbers=dn,
            preferred_element_type=jnp.float32)
        y = y + b.reshape(1, -1, 1, 1, 1)
        x = y if i == n_dec - 1 else inorm_prelu(y, a).astype(jnp.bfloat16)
    return latent, x


# ----------------------------------- main ----------------------------------- #

if __name__ == "__main__":
    # AutoEncoder3D(spatial_dims=3, in_channels=2, out_channels=2,
    #               channels=(4, 8), strides=(2, 2))
    in_channels, out_channels = 2, 2
    channels, strides = (4, 8), (2, 2)

    key = jax.random.PRNGKey(0)
    pkey, xkey = jax.random.split(key)
    params = init_autoencoder3d_params(pkey, in_channels, out_channels, channels, strides)
    x = jax.random.normal(xkey, (2, in_channels, 8, 8, 8), jnp.float32)  # NCDHW

    fwd = jax.jit(functools.partial(autoencoder3d_forward, strides=strides))
    latent, out = fwd(params, x)
    jax.block_until_ready((latent, out))

    assert latent.shape == (2, channels[-1], 2, 2, 2), latent.shape
    assert out.shape == (2, out_channels, 8, 8, 8), out.shape
    assert latent.dtype == jnp.float32 and out.dtype == jnp.float32

    # numerical check against an XLA reference with matching precision choices;
    # tolerance covers one bf16 ulp on the bf16-stored normalized activations
    # (accumulation-order differences may round differently at a few elements).
    lat_ref, out_ref = _ref_forward(params, x, strides)
    lat_err = float(jnp.max(jnp.abs(latent - lat_ref)))
    out_err = float(jnp.max(jnp.abs(out - out_ref)))
    assert lat_err < 5e-2, lat_err
    assert out_err < 5e-2, out_err

    print("KERNEL_OK")
</pallas_src>

<mosaic_0001>
module attributes {stable_mosaic.version = 11 : i64} {
  func.func @kernel(%arg0: i32, %arg1: memref<1x64x256xbf16, #tpu.memory_space<vmem>>, %arg2: memref<8x4x64xbf16, #tpu.memory_space<vmem>>, %arg3: memref<1x128xf32, #tpu.memory_space<vmem>>, %arg4: memref<1xf32, #tpu.memory_space<smem>>, %arg5: memref<1x4x128xbf16, #tpu.memory_space<vmem>>, %arg6: memref<4x128xf32, #tpu.memory_space<vmem>>) attributes {dimension_semantics = [#tpu.dimension_semantics<parallel>], iteration_bounds = array<i64: 2>, scalar_prefetch = 0 : i64, scratch_operands = 1 : i64, tpu.core_type = #tpu.core_type<tc>, window_params = [{transform_indices = @transform_0, window_bounds = array<i64: 1, 64, 256>}, {pipeline_mode = #tpu.pipeline_mode<synchronous>, transform_indices = @transform_1, window_bounds = array<i64: 8, 4, 64>}, {pipeline_mode = #tpu.pipeline_mode<synchronous>, transform_indices = @transform_2, window_bounds = array<i64: 1, 128>}, {transform_indices = @transform_3, window_bounds = array<i64: 1>}, {transform_indices = @transform_4, window_bounds = array<i64: 1, 4, 128>}]} {
    %c0 = arith.constant 0 : index
    %c0_0 = arith.constant 0 : index
    %0 = vector.load %arg3[%c0, %c0_0] : memref<1x128xf32, #tpu.memory_space<vmem>>, vector<1x128xf32>
    %cst = arith.constant 0.000000e+00 : f32
    %1 = vector.broadcast %cst : f32 to vector<4x1xf32>
    %cst_1 = arith.constant 0.000000e+00 : f32
    %2 = vector.broadcast %cst_1 : f32 to vector<4x1xf32>
    %c0_2 = arith.constant 0 : index
    %c0_3 = arith.constant 0 : index
    %c0_4 = arith.constant 0 : index
    %3 = vector.load %arg1[%c0_2, %c0_3, %c0_4] : memref<1x64x256xbf16, #tpu.memory_space<vmem>>, vector<1x64x128xbf16>
    %4 = vector.shape_cast %3 : vector<1x64x128xbf16> to vector<64x128xbf16>
    %c0_5 = arith.constant 0 : index
    %c0_6 = arith.constant 0 : index
    %c0_7 = arith.constant 0 : index
    %5 = vector.load %arg2[%c0_5, %c0_6, %c0_7] : memref<8x4x64xbf16, #tpu.memory_space<vmem>>, vector<1x4x64xbf16>
    %6 = vector.shape_cast %5 : vector<1x4x64xbf16> to vector<4x64xbf16>
    %cst_8 = arith.constant dense<0.000000e+00> : vector<4x128xf32>
    %7 = tpu.matmul %6, %4, %cst_8 {dimension_numbers = #tpu.dot_dimension_numbers<[1], [0], [0], [1], [0, 0, 1, 1], [], []>} : vector<4x64xbf16>, vector<64x128xbf16>, vector<4x128xf32> -> vector<4x128xf32>
    %c0_9 = arith.constant 0 : index
    %c0_10 = arith.constant 0 : index
    %c1 = arith.constant 1 : index
    %8 = vector.load %arg1[%c0_9, %c0_10, %c1] : memref<1x64x256xbf16, #tpu.memory_space<vmem>>, vector<1x64x128xbf16>
    %9 = vector.shape_cast %8 : vector<1x64x128xbf16> to vector<64x128xbf16>
    %c1_11 = arith.constant 1 : index
    %c0_12 = arith.constant 0 : index
    %c0_13 = arith.constant 0 : index
    %10 = vector.load %arg2[%c1_11, %c0_12, %c0_13] : memref<8x4x64xbf16, #tpu.memory_space<vmem>>, vector<1x4x64xbf16>
    %11 = vector.shape_cast %10 : vector<1x4x64xbf16> to vector<4x64xbf16>
    %cst_14 = arith.constant dense<0.000000e+00> : vector<4x128xf32>
    %12 = tpu.matmul %11, %9, %cst_14 {dimension_numbers = #tpu.dot_dimension_numbers<[1], [0], [0], [1], [0, 0, 1, 1], [], []>} : vector<4x64xbf16>, vector<64x128xbf16>, vector<4x128xf32> -> vector<4x128xf32>
    %13 = arith.addf %7, %12 : vector<4x128xf32>
    %c0_15 = arith.constant 0 : index
    %c0_16 = arith.constant 0 : index
    %c5 = arith.constant 5 : index
    %14 = vector.load %arg1[%c0_15, %c0_16, %c5] : memref<1x64x256xbf16, #tpu.memory_space<vmem>>, vector<1x64x128xbf16>
    %15 = vector.shape_cast %14 : vector<1x64x128xbf16> to vector<64x128xbf16>
    %c2 = arith.constant 2 : index
    %c0_17 = arith.constant 0 : index
    %c0_18 = arith.constant 0 : index
    %16 = vector.load %arg2[%c2, %c0_17, %c0_18] : memref<8x4x64xbf16, #tpu.memory_space<vmem>>, vector<1x4x64xbf16>
    %17 = vector.shape_cast %16 : vector<1x4x64xbf16> to vector<4x64xbf16>
    %cst_19 = arith.constant dense<0.000000e+00> : vector<4x128xf32>
    %18 = tpu.matmul %17, %15, %cst_19 {dimension_numbers = #tpu.dot_dimension_numbers<[1], [0], [0], [1], [0, 0, 1, 1], [], []>} : vector<4x64xbf16>, vector<64x128xbf16>, vector<4x128xf32> -> vector<4x128xf32>
    %19 = arith.addf %13, %18 : vector<4x128xf32>
    %c0_20 = arith.constant 0 : index
    %c0_21 = arith.constant 0 : index
    %c6 = arith.constant 6 : index
    %20 = vector.load %arg1[%c0_20, %c0_21, %c6] : memref<1x64x256xbf16, #tpu.memory_space<vmem>>, vector<1x64x128xbf16>
    %21 = vector.shape_cast %20 : vector<1x64x128xbf16> to vector<64x128xbf16>
    %c3 = arith.constant 3 : index
    %c0_22 = arith.constant 0 : index
    %c0_23 = arith.constant 0 : index
    %22 = vector.load %arg2[%c3, %c0_22, %c0_23] : memref<8x4x64xbf16, #tpu.memory_space<vmem>>, vector<1x4x64xbf16>
    %23 = vector.shape_cast %22 : vector<1x4x64xbf16> to vector<4x64xbf16>
    %cst_24 = arith.constant dense<0.000000e+00> : vector<4x128xf32>
    %24 = tpu.matmul %23, %21, %cst_24 {dimension_numbers = #tpu.dot_dimension_numbers<[1], [0], [0], [1], [0, 0, 1, 1], [], []>} : vector<4x64xbf16>, vector<64x128xbf16>, vector<4x128xf32> -> vector<4x128xf32>
    %25 = arith.addf %19, %24 : vector<4x128xf32>
    %c0_25 = arith.constant 0 : index
    %c0_26 = arith.constant 0 : index
    %c25 = arith.constant 25 : index
    %26 = vector.load %arg1[%c0_25, %c0_26, %c25] : memref<1x64x256xbf16, #tpu.memory_space<vmem>>, vector<1x64x128xbf16>
    %27 = vector.shape_cast %26 : vector<1x64x128xbf16> to vector<64x128xbf16>
    %c4 = arith.constant 4 : index
    %c0_27 = arith.constant 0 : index
    %c0_28 = arith.constant 0 : index
    %28 = vector.load %arg2[%c4, %c0_27, %c0_28] : memref<8x4x64xbf16, #tpu.memory_space<vmem>>, vector<1x4x64xbf16>
    %29 = vector.shape_cast %28 : vector<1x4x64xbf16> to vector<4x64xbf16>
    %cst_29 = arith.constant dense<0.000000e+00> : vector<4x128xf32>
    %30 = tpu.matmul %29, %27, %cst_29 {dimension_numbers = #tpu.dot_dimension_numbers<[1], [0], [0], [1], [0, 0, 1, 1], [], []>} : vector<4x64xbf16>, vector<64x128xbf16>, vector<4x128xf32> -> vector<4x128xf32>
    %31 = arith.addf %25, %30 : vector<4x128xf32>
    %c0_30 = arith.constant 0 : index
    %c0_31 = arith.constant 0 : index
    %c26 = arith.constant 26 : index
    %32 = vector.load %arg1[%c0_30, %c0_31, %c26] : memref<1x64x256xbf16, #tpu.memory_space<vmem>>, vector<1x64x128xbf16>
    %33 = vector.shape_cast %32 : vector<1x64x128xbf16> to vector<64x128xbf16>
    %c5_32 = arith.constant 5 : index
    %c0_33 = arith.constant 0 : index
    %c0_34 = arith.constant 0 : index
    %34 = vector.load %arg2[%c5_32, %c0_33, %c0_34] : memref<8x4x64xbf16, #tpu.memory_space<vmem>>, vector<1x4x64xbf16>
    %35 = vector.shape_cast %34 : vector<1x4x64xbf16> to vector<4x64xbf16>
    %cst_35 = arith.constant dense<0.000000e+00> : vector<4x128xf32>
    %36 = tpu.matmul %35, %33, %cst_35 {dimension_numbers = #tpu.dot_dimension_numbers<[1], [0], [0], [1], [0, 0, 1, 1], [], []>} : vector<4x64xbf16>, vector<64x128xbf16>, vector<4x128xf32> -> vector<4x128xf32>
    %37 = arith.addf %31, %36 : vector<4x128xf32>
    %c0_36 = arith.constant 0 : index
    %c0_37 = arith.constant 0 : index
    %c30 = arith.constant 30 : index
    %38 = vector.load %arg1[%c0_36, %c0_37, %c30] : memref<1x64x256xbf16, #tpu.memory_space<vmem>>, vector<1x64x128xbf16>
    %39 = vector.shape_cast %38 : vector<1x64x128xbf16> to vector<64x128xbf16>
    %c6_38 = arith.constant 6 : index
    %c0_39 = arith.constant 0 : index
    %c0_40 = arith.constant 0 : index
    %40 = vector.load %arg2[%c6_38, %c0_39, %c0_40] : memref<8x4x64xbf16, #tpu.memory_space<vmem>>, vector<1x4x64xbf16>
    %41 = vector.shape_cast %40 : vector<1x4x64xbf16> to vector<4x64xbf16>
    %cst_41 = arith.constant dense<0.000000e+00> : vector<4x128xf32>
    %42 = tpu.matmul %41, %39, %cst_41 {dimension_numbers = #tpu.dot_dimension_numbers<[1], [0], [0], [1], [0, 0, 1, 1], [], []>} : vector<4x64xbf16>, vector<64x128xbf16>, vector<4x128xf32> -> vector<4x128xf32>
    %43 = arith.addf %37, %42 : vector<4x128xf32>
    %c0_42 = arith.constant 0 : index
    %c0_43 = arith.constant 0 : index
    %c31 = arith.constant 31 : index
    %44 = vector.load %arg1[%c0_42, %c0_43, %c31] : memref<1x64x256xbf16, #tpu.memory_space<vmem>>, vector<1x64x128xbf16>
    %45 = vector.shape_cast %44 : vector<1x64x128xbf16> to vector<64x128xbf16>
    %c7 = arith.constant 7 : index
    %c0_44 = arith.constant 0 : index
    %c0_45 = arith.constant 0 : index
    %46 = vector.load %arg2[%c7, %c0_44, %c0_45] : memref<8x4x64xbf16, #tpu.memory_space<vmem>>, vector<1x4x64xbf16>
    %47 = vector.shape_cast %46 : vector<1x4x64xbf16> to vector<4x64xbf16>
    %cst_46 = arith.constant dense<0.000000e+00> : vector<4x128xf32>
    %48 = tpu.matmul %47, %45, %cst_46 {dimension_numbers = #tpu.dot_dimension_numbers<[1], [0], [0], [1], [0, 0, 1, 1], [], []>} : vector<4x64xbf16>, vector<64x128xbf16>, vector<4x128xf32> -> vector<4x128xf32>
    %49 = arith.addf %43, %48 : vector<4x128xf32>
    %50 = vector.broadcast %0 : vector<1x128xf32> to vector<4x128xf32>
    %51 = arith.mulf %49, %50 : vector<4x128xf32>
    %cst_47 = arith.constant dense<0.000000e+00> : vector<4xf32>
    %52 = vector.multi_reduction <add>, %51, %cst_47 [1] : vector<4x128xf32> to vector<4xf32>
    %53 = vector.shape_cast %52 : vector<4xf32> to vector<4x1xf32>
    %54 = arith.addf %1, %53 : vector<4x1xf32>
    %55 = arith.mulf %51, %49 : vector<4x128xf32>
    %cst_48 = arith.constant dense<0.000000e+00> : vector<4xf32>
    %56 = vector.multi_reduction <add>, %55, %cst_48 [1] : vector<4x128xf32> to vector<4xf32>
    %57 = vector.shape_cast %56 : vector<4xf32> to vector<4x1xf32>
    %58 = arith.addf %2, %57 : vector<4x1xf32>
    %c0_49 = arith.constant 0 : index
    %c0_50 = arith.constant 0 : index
    %59 = vector.load %arg6[%c0_49, %c0_50] : memref<4x128xf32, #tpu.memory_space<vmem>>, vector<4x128xf32>
    tpu.vector_store %arg6[%c0_49, %c0_50], %49 {strides = array<i32>} : memref<4x128xf32, #tpu.memory_space<vmem>>, vector<4x128xf32>,
    %cst_51 = arith.constant 1.562500e-02 : f32
    %60 = vector.broadcast %cst_51 : f32 to vector<4x1xf32>
    %61 = arith.mulf %54, %60 : vector<4x1xf32>
    %cst_52 = arith.constant 1.562500e-02 : f32
    %62 = vector.broadcast %cst_52 : f32 to vector<4x1xf32>
    %63 = arith.mulf %58, %62 : vector<4x1xf32>
    %64 = arith.mulf %61, %61 : vector<4x1xf32>
    %65 = arith.subf %63, %64 : vector<4x1xf32>
    %cst_53 = arith.constant 0.000000e+00 : f32
    %66 = vector.broadcast %cst_53 : f32 to vector<4x1xf32>
    %67 = arith.maximumf %65, %66 : vector<4x1xf32>
    %cst_54 = arith.constant 9.99999974E-6 : f32
    %68 = vector.broadcast %cst_54 : f32 to vector<4x1xf32>
    %69 = arith.addf %67, %68 : vector<4x1xf32>
    %70 = math.rsqrt %69 : vector<4x1xf32>
    %c0_55 = arith.constant 0 : index
    %71 = memref.load %arg4[%c0_55] : memref<1xf32, #tpu.memory_space<smem>>
    %c0_56 = arith.constant 0 : index
    %c0_57 = arith.constant 0 : index
    %72 = vector.load %arg6[%c0_56, %c0_57] : memref<4x128xf32, #tpu.memory_space<vmem>>, vector<4x128xf32>
    %73 = vector.broadcast %61 : vector<4x1xf32> to vector<4x128xf32>
    %74 = arith.subf %72, %73 : vector<4x128xf32>
    %75 = vector.broadcast %70 : vector<4x1xf32> to vector<4x128xf32>
    %76 = arith.mulf %74, %75 : vector<4x128xf32>
    %cst_58 = arith.constant 0.000000e+00 : f32
    %77 = vector.broadcast %cst_58 : f32 to vector<4x128xf32>
    %78 = arith.cmpf oge, %76, %77 : vector<4x128xf32>
    %79 = vector.broadcast %71 : f32 to vector<4x128xf32>
    %80 = arith.mulf %79, %76 : vector<4x128xf32>
    %81 = arith.select %78, %76, %80 : vector<4x128xi1>, vector<4x128xf32>
    %82 = arith.truncf %81 : vector<4x128xf32> to vector<4x128xbf16>
    %c0_59 = arith.constant 0 : index
    %c0_60 = arith.constant 0 : index
    %c0_61 = arith.constant 0 : index
    %83 = vector.load %arg5[%c0_59, %c0_60, %c0_61] : memref<1x4x128xbf16, #tpu.memory_space<vmem>>, vector<1x4x128xbf16>
    %84 = vector.shape_cast %83 : vector<1x4x128xbf16> to vector<4x128xbf16>
    %85 = vector.shape_cast %82 : vector<4x128xbf16> to vector<1x4x128xbf16>
    tpu.vector_store %arg5[%c0_59, %c0_60, %c0_61], %85 {strides = array<i32>} : memref<1x4x128xbf16, #tpu.memory_space<vmem>>, vector<1x4x128xbf16>,
    return
  }
  func.func @transform_0(%arg0: i32) -> (i32, i32, i32) {
    %c0_i32 = arith.constant 0 : i32
    %c0_i32_0 = arith.constant 0 : i32
    %c0_i32_1 = arith.constant 0 : i32
    return %arg0, %c0_i32, %c0_i32_0 : i32, i32, i32
  }
  func.func @transform_1(%arg0: i32) -> (i32, i32, i32) {
    %c0_i32 = arith.constant 0 : i32
    %c0_i32_0 = arith.constant 0 : i32
    %c0_i32_1 = arith.constant 0 : i32
    %c0_i32_2 = arith.constant 0 : i32
    return %c0_i32, %c0_i32_0, %c0_i32_1 : i32, i32, i32
  }
  func.func @transform_2(%arg0: i32) -> (i32, i32) {
    %c0_i32 = arith.constant 0 : i32
    %c0_i32_0 = arith.constant 0 : i32
    %c0_i32_1 = arith.constant 0 : i32
    return %c0_i32, %c0_i32_0 : i32, i32
  }
  func.func @transform_3(%arg0: i32) -> i32 {
    %c0_i32 = arith.constant 0 : i32
    %c0_i32_0 = arith.constant 0 : i32
    return %c0_i32 : i32
  }
  func.func @transform_4(%arg0: i32) -> (i32, i32, i32) {
    %c0_i32 = arith.constant 0 : i32
    %c0_i32_0 = arith.constant 0 : i32
    %c0_i32_1 = arith.constant 0 : i32
    return %arg0, %c0_i32, %c0_i32_0 : i32, i32, i32
  }
}

module attributes {stable_mosaic.version = 11 : i64} {
  func.func @kernel(%arg0: i32, %arg1: memref<1x64x256xbf16, #tpu.memory_space<vmem>>, %arg2: memref<8x8x64xbf16, #tpu.memory_space<vmem>>, %arg3: memref<1x128xf32, #tpu.memory_space<vmem>>, %arg4: memref<1xf32, #tpu.memory_space<smem>>, %arg5: memref<1x8x128xbf16, #tpu.memory_space<vmem>>, %arg6: memref<8x128xf32, #tpu.memory_space<vmem>>) attributes {dimension_semantics = [#tpu.dimension_semantics<parallel>], iteration_bounds = array<i64: 2>, scalar_prefetch = 0 : i64, scratch_operands = 1 : i64, tpu.core_type = #tpu.core_type<tc>, window_params = [{transform_indices = @transform_0, window_bounds = array<i64: 1, 64, 256>}, {pipeline_mode = #tpu.pipeline_mode<synchronous>, transform_indices = @transform_1, window_bounds = array<i64: 8, 8, 64>}, {pipeline_mode = #tpu.pipeline_mode<synchronous>, transform_indices = @transform_2, window_bounds = array<i64: 1, 128>}, {transform_indices = @transform_3, window_bounds = array<i64: 1>}, {transform_indices = @transform_4, window_bounds = array<i64: 1, 8, 128>}]} {
    %c0 = arith.constant 0 : index
    %c0_0 = arith.constant 0 : index
    %0 = vector.load %arg3[%c0, %c0_0] : memref<1x128xf32, #tpu.memory_space<vmem>>, vector<1x128xf32>
    %cst = arith.constant 0.000000e+00 : f32
    %1 = vector.broadcast %cst : f32 to vector<8x1xf32>
    %cst_1 = arith.constant 0.000000e+00 : f32
    %2 = vector.broadcast %cst_1 : f32 to vector<8x1xf32>
    %c0_2 = arith.constant 0 : index
    %c0_3 = arith.constant 0 : index
    %c0_4 = arith.constant 0 : index
    %3 = vector.load %arg1[%c0_2, %c0_3, %c0_4] : memref<1x64x256xbf16, #tpu.memory_space<vmem>>, vector<1x64x128xbf16>
    %4 = vector.shape_cast %3 : vector<1x64x128xbf16> to vector<64x128xbf16>
    %c0_5 = arith.constant 0 : index
    %c0_6 = arith.constant 0 : index
    %c0_7 = arith.constant 0 : index
    %5 = vector.load %arg2[%c0_5, %c0_6, %c0_7] : memref<8x8x64xbf16, #tpu.memory_space<vmem>>, vector<1x8x64xbf16>
    %6 = vector.shape_cast %5 : vector<1x8x64xbf16> to vector<8x64xbf16>
    %cst_8 = arith.constant dense<0.000000e+00> : vector<8x128xf32>
    %7 = tpu.matmul %6, %4, %cst_8 {dimension_numbers = #tpu.dot_dimension_numbers<[1], [0], [0], [1], [0, 0, 1, 1], [], []>} : vector<8x64xbf16>, vector<64x128xbf16>, vector<8x128xf32> -> vector<8x128xf32>
    %c0_9 = arith.constant 0 : index
    %c0_10 = arith.constant 0 : index
    %c1 = arith.constant 1 : index
    %8 = vector.load %arg1[%c0_9, %c0_10, %c1] : memref<1x64x256xbf16, #tpu.memory_space<vmem>>, vector<1x64x128xbf16>
    %9 = vector.shape_cast %8 : vector<1x64x128xbf16> to vector<64x128xbf16>
    %c1_11 = arith.constant 1 : index
    %c0_12 = arith.constant 0 : index
    %c0_13 = arith.constant 0 : index
    %10 = vector.load %arg2[%c1_11, %c0_12, %c0_13] : memref<8x8x64xbf16, #tpu.memory_space<vmem>>, vector<1x8x64xbf16>
    %11 = vector.shape_cast %10 : vector<1x8x64xbf16> to vector<8x64xbf16>
    %cst_14 = arith.constant dense<0.000000e+00> : vector<8x128xf32>
    %12 = tpu.matmul %11, %9, %cst_14 {dimension_numbers = #tpu.dot_dimension_numbers<[1], [0], [0], [1], [0, 0, 1, 1], [], []>} : vector<8x64xbf16>, vector<64x128xbf16>, vector<8x128xf32> -> vector<8x128xf32>
    %13 = arith.addf %7, %12 : vector<8x128xf32>
    %c0_15 = arith.constant 0 : index
    %c0_16 = arith.constant 0 : index
    %c3 = arith.constant 3 : index
    %14 = vector.load %arg1[%c0_15, %c0_16, %c3] : memref<1x64x256xbf16, #tpu.memory_space<vmem>>, vector<1x64x128xbf16>
    %15 = vector.shape_cast %14 : vector<1x64x128xbf16> to vector<64x128xbf16>
    %c2 = arith.constant 2 : index
    %c0_17 = arith.constant 0 : index
    %c0_18 = arith.constant 0 : index
    %16 = vector.load %arg2[%c2, %c0_17, %c0_18] : memref<8x8x64xbf16, #tpu.memory_space<vmem>>, vector<1x8x64xbf16>
    %17 = vector.shape_cast %16 : vector<1x8x64xbf16> to vector<8x64xbf16>
    %cst_19 = arith.constant dense<0.000000e+00> : vector<8x128xf32>
    %18 = tpu.matmul %17, %15, %cst_19 {dimension_numbers = #tpu.dot_dimension_numbers<[1], [0], [0], [1], [0, 0, 1, 1], [], []>} : vector<8x64xbf16>, vector<64x128xbf16>, vector<8x128xf32> -> vector<8x128xf32>
    %19 = arith.addf %13, %18 : vector<8x128xf32>
    %c0_20 = arith.constant 0 : index
    %c0_21 = arith.constant 0 : index
    %c4 = arith.constant 4 : index
    %20 = vector.load %arg1[%c0_20, %c0_21, %c4] : memref<1x64x256xbf16, #tpu.memory_space<vmem>>, vector<1x64x128xbf16>
    %21 = vector.shape_cast %20 : vector<1x64x128xbf16> to vector<64x128xbf16>
    %c3_22 = arith.constant 3 : index
    %c0_23 = arith.constant 0 : index
    %c0_24 = arith.constant 0 : index
    %22 = vector.load %arg2[%c3_22, %c0_23, %c0_24] : memref<8x8x64xbf16, #tpu.memory_space<vmem>>, vector<1x8x64xbf16>
    %23 = vector.shape_cast %22 : vector<1x8x64xbf16> to vector<8x64xbf16>
    %cst_25 = arith.constant dense<0.000000e+00> : vector<8x128xf32>
    %24 = tpu.matmul %23, %21, %cst_25 {dimension_numbers = #tpu.dot_dimension_numbers<[1], [0], [0], [1], [0, 0, 1, 1], [], []>} : vector<8x64xbf16>, vector<64x128xbf16>, vector<8x128xf32> -> vector<8x128xf32>
    %25 = arith.addf %19, %24 : vector<8x128xf32>
    %c0_26 = arith.constant 0 : index
    %c0_27 = arith.constant 0 : index
    %c9 = arith.constant 9 : index
    %26 = vector.load %arg1[%c0_26, %c0_27, %c9] : memref<1x64x256xbf16, #tpu.memory_space<vmem>>, vector<1x64x128xbf16>
    %27 = vector.shape_cast %26 : vector<1x64x128xbf16> to vector<64x128xbf16>
    %c4_28 = arith.constant 4 : index
    %c0_29 = arith.constant 0 : index
    %c0_30 = arith.constant 0 : index
    %28 = vector.load %arg2[%c4_28, %c0_29, %c0_30] : memref<8x8x64xbf16, #tpu.memory_space<vmem>>, vector<1x8x64xbf16>
    %29 = vector.shape_cast %28 : vector<1x8x64xbf16> to vector<8x64xbf16>
    %cst_31 = arith.constant dense<0.000000e+00> : vector<8x128xf32>
    %30 = tpu.matmul %29, %27, %cst_31 {dimension_numbers = #tpu.dot_dimension_numbers<[1], [0], [0], [1], [0, 0, 1, 1], [], []>} : vector<8x64xbf16>, vector<64x128xbf16>, vector<8x128xf32> -> vector<8x128xf32>
    %31 = arith.addf %25, %30 : vector<8x128xf32>
    %c0_32 = arith.constant 0 : index
    %c0_33 = arith.constant 0 : index
    %c10 = arith.constant 10 : index
    %32 = vector.load %arg1[%c0_32, %c0_33, %c10] : memref<1x64x256xbf16, #tpu.memory_space<vmem>>, vector<1x64x128xbf16>
    %33 = vector.shape_cast %32 : vector<1x64x128xbf16> to vector<64x128xbf16>
    %c5 = arith.constant 5 : index
    %c0_34 = arith.constant 0 : index
    %c0_35 = arith.constant 0 : index
    %34 = vector.load %arg2[%c5, %c0_34, %c0_35] : memref<8x8x64xbf16, #tpu.memory_space<vmem>>, vector<1x8x64xbf16>
    %35 = vector.shape_cast %34 : vector<1x8x64xbf16> to vector<8x64xbf16>
    %cst_36 = arith.constant dense<0.000000e+00> : vector<8x128xf32>
    %36 = tpu.matmul %35, %33, %cst_36 {dimension_numbers = #tpu.dot_dimension_numbers<[1], [0], [0], [1], [0, 0, 1, 1], [], []>} : vector<8x64xbf16>, vector<64x128xbf16>, vector<8x128xf32> -> vector<8x128xf32>
    %37 = arith.addf %31, %36 : vector<8x128xf32>
    %c0_37 = arith.constant 0 : index
    %c0_38 = arith.constant 0 : index
    %c12 = arith.constant 12 : index
    %38 = vector.load %arg1[%c0_37, %c0_38, %c12] : memref<1x64x256xbf16, #tpu.memory_space<vmem>>, vector<1x64x128xbf16>
    %39 = vector.shape_cast %38 : vector<1x64x128xbf16> to vector<64x128xbf16>
    %c6 = arith.constant 6 : index
    %c0_39 = arith.constant 0 : index
    %c0_40 = arith.constant 0 : index
    %40 = vector.load %arg2[%c6, %c0_39, %c0_40] : memref<8x8x64xbf16, #tpu.memory_space<vmem>>, vector<1x8x64xbf16>
    %41 = vector.shape_cast %40 : vector<1x8x64xbf16> to vector<8x64xbf16>
    %cst_41 = arith.constant dense<0.000000e+00> : vector<8x128xf32>
    %42 = tpu.matmul %41, %39, %cst_41 {dimension_numbers = #tpu.dot_dimension_numbers<[1], [0], [0], [1], [0, 0, 1, 1], [], []>} : vector<8x64xbf16>, vector<64x128xbf16>, vector<8x128xf32> -> vector<8x128xf32>
    %43 = arith.addf %37, %42 : vector<8x128xf32>
    %c0_42 = arith.constant 0 : index
    %c0_43 = arith.constant 0 : index
    %c13 = arith.constant 13 : index
    %44 = vector.load %arg1[%c0_42, %c0_43, %c13] : memref<1x64x256xbf16, #tpu.memory_space<vmem>>, vector<1x64x128xbf16>
    %45 = vector.shape_cast %44 : vector<1x64x128xbf16> to vector<64x128xbf16>
    %c7 = arith.constant 7 : index
    %c0_44 = arith.constant 0 : index
    %c0_45 = arith.constant 0 : index
    %46 = vector.load %arg2[%c7, %c0_44, %c0_45] : memref<8x8x64xbf16, #tpu.memory_space<vmem>>, vector<1x8x64xbf16>
    %47 = vector.shape_cast %46 : vector<1x8x64xbf16> to vector<8x64xbf16>
    %cst_46 = arith.constant dense<0.000000e+00> : vector<8x128xf32>
    %48 = tpu.matmul %47, %45, %cst_46 {dimension_numbers = #tpu.dot_dimension_numbers<[1], [0], [0], [1], [0, 0, 1, 1], [], []>} : vector<8x64xbf16>, vector<64x128xbf16>, vector<8x128xf32> -> vector<8x128xf32>
    %49 = arith.addf %43, %48 : vector<8x128xf32>
    %50 = vector.broadcast %0 : vector<1x128xf32> to vector<8x128xf32>
    %51 = arith.mulf %49, %50 : vector<8x128xf32>
    %cst_47 = arith.constant dense<0.000000e+00> : vector<8xf32>
    %52 = vector.multi_reduction <add>, %51, %cst_47 [1] : vector<8x128xf32> to vector<8xf32>
    %53 = vector.shape_cast %52 : vector<8xf32> to vector<8x1xf32>
    %54 = arith.addf %1, %53 : vector<8x1xf32>
    %55 = arith.mulf %51, %49 : vector<8x128xf32>
    %cst_48 = arith.constant dense<0.000000e+00> : vector<8xf32>
    %56 = vector.multi_reduction <add>, %55, %cst_48 [1] : vector<8x128xf32> to vector<8xf32>
    %57 = vector.shape_cast %56 : vector<8xf32> to vector<8x1xf32>
    %58 = arith.addf %2, %57 : vector<8x1xf32>
    %c0_49 = arith.constant 0 : index
    %c0_50 = arith.constant 0 : index
    %59 = vector.load %arg6[%c0_49, %c0_50] : memref<8x128xf32, #tpu.memory_space<vmem>>, vector<8x128xf32>
    tpu.vector_store %arg6[%c0_49, %c0_50], %49 {strides = array<i32>} : memref<8x128xf32, #tpu.memory_space<vmem>>, vector<8x128xf32>,
    %cst_51 = arith.constant 1.250000e-01 : f32
    %60 = vector.broadcast %cst_51 : f32 to vector<8x1xf32>
    %61 = arith.mulf %54, %60 : vector<8x1xf32>
    %cst_52 = arith.constant 1.250000e-01 : f32
    %62 = vector.broadcast %cst_52 : f32 to vector<8x1xf32>
    %63 = arith.mulf %58, %62 : vector<8x1xf32>
    %64 = arith.mulf %61, %61 : vector<8x1xf32>
    %65 = arith.subf %63, %64 : vector<8x1xf32>
    %cst_53 = arith.constant 0.000000e+00 : f32
    %66 = vector.broadcast %cst_53 : f32 to vector<8x1xf32>
    %67 = arith.maximumf %65, %66 : vector<8x1xf32>
    %cst_54 = arith.constant 9.99999974E-6 : f32
    %68 = vector.broadcast %cst_54 : f32 to vector<8x1xf32>
    %69 = arith.addf %67, %68 : vector<8x1xf32>
    %70 = math.rsqrt %69 : vector<8x1xf32>
    %c0_55 = arith.constant 0 : index
    %71 = memref.load %arg4[%c0_55] : memref<1xf32, #tpu.memory_space<smem>>
    %c0_56 = arith.constant 0 : index
    %c0_57 = arith.constant 0 : index
    %72 = vector.load %arg6[%c0_56, %c0_57] : memref<8x128xf32, #tpu.memory_space<vmem>>, vector<8x128xf32>
    %73 = vector.broadcast %61 : vector<8x1xf32> to vector<8x128xf32>
    %74 = arith.subf %72, %73 : vector<8x128xf32>
    %75 = vector.broadcast %70 : vector<8x1xf32> to vector<8x128xf32>
    %76 = arith.mulf %74, %75 : vector<8x128xf32>
    %cst_58 = arith.constant 0.000000e+00 : f32
    %77 = vector.broadcast %cst_58 : f32 to vector<8x128xf32>
    %78 = arith.cmpf oge, %76, %77 : vector<8x128xf32>
    %79 = vector.broadcast %71 : f32 to vector<8x128xf32>
    %80 = arith.mulf %79, %76 : vector<8x128xf32>
    %81 = arith.select %78, %76, %80 : vector<8x128xi1>, vector<8x128xf32>
    %82 = arith.truncf %81 : vector<8x128xf32> to vector<8x128xbf16>
    %c0_59 = arith.constant 0 : index
    %c0_60 = arith.constant 0 : index
    %c0_61 = arith.constant 0 : index
    %83 = vector.load %arg5[%c0_59, %c0_60, %c0_61] : memref<1x8x128xbf16, #tpu.memory_space<vmem>>, vector<1x8x128xbf16>
    %84 = vector.shape_cast %83 : vector<1x8x128xbf16> to vector<8x128xbf16>
    %85 = vector.shape_cast %82 : vector<8x128xbf16> to vector<1x8x128xbf16>
    tpu.vector_store %arg5[%c0_59, %c0_60, %c0_61], %85 {strides = array<i32>} : memref<1x8x128xbf16, #tpu.memory_space<vmem>>, vector<1x8x128xbf16>,
    return
  }
  func.func @transform_0(%arg0: i32) -> (i32, i32, i32) {
    %c0_i32 = arith.constant 0 : i32
    %c0_i32_0 = arith.constant 0 : i32
    %c0_i32_1 = arith.constant 0 : i32
    return %arg0, %c0_i32, %c0_i32_0 : i32, i32, i32
  }
  func.func @transform_1(%arg0: i32) -> (i32, i32, i32) {
    %c0_i32 = arith.constant 0 : i32
    %c0_i32_0 = arith.constant 0 : i32
    %c0_i32_1 = arith.constant 0 : i32
    %c0_i32_2 = arith.constant 0 : i32
    return %c0_i32, %c0_i32_0, %c0_i32_1 : i32, i32, i32
  }
  func.func @transform_2(%arg0: i32) -> (i32, i32) {
    %c0_i32 = arith.constant 0 : i32
    %c0_i32_0 = arith.constant 0 : i32
    %c0_i32_1 = arith.constant 0 : i32
    return %c0_i32, %c0_i32_0 : i32, i32
  }
  func.func @transform_3(%arg0: i32) -> i32 {
    %c0_i32 = arith.constant 0 : i32
    %c0_i32_0 = arith.constant 0 : i32
    return %c0_i32 : i32
  }
  func.func @transform_4(%arg0: i32) -> (i32, i32, i32) {
    %c0_i32 = arith.constant 0 : i32
    %c0_i32_0 = arith.constant 0 : i32
    %c0_i32_1 = arith.constant 0 : i32
    return %arg0, %c0_i32, %c0_i32_0 : i32, i32, i32
  }
}

module attributes {stable_mosaic.version = 11 : i64} {
  func.func @kernel(%arg0: i32, %arg1: memref<1x8x256xbf16, #tpu.memory_space<vmem>>, %arg2: memref<8x4x64xbf16, #tpu.memory_space<vmem>>, %arg3: memref<1x128xf32, #tpu.memory_space<vmem>>, %arg4: memref<1xf32, #tpu.memory_space<smem>>, %arg5: memref<1x4x1024xbf16, #tpu.memory_space<vmem>>, %arg6: memref<4x1024xf32, #tpu.memory_space<vmem>>) attributes {dimension_semantics = [#tpu.dimension_semantics<parallel>], iteration_bounds = array<i64: 2>, scalar_prefetch = 0 : i64, scratch_operands = 1 : i64, tpu.core_type = #tpu.core_type<tc>, window_params = [{transform_indices = @transform_0, window_bounds = array<i64: 1, 8, 256>}, {pipeline_mode = #tpu.pipeline_mode<synchronous>, transform_indices = @transform_1, window_bounds = array<i64: 8, 4, 64>}, {pipeline_mode = #tpu.pipeline_mode<synchronous>, transform_indices = @transform_2, window_bounds = array<i64: 1, 128>}, {transform_indices = @transform_3, window_bounds = array<i64: 1>}, {transform_indices = @transform_4, window_bounds = array<i64: 1, 4, 1024>}]} {
    %c0 = arith.constant 0 : index
    %c0_0 = arith.constant 0 : index
    %0 = vector.load %arg3[%c0, %c0_0] : memref<1x128xf32, #tpu.memory_space<vmem>>, vector<1x128xf32>
    %cst = arith.constant 0.000000e+00 : f32
    %1 = vector.broadcast %cst : f32 to vector<4x1xf32>
    %cst_1 = arith.constant 0.000000e+00 : f32
    %2 = vector.broadcast %cst_1 : f32 to vector<4x1xf32>
    %c0_2 = arith.constant 0 : index
    %c0_3 = arith.constant 0 : index
    %c21 = arith.constant 21 : index
    %3 = vector.load %arg1[%c0_2, %c0_3, %c21] : memref<1x8x256xbf16, #tpu.memory_space<vmem>>, vector<1x8x128xbf16>
    %4 = vector.shape_cast %3 : vector<1x8x128xbf16> to vector<8x128xbf16>
    %5 = arith.extf %4 : vector<8x128xbf16> to vector<8x128xf32>
    %c0_4 = arith.constant 0 : index
    %c0_5 = arith.constant 0 : index
    %c22 = arith.constant 22 : index
    %6 = vector.load %arg1[%c0_4, %c0_5, %c22] : memref<1x8x256xbf16, #tpu.memory_space<vmem>>, vector<1x8x128xbf16>
    %7 = vector.shape_cast %6 : vector<1x8x128xbf16> to vector<8x128xbf16>
    %8 = arith.extf %7 : vector<8x128xbf16> to vector<8x128xf32>
    %c0_6 = arith.constant 0 : index
    %c0_7 = arith.constant 0 : index
    %c25 = arith.constant 25 : index
    %9 = vector.load %arg1[%c0_6, %c0_7, %c25] : memref<1x8x256xbf16, #tpu.memory_space<vmem>>, vector<1x8x128xbf16>
    %10 = vector.shape_cast %9 : vector<1x8x128xbf16> to vector<8x128xbf16>
    %11 = arith.extf %10 : vector<8x128xbf16> to vector<8x128xf32>
    %c0_8 = arith.constant 0 : index
    %c0_9 = arith.constant 0 : index
    %c26 = arith.constant 26 : index
    %12 = vector.load %arg1[%c0_8, %c0_9, %c26] : memref<1x8x256xbf16, #tpu.memory_space<vmem>>, vector<1x8x128xbf16>
    %13 = vector.shape_cast %12 : vector<1x8x128xbf16> to vector<8x128xbf16>
    %14 = arith.extf %13 : vector<8x128xbf16> to vector<8x128xf32>
    %c0_10 = arith.constant 0 : index
    %c0_11 = arith.constant 0 : index
    %c37 = arith.constant 37 : index
    %15 = vector.load %arg1[%c0_10, %c0_11, %c37] : memref<1x8x256xbf16, #tpu.memory_space<vmem>>, vector<1x8x128xbf16>
    %16 = vector.shape_cast %15 : vector<1x8x128xbf16> to vector<8x128xbf16>
    %17 = arith.extf %16 : vector<8x128xbf16> to vector<8x128xf32>
    %c0_12 = arith.constant 0 : index
    %c0_13 = arith.constant 0 : index
    %c38 = arith.constant 38 : index
    %18 = vector.load %arg1[%c0_12, %c0_13, %c38] : memref<1x8x256xbf16, #tpu.memory_space<vmem>>, vector<1x8x128xbf16>
    %19 = vector.shape_cast %18 : vector<1x8x128xbf16> to vector<8x128xbf16>
    %20 = arith.extf %19 : vector<8x128xbf16> to vector<8x128xf32>
    %c0_14 = arith.constant 0 : index
    %c0_15 = arith.constant 0 : index
    %c41 = arith.constant 41 : index
    %21 = vector.load %arg1[%c0_14, %c0_15, %c41] : memref<1x8x256xbf16, #tpu.memory_space<vmem>>, vector<1x8x128xbf16>
    %22 = vector.shape_cast %21 : vector<1x8x128xbf16> to vector<8x128xbf16>
    %23 = arith.extf %22 : vector<8x128xbf16> to vector<8x128xf32>
    %c0_16 = arith.constant 0 : index
    %c0_17 = arith.constant 0 : index
    %c42 = arith.constant 42 : index
    %24 = vector.load %arg1[%c0_16, %c0_17, %c42] : memref<1x8x256xbf16, #tpu.memory_space<vmem>>, vector<1x8x128xbf16>
    %25 = vector.shape_cast %24 : vector<1x8x128xbf16> to vector<8x128xbf16>
    %26 = arith.extf %25 : vector<8x128xbf16> to vector<8x128xf32>
    %27 = tpu.concatenate %5, %8, %11, %14, %17, %20, %23, %26 in 0 : vector<8x128xf32>, vector<8x128xf32>, vector<8x128xf32>, vector<8x128xf32>, vector<8x128xf32>, vector<8x128xf32>, vector<8x128xf32>, vector<8x128xf32> -> vector<64x128xf32>
    %28 = arith.truncf %27 : vector<64x128xf32> to vector<64x128xbf16>
    %c0_18 = arith.constant 0 : index
    %c0_19 = arith.constant 0 : index
    %c0_20 = arith.constant 0 : index
    %29 = vector.load %arg2[%c0_18, %c0_19, %c0_20] : memref<8x4x64xbf16, #tpu.memory_space<vmem>>, vector<1x4x64xbf16>
    %30 = vector.shape_cast %29 : vector<1x4x64xbf16> to vector<4x64xbf16>
    %cst_21 = arith.constant dense<0.000000e+00> : vector<4x128xf32>
    %31 = tpu.matmul %30, %28, %cst_21 {dimension_numbers = #tpu.dot_dimension_numbers<[1], [0], [0], [1], [0, 0, 1, 1], [], []>} : vector<4x64xbf16>, vector<64x128xbf16>, vector<4x128xf32> -> vector<4x128xf32>
    %32 = vector.broadcast %0 : vector<1x128xf32> to vector<4x128xf32>
    %33 = arith.mulf %31, %32 : vector<4x128xf32>
    %cst_22 = arith.constant dense<0.000000e+00> : vector<4xf32>
    %34 = vector.multi_reduction <add>, %33, %cst_22 [1] : vector<4x128xf32> to vector<4xf32>
    %35 = vector.shape_cast %34 : vector<4xf32> to vector<4x1xf32>
    %36 = arith.addf %1, %35 : vector<4x1xf32>
    %37 = arith.mulf %33, %31 : vector<4x128xf32>
    %cst_23 = arith.constant dense<0.000000e+00> : vector<4xf32>
    %38 = vector.multi_reduction <add>, %37, %cst_23 [1] : vector<4x128xf32> to vector<4xf32>
    %39 = vector.shape_cast %38 : vector<4xf32> to vector<4x1xf32>
    %40 = arith.addf %2, %39 : vector<4x1xf32>
    %c0_24 = arith.constant 0 : index
    %c0_25 = arith.constant 0 : index
    %41 = vector.load %arg6[%c0_24, %c0_25] : memref<4x1024xf32, #tpu.memory_space<vmem>>, vector<4x128xf32>
    tpu.vector_store %arg6[%c0_24, %c0_25], %31 {strides = array<i32>} : memref<4x1024xf32, #tpu.memory_space<vmem>>, vector<4x128xf32>,
    %c1 = arith.constant 1 : index
    %c0_26 = arith.constant 0 : index
    %c0_27 = arith.constant 0 : index
    %42 = vector.load %arg2[%c1, %c0_26, %c0_27] : memref<8x4x64xbf16, #tpu.memory_space<vmem>>, vector<1x4x64xbf16>
    %43 = vector.shape_cast %42 : vector<1x4x64xbf16> to vector<4x64xbf16>
    %cst_28 = arith.constant dense<0.000000e+00> : vector<4x128xf32>
    %44 = tpu.matmul %43, %28, %cst_28 {dimension_numbers = #tpu.dot_dimension_numbers<[1], [0], [0], [1], [0, 0, 1, 1], [], []>} : vector<4x64xbf16>, vector<64x128xbf16>, vector<4x128xf32> -> vector<4x128xf32>
    %45 = vector.broadcast %0 : vector<1x128xf32> to vector<4x128xf32>
    %46 = arith.mulf %44, %45 : vector<4x128xf32>
    %cst_29 = arith.constant dense<0.000000e+00> : vector<4xf32>
    %47 = vector.multi_reduction <add>, %46, %cst_29 [1] : vector<4x128xf32> to vector<4xf32>
    %48 = vector.shape_cast %47 : vector<4xf32> to vector<4x1xf32>
    %49 = arith.addf %36, %48 : vector<4x1xf32>
    %50 = arith.mulf %46, %44 : vector<4x128xf32>
    %cst_30 = arith.constant dense<0.000000e+00> : vector<4xf32>
    %51 = vector.multi_reduction <add>, %50, %cst_30 [1] : vector<4x128xf32> to vector<4xf32>
    %52 = vector.shape_cast %51 : vector<4xf32> to vector<4x1xf32>
    %53 = arith.addf %40, %52 : vector<4x1xf32>
    %c0_31 = arith.constant 0 : index
    %c128 = arith.constant 128 : index
    %54 = vector.load %arg6[%c0_31, %c128] : memref<4x1024xf32, #tpu.memory_space<vmem>>, vector<4x128xf32>
    tpu.vector_store %arg6[%c0_31, %c128], %44 {strides = array<i32>} : memref<4x1024xf32, #tpu.memory_space<vmem>>, vector<4x128xf32>,
    %c2 = arith.constant 2 : index
    %c0_32 = arith.constant 0 : index
    %c0_33 = arith.constant 0 : index
    %55 = vector.load %arg2[%c2, %c0_32, %c0_33] : memref<8x4x64xbf16, #tpu.memory_space<vmem>>, vector<1x4x64xbf16>
    %56 = vector.shape_cast %55 : vector<1x4x64xbf16> to vector<4x64xbf16>
    %cst_34 = arith.constant dense<0.000000e+00> : vector<4x128xf32>
    %57 = tpu.matmul %56, %28, %cst_34 {dimension_numbers = #tpu.dot_dimension_numbers<[1], [0], [0], [1], [0, 0, 1, 1], [], []>} : vector<4x64xbf16>, vector<64x128xbf16>, vector<4x128xf32> -> vector<4x128xf32>
    %58 = vector.broadcast %0 : vector<1x128xf32> to vector<4x128xf32>
    %59 = arith.mulf %57, %58 : vector<4x128xf32>
    %cst_35 = arith.constant dense<0.000000e+00> : vector<4xf32>
    %60 = vector.multi_reduction <add>, %59, %cst_35 [1] : vector<4x128xf32> to vector<4xf32>
    %61 = vector.shape_cast %60 : vector<4xf32> to vector<4x1xf32>
    %62 = arith.addf %49, %61 : vector<4x1xf32>
    %63 = arith.mulf %59, %57 : vector<4x128xf32>
    %cst_36 = arith.constant dense<0.000000e+00> : vector<4xf32>
    %64 = vector.multi_reduction <add>, %63, %cst_36 [1] : vector<4x128xf32> to vector<4xf32>
    %65 = vector.shape_cast %64 : vector<4xf32> to vector<4x1xf32>
    %66 = arith.addf %53, %65 : vector<4x1xf32>
    %c0_37 = arith.constant 0 : index
    %c256 = arith.constant 256 : index
    %67 = vector.load %arg6[%c0_37, %c256] : memref<4x1024xf32, #tpu.memory_space<vmem>>, vector<4x128xf32>
    tpu.vector_store %arg6[%c0_37, %c256], %57 {strides = array<i32>} : memref<4x1024xf32, #tpu.memory_space<vmem>>, vector<4x128xf32>,
    %c3 = arith.constant 3 : index
    %c0_38 = arith.constant 0 : index
    %c0_39 = arith.constant 0 : index
    %68 = vector.load %arg2[%c3, %c0_38, %c0_39] : memref<8x4x64xbf16, #tpu.memory_space<vmem>>, vector<1x4x64xbf16>
    %69 = vector.shape_cast %68 : vector<1x4x64xbf16> to vector<4x64xbf16>
    %cst_40 = arith.constant dense<0.000000e+00> : vector<4x128xf32>
    %70 = tpu.matmul %69, %28, %cst_40 {dimension_numbers = #tpu.dot_dimension_numbers<[1], [0], [0], [1], [0, 0, 1, 1], [], []>} : vector<4x64xbf16>, vector<64x128xbf16>, vector<4x128xf32> -> vector<4x128xf32>
    %71 = vector.broadcast %0 : vector<1x128xf32> to vector<4x128xf32>
    %72 = arith.mulf %70, %71 : vector<4x128xf32>
    %cst_41 = arith.constant dense<0.000000e+00> : vector<4xf32>
    %73 = vector.multi_reduction <add>, %72, %cst_41 [1] : vector<4x128xf32> to vector<4xf32>
    %74 = vector.shape_cast %73 : vector<4xf32> to vector<4x1xf32>
    %75 = arith.addf %62, %74 : vector<4x1xf32>
    %76 = arith.mulf %72, %70 : vector<4x128xf32>
    %cst_42 = arith.constant dense<0.000000e+00> : vector<4xf32>
    %77 = vector.multi_reduction <add>, %76, %cst_42 [1] : vector<4x128xf32> to vector<4xf32>
    %78 = vector.shape_cast %77 : vector<4xf32> to vector<4x1xf32>
    %79 = arith.addf %66, %78 : vector<4x1xf32>
    %c0_43 = arith.constant 0 : index
    %c384 = arith.constant 384 : index
    %80 = vector.load %arg6[%c0_43, %c384] : memref<4x1024xf32, #tpu.memory_space<vmem>>, vector<4x128xf32>
    tpu.vector_store %arg6[%c0_43, %c384], %70 {strides = array<i32>} : memref<4x1024xf32, #tpu.memory_space<vmem>>, vector<4x128xf32>,
    %c4 = arith.constant 4 : index
    %c0_44 = arith.constant 0 : index
    %c0_45 = arith.constant 0 : index
    %81 = vector.load %arg2[%c4, %c0_44, %c0_45] : memref<8x4x64xbf16, #tpu.memory_space<vmem>>, vector<1x4x64xbf16>
    %82 = vector.shape_cast %81 : vector<1x4x64xbf16> to vector<4x64xbf16>
    %cst_46 = arith.constant dense<0.000000e+00> : vector<4x128xf32>
    %83 = tpu.matmul %82, %28, %cst_46 {dimension_numbers = #tpu.dot_dimension_numbers<[1], [0], [0], [1], [0, 0, 1, 1], [], []>} : vector<4x64xbf16>, vector<64x128xbf16>, vector<4x128xf32> -> vector<4x128xf32>
    %84 = vector.broadcast %0 : vector<1x128xf32> to vector<4x128xf32>
    %85 = arith.mulf %83, %84 : vector<4x128xf32>
    %cst_47 = arith.constant dense<0.000000e+00> : vector<4xf32>
    %86 = vector.multi_reduction <add>, %85, %cst_47 [1] : vector<4x128xf32> to vector<4xf32>
    %87 = vector.shape_cast %86 : vector<4xf32> to vector<4x1xf32>
    %88 = arith.addf %75, %87 : vector<4x1xf32>
    %89 = arith.mulf %85, %83 : vector<4x128xf32>
    %cst_48 = arith.constant dense<0.000000e+00> : vector<4xf32>
    %90 = vector.multi_reduction <add>, %89, %cst_48 [1] : vector<4x128xf32> to vector<4xf32>
    %91 = vector.shape_cast %90 : vector<4xf32> to vector<4x1xf32>
    %92 = arith.addf %79, %91 : vector<4x1xf32>
    %c0_49 = arith.constant 0 : index
    %c512 = arith.constant 512 : index
    %93 = vector.load %arg6[%c0_49, %c512] : memref<4x1024xf32, #tpu.memory_space<vmem>>, vector<4x128xf32>
    tpu.vector_store %arg6[%c0_49, %c512], %83 {strides = array<i32>} : memref<4x1024xf32, #tpu.memory_space<vmem>>, vector<4x128xf32>,
    %c5 = arith.constant 5 : index
    %c0_50 = arith.constant 0 : index
    %c0_51 = arith.constant 0 : index
    %94 = vector.load %arg2[%c5, %c0_50, %c0_51] : memref<8x4x64xbf16, #tpu.memory_space<vmem>>, vector<1x4x64xbf16>
    %95 = vector.shape_cast %94 : vector<1x4x64xbf16> to vector<4x64xbf16>
    %cst_52 = arith.constant dense<0.000000e+00> : vector<4x128xf32>
    %96 = tpu.matmul %95, %28, %cst_52 {dimension_numbers = #tpu.dot_dimension_numbers<[1], [0], [0], [1], [0, 0, 1, 1], [], []>} : vector<4x64xbf16>, vector<64x128xbf16>, vector<4x128xf32> -> vector<4x128xf32>
    %97 = vector.broadcast %0 : vector<1x128xf32> to vector<4x128xf32>
    %98 = arith.mulf %96, %97 : vector<4x128xf32>
    %cst_53 = arith.constant dense<0.000000e+00> : vector<4xf32>
    %99 = vector.multi_reduction <add>, %98, %cst_53 [1] : vector<4x128xf32> to vector<4xf32>
    %100 = vector.shape_cast %99 : vector<4xf32> to vector<4x1xf32>
    %101 = arith.addf %88, %100 : vector<4x1xf32>
    %102 = arith.mulf %98, %96 : vector<4x128xf32>
    %cst_54 = arith.constant dense<0.000000e+00> : vector<4xf32>
    %103 = vector.multi_reduction <add>, %102, %cst_54 [1] : vector<4x128xf32> to vector<4xf32>
    %104 = vector.shape_cast %103 : vector<4xf32> to vector<4x1xf32>
    %105 = arith.addf %92, %104 : vector<4x1xf32>
    %c0_55 = arith.constant 0 : index
    %c640 = arith.constant 640 : index
    %106 = vector.load %arg6[%c0_55, %c640] : memref<4x1024xf32, #tpu.memory_space<vmem>>, vector<4x128xf32>
    tpu.vector_store %arg6[%c0_55, %c640], %96 {strides = array<i32>} : memref<4x1024xf32, #tpu.memory_space<vmem>>, vector<4x128xf32>,
    %c6 = arith.constant 6 : index
    %c0_56 = arith.constant 0 : index
    %c0_57 = arith.constant 0 : index
    %107 = vector.load %arg2[%c6, %c0_56, %c0_57] : memref<8x4x64xbf16, #tpu.memory_space<vmem>>, vector<1x4x64xbf16>
    %108 = vector.shape_cast %107 : vector<1x4x64xbf16> to vector<4x64xbf16>
    %cst_58 = arith.constant dense<0.000000e+00> : vector<4x128xf32>
    %109 = tpu.matmul %108, %28, %cst_58 {dimension_numbers = #tpu.dot_dimension_numbers<[1], [0], [0], [1], [0, 0, 1, 1], [], []>} : vector<4x64xbf16>, vector<64x128xbf16>, vector<4x128xf32> -> vector<4x128xf32>
    %110 = vector.broadcast %0 : vector<1x128xf32> to vector<4x128xf32>
    %111 = arith.mulf %109, %110 : vector<4x128xf32>
    %cst_59 = arith.constant dense<0.000000e+00> : vector<4xf32>
    %112 = vector.multi_reduction <add>, %111, %cst_59 [1] : vector<4x128xf32> to vector<4xf32>
    %113 = vector.shape_cast %112 : vector<4xf32> to vector<4x1xf32>
    %114 = arith.addf %101, %113 : vector<4x1xf32>
    %115 = arith.mulf %111, %109 : vector<4x128xf32>
    %cst_60 = arith.constant dense<0.000000e+00> : vector<4xf32>
    %116 = vector.multi_reduction <add>, %115, %cst_60 [1] : vector<4x128xf32> to vector<4xf32>
    %117 = vector.shape_cast %116 : vector<4xf32> to vector<4x1xf32>
    %118 = arith.addf %105, %117 : vector<4x1xf32>
    %c0_61 = arith.constant 0 : index
    %c768 = arith.constant 768 : index
    %119 = vector.load %arg6[%c0_61, %c768] : memref<4x1024xf32, #tpu.memory_space<vmem>>, vector<4x128xf32>
    tpu.vector_store %arg6[%c0_61, %c768], %109 {strides = array<i32>} : memref<4x1024xf32, #tpu.memory_space<vmem>>, vector<4x128xf32>,
    %c7 = arith.constant 7 : index
    %c0_62 = arith.constant 0 : index
    %c0_63 = arith.constant 0 : index
    %120 = vector.load %arg2[%c7, %c0_62, %c0_63] : memref<8x4x64xbf16, #tpu.memory_space<vmem>>, vector<1x4x64xbf16>
    %121 = vector.shape_cast %120 : vector<1x4x64xbf16> to vector<4x64xbf16>
    %cst_64 = arith.constant dense<0.000000e+00> : vector<4x128xf32>
    %122 = tpu.matmul %121, %28, %cst_64 {dimension_numbers = #tpu.dot_dimension_numbers<[1], [0], [0], [1], [0, 0, 1, 1], [], []>} : vector<4x64xbf16>, vector<64x128xbf16>, vector<4x128xf32> -> vector<4x128xf32>
    %123 = vector.broadcast %0 : vector<1x128xf32> to vector<4x128xf32>
    %124 = arith.mulf %122, %123 : vector<4x128xf32>
    %cst_65 = arith.constant dense<0.000000e+00> : vector<4xf32>
    %125 = vector.multi_reduction <add>, %124, %cst_65 [1] : vector<4x128xf32> to vector<4xf32>
    %126 = vector.shape_cast %125 : vector<4xf32> to vector<4x1xf32>
    %127 = arith.addf %114, %126 : vector<4x1xf32>
    %128 = arith.mulf %124, %122 : vector<4x128xf32>
    %cst_66 = arith.constant dense<0.000000e+00> : vector<4xf32>
    %129 = vector.multi_reduction <add>, %128, %cst_66 [1] : vector<4x128xf32> to vector<4xf32>
    %130 = vector.shape_cast %129 : vector<4xf32> to vector<4x1xf32>
    %131 = arith.addf %118, %130 : vector<4x1xf32>
    %c0_67 = arith.constant 0 : index
    %c896 = arith.constant 896 : index
    %132 = vector.load %arg6[%c0_67, %c896] : memref<4x1024xf32, #tpu.memory_space<vmem>>, vector<4x128xf32>
    tpu.vector_store %arg6[%c0_67, %c896], %122 {strides = array<i32>} : memref<4x1024xf32, #tpu.memory_space<vmem>>, vector<4x128xf32>,
    %cst_68 = arith.constant 1.562500e-02 : f32
    %133 = vector.broadcast %cst_68 : f32 to vector<4x1xf32>
    %134 = arith.mulf %127, %133 : vector<4x1xf32>
    %cst_69 = arith.constant 1.562500e-02 : f32
    %135 = vector.broadcast %cst_69 : f32 to vector<4x1xf32>
    %136 = arith.mulf %131, %135 : vector<4x1xf32>
    %137 = arith.mulf %134, %134 : vector<4x1xf32>
    %138 = arith.subf %136, %137 : vector<4x1xf32>
    %cst_70 = arith.constant 0.000000e+00 : f32
    %139 = vector.broadcast %cst_70 : f32 to vector<4x1xf32>
    %140 = arith.maximumf %138, %139 : vector<4x1xf32>
    %cst_71 = arith.constant 9.99999974E-6 : f32
    %141 = vector.broadcast %cst_71 : f32 to vector<4x1xf32>
    %142 = arith.addf %140, %141 : vector<4x1xf32>
    %143 = math.rsqrt %142 : vector<4x1xf32>
    %c0_72 = arith.constant 0 : index
    %144 = memref.load %arg4[%c0_72] : memref<1xf32, #tpu.memory_space<smem>>
    %c0_73 = arith.constant 0 : index
    %c0_74 = arith.constant 0 : index
    %145 = vector.load %arg6[%c0_73, %c0_74] : memref<4x1024xf32, #tpu.memory_space<vmem>>, vector<4x128xf32>
    %146 = vector.broadcast %134 : vector<4x1xf32> to vector<4x128xf32>
    %147 = arith.subf %145, %146 : vector<4x128xf32>
    %148 = vector.broadcast %143 : vector<4x1xf32> to vector<4x128xf32>
    %149 = arith.mulf %147, %148 : vector<4x128xf32>
    %cst_75 = arith.constant 0.000000e+00 : f32
    %150 = vector.broadcast %cst_75 : f32 to vector<4x128xf32>
    %151 = arith.cmpf oge, %149, %150 : vector<4x128xf32>
    %152 = vector.broadcast %144 : f32 to vector<4x128xf32>
    %153 = arith.mulf %152, %149 : vector<4x128xf32>
    %154 = arith.select %151, %149, %153 : vector<4x128xi1>, vector<4x128xf32>
    %155 = arith.truncf %154 : vector<4x128xf32> to vector<4x128xbf16>
    %c0_76 = arith.constant 0 : index
    %c0_77 = arith.constant 0 : index
    %c0_78 = arith.constant 0 : index
    %156 = vector.load %arg5[%c0_76, %c0_77, %c0_78] : memref<1x4x1024xbf16, #tpu.memory_space<vmem>>, vector<1x4x128xbf16>
    %157 = vector.shape_cast %156 : vector<1x4x128xbf16> to vector<4x128xbf16>
    %158 = vector.shape_cast %155 : vector<4x128xbf16> to vector<1x4x128xbf16>
    tpu.vector_store %arg5[%c0_76, %c0_77, %c0_78], %158 {strides = array<i32>} : memref<1x4x1024xbf16, #tpu.memory_space<vmem>>, vector<1x4x128xbf16>,
    %c0_79 = arith.constant 0 : index
    %c128_80 = arith.constant 128 : index
    %159 = vector.load %arg6[%c0_79, %c128_80] : memref<4x1024xf32, #tpu.memory_space<vmem>>, vector<4x128xf32>
    %160 = vector.broadcast %134 : vector<4x1xf32> to vector<4x128xf32>
    %161 = arith.subf %159, %160 : vector<4x128xf32>
    %162 = vector.broadcast %143 : vector<4x1xf32> to vector<4x128xf32>
    %163 = arith.mulf %161, %162 : vector<4x128xf32>
    %cst_81 = arith.constant 0.000000e+00 : f32
    %164 = vector.broadcast %cst_81 : f32 to vector<4x128xf32>
    %165 = arith.cmpf oge, %163, %164 : vector<4x128xf32>
    %166 = vector.broadcast %144 : f32 to vector<4x128xf32>
    %167 = arith.mulf %166, %163 : vector<4x128xf32>
    %168 = arith.select %165, %163, %167 : vector<4x128xi1>, vector<4x128xf32>
    %169 = arith.truncf %168 : vector<4x128xf32> to vector<4x128xbf16>
    %c0_82 = arith.constant 0 : index
    %c0_83 = arith.constant 0 : index
    %c128_84 = arith.constant 128 : index
    %170 = vector.load %arg5[%c0_82, %c0_83, %c128_84] : memref<1x4x1024xbf16, #tpu.memory_space<vmem>>, vector<1x4x128xbf16>
    %171 = vector.shape_cast %170 : vector<1x4x128xbf16> to vector<4x128xbf16>
    %172 = vector.shape_cast %169 : vector<4x128xbf16> to vector<1x4x128xbf16>
    tpu.vector_store %arg5[%c0_82, %c0_83, %c128_84], %172 {strides = array<i32>} : memref<1x4x1024xbf16, #tpu.memory_space<vmem>>, vector<1x4x128xbf16>,
    %c0_85 = arith.constant 0 : index
    %c256_86 = arith.constant 256 : index
    %173 = vector.load %arg6[%c0_85, %c256_86] : memref<4x1024xf32, #tpu.memory_space<vmem>>, vector<4x128xf32>
    %174 = vector.broadcast %134 : vector<4x1xf32> to vector<4x128xf32>
    %175 = arith.subf %173, %174 : vector<4x128xf32>
    %176 = vector.broadcast %143 : vector<4x1xf32> to vector<4x128xf32>
    %177 = arith.mulf %175, %176 : vector<4x128xf32>
    %cst_87 = arith.constant 0.000000e+00 : f32
    %178 = vector.broadcast %cst_87 : f32 to vector<4x128xf32>
    %179 = arith.cmpf oge, %177, %178 : vector<4x128xf32>
    %180 = vector.broadcast %144 : f32 to vector<4x128xf32>
    %181 = arith.mulf %180, %177 : vector<4x128xf32>
    %182 = arith.select %179, %177, %181 : vector<4x128xi1>, vector<4x128xf32>
    %183 = arith.truncf %182 : vector<4x128xf32> to vector<4x128xbf16>
    %c0_88 = arith.constant 0 : index
    %c0_89 = arith.constant 0 : index
    %c256_90 = arith.constant 256 : index
    %184 = vector.load %arg5[%c0_88, %c0_89, %c256_90] : memref<1x4x1024xbf16, #tpu.memory_space<vmem>>, vector<1x4x128xbf16>
    %185 = vector.shape_cast %184 : vector<1x4x128xbf16> to vector<4x128xbf16>
    %186 = vector.shape_cast %183 : vector<4x128xbf16> to vector<1x4x128xbf16>
    tpu.vector_store %arg5[%c0_88, %c0_89, %c256_90], %186 {strides = array<i32>} : memref<1x4x1024xbf16, #tpu.memory_space<vmem>>, vector<1x4x128xbf16>,
    %c0_91 = arith.constant 0 : index
    %c384_92 = arith.constant 384 : index
    %187 = vector.load %arg6[%c0_91, %c384_92] : memref<4x1024xf32, #tpu.memory_space<vmem>>, vector<4x128xf32>
    %188 = vector.broadcast %134 : vector<4x1xf32> to vector<4x128xf32>
    %189 = arith.subf %187, %188 : vector<4x128xf32>
    %190 = vector.broadcast %143 : vector<4x1xf32> to vector<4x128xf32>
    %191 = arith.mulf %189, %190 : vector<4x128xf32>
    %cst_93 = arith.constant 0.000000e+00 : f32
    %192 = vector.broadcast %cst_93 : f32 to vector<4x128xf32>
    %193 = arith.cmpf oge, %191, %192 : vector<4x128xf32>
    %194 = vector.broadcast %144 : f32 to vector<4x128xf32>
    %195 = arith.mulf %194, %191 : vector<4x128xf32>
    %196 = arith.select %193, %191, %195 : vector<4x128xi1>, vector<4x128xf32>
    %197 = arith.truncf %196 : vector<4x128xf32> to vector<4x128xbf16>
    %c0_94 = arith.constant 0 : index
    %c0_95 = arith.constant 0 : index
    %c384_96 = arith.constant 384 : index
    %198 = vector.load %arg5[%c0_94, %c0_95, %c384_96] : memref<1x4x1024xbf16, #tpu.memory_space<vmem>>, vector<1x4x128xbf16>
    %199 = vector.shape_cast %198 : vector<1x4x128xbf16> to vector<4x128xbf16>
    %200 = vector.shape_cast %197 : vector<4x128xbf16> to vector<1x4x128xbf16>
    tpu.vector_store %arg5[%c0_94, %c0_95, %c384_96], %200 {strides = array<i32>} : memref<1x4x1024xbf16, #tpu.memory_space<vmem>>, vector<1x4x128xbf16>,
    %c0_97 = arith.constant 0 : index
    %c512_98 = arith.constant 512 : index
    %201 = vector.load %arg6[%c0_97, %c512_98] : memref<4x1024xf32, #tpu.memory_space<vmem>>, vector<4x128xf32>
    %202 = vector.broadcast %134 : vector<4x1xf32> to vector<4x128xf32>
    %203 = arith.subf %201, %202 : vector<4x128xf32>
    %204 = vector.broadcast %143 : vector<4x1xf32> to vector<4x128xf32>
    %205 = arith.mulf %203, %204 : vector<4x128xf32>
    %cst_99 = arith.constant 0.000000e+00 : f32
    %206 = vector.broadcast %cst_99 : f32 to vector<4x128xf32>
    %207 = arith.cmpf oge, %205, %206 : vector<4x128xf32>
    %208 = vector.broadcast %144 : f32 to vector<4x128xf32>
    %209 = arith.mulf %208, %205 : vector<4x128xf32>
    %210 = arith.select %207, %205, %209 : vector<4x128xi1>, vector<4x128xf32>
    %211 = arith.truncf %210 : vector<4x128xf32> to vector<4x128xbf16>
    %c0_100 = arith.constant 0 : index
    %c0_101 = arith.constant 0 : index
    %c512_102 = arith.constant 512 : index
    %212 = vector.load %arg5[%c0_100, %c0_101, %c512_102] : memref<1x4x1024xbf16, #tpu.memory_space<vmem>>, vector<1x4x128xbf16>
    %213 = vector.shape_cast %212 : vector<1x4x128xbf16> to vector<4x128xbf16>
    %214 = vector.shape_cast %211 : vector<4x128xbf16> to vector<1x4x128xbf16>
    tpu.vector_store %arg5[%c0_100, %c0_101, %c512_102], %214 {strides = array<i32>} : memref<1x4x1024xbf16, #tpu.memory_space<vmem>>, vector<1x4x128xbf16>,
    %c0_103 = arith.constant 0 : index
    %c640_104 = arith.constant 640 : index
    %215 = vector.load %arg6[%c0_103, %c640_104] : memref<4x1024xf32, #tpu.memory_space<vmem>>, vector<4x128xf32>
    %216 = vector.broadcast %134 : vector<4x1xf32> to vector<4x128xf32>
    %217 = arith.subf %215, %216 : vector<4x128xf32>
    %218 = vector.broadcast %143 : vector<4x1xf32> to vector<4x128xf32>
    %219 = arith.mulf %217, %218 : vector<4x128xf32>
    %cst_105 = arith.constant 0.000000e+00 : f32
    %220 = vector.broadcast %cst_105 : f32 to vector<4x128xf32>
    %221 = arith.cmpf oge, %219, %220 : vector<4x128xf32>
    %222 = vector.broadcast %144 : f32 to vector<4x128xf32>
    %223 = arith.mulf %222, %219 : vector<4x128xf32>
    %224 = arith.select %221, %219, %223 : vector<4x128xi1>, vector<4x128xf32>
    %225 = arith.truncf %224 : vector<4x128xf32> to vector<4x128xbf16>
    %c0_106 = arith.constant 0 : index
    %c0_107 = arith.constant 0 : index
    %c640_108 = arith.constant 640 : index
    %226 = vector.load %arg5[%c0_106, %c0_107, %c640_108] : memref<1x4x1024xbf16, #tpu.memory_space<vmem>>, vector<1x4x128xbf16>
    %227 = vector.shape_cast %226 : vector<1x4x128xbf16> to vector<4x128xbf16>
    %228 = vector.shape_cast %225 : vector<4x128xbf16> to vector<1x4x128xbf16>
    tpu.vector_store %arg5[%c0_106, %c0_107, %c640_108], %228 {strides = array<i32>} : memref<1x4x1024xbf16, #tpu.memory_space<vmem>>, vector<1x4x128xbf16>,
    %c0_109 = arith.constant 0 : index
    %c768_110 = arith.constant 768 : index
    %229 = vector.load %arg6[%c0_109, %c768_110] : memref<4x1024xf32, #tpu.memory_space<vmem>>, vector<4x128xf32>
    %230 = vector.broadcast %134 : vector<4x1xf32> to vector<4x128xf32>
    %231 = arith.subf %229, %230 : vector<4x128xf32>
    %232 = vector.broadcast %143 : vector<4x1xf32> to vector<4x128xf32>
    %233 = arith.mulf %231, %232 : vector<4x128xf32>
    %cst_111 = arith.constant 0.000000e+00 : f32
    %234 = vector.broadcast %cst_111 : f32 to vector<4x128xf32>
    %235 = arith.cmpf oge, %233, %234 : vector<4x128xf32>
    %236 = vector.broadcast %144 : f32 to vector<4x128xf32>
    %237 = arith.mulf %236, %233 : vector<4x128xf32>
    %238 = arith.select %235, %233, %237 : vector<4x128xi1>, vector<4x128xf32>
    %239 = arith.truncf %238 : vector<4x128xf32> to vector<4x128xbf16>
    %c0_112 = arith.constant 0 : index
    %c0_113 = arith.constant 0 : index
    %c768_114 = arith.constant 768 : index
    %240 = vector.load %arg5[%c0_112, %c0_113, %c768_114] : memref<1x4x1024xbf16, #tpu.memory_space<vmem>>, vector<1x4x128xbf16>
    %241 = vector.shape_cast %240 : vector<1x4x128xbf16> to vector<4x128xbf16>
    %242 = vector.shape_cast %239 : vector<4x128xbf16> to vector<1x4x128xbf16>
    tpu.vector_store %arg5[%c0_112, %c0_113, %c768_114], %242 {strides = array<i32>} : memref<1x4x1024xbf16, #tpu.memory_space<vmem>>, vector<1x4x128xbf16>,
    %c0_115 = arith.constant 0 : index
    %c896_116 = arith.constant 896 : index
    %243 = vector.load %arg6[%c0_115, %c896_116] : memref<4x1024xf32, #tpu.memory_space<vmem>>, vector<4x128xf32>
    %244 = vector.broadcast %134 : vector<4x1xf32> to vector<4x128xf32>
    %245 = arith.subf %243, %244 : vector<4x128xf32>
    %246 = vector.broadcast %143 : vector<4x1xf32> to vector<4x128xf32>
    %247 = arith.mulf %245, %246 : vector<4x128xf32>
    %cst_117 = arith.constant 0.000000e+00 : f32
    %248 = vector.broadcast %cst_117 : f32 to vector<4x128xf32>
    %249 = arith.cmpf oge, %247, %248 : vector<4x128xf32>
    %250 = vector.broadcast %144 : f32 to vector<4x128xf32>
    %251 = arith.mulf %250, %247 : vector<4x128xf32>
    %252 = arith.select %249, %247, %251 : vector<4x128xi1>, vector<4x128xf32>
    %253 = arith.truncf %252 : vector<4x128xf32> to vector<4x128xbf16>
    %c0_118 = arith.constant 0 : index
    %c0_119 = arith.constant 0 : index
    %c896_120 = arith.constant 896 : index
    %254 = vector.load %arg5[%c0_118, %c0_119, %c896_120] : memref<1x4x1024xbf16, #tpu.memory_space<vmem>>, vector<1x4x128xbf16>
    %255 = vector.shape_cast %254 : vector<1x4x128xbf16> to vector<4x128xbf16>
    %256 = vector.shape_cast %253 : vector<4x128xbf16> to vector<1x4x128xbf16>
    tpu.vector_store %arg5[%c0_118, %c0_119, %c896_120], %256 {strides = array<i32>} : memref<1x4x1024xbf16, #tpu.memory_space<vmem>>, vector<1x4x128xbf16>,
    return
  }
  func.func @transform_0(%arg0: i32) -> (i32, i32, i32) {
    %c0_i32 = arith.constant 0 : i32
    %c0_i32_0 = arith.constant 0 : i32
    %c0_i32_1 = arith.constant 0 : i32
    return %arg0, %c0_i32, %c0_i32_0 : i32, i32, i32
  }
  func.func @transform_1(%arg0: i32) -> (i32, i32, i32) {
    %c0_i32 = arith.constant 0 : i32
    %c0_i32_0 = arith.constant 0 : i32
    %c0_i32_1 = arith.constant 0 : i32
    %c0_i32_2 = arith.constant 0 : i32
    return %c0_i32, %c0_i32_0, %c0_i32_1 : i32, i32, i32
  }
  func.func @transform_2(%arg0: i32) -> (i32, i32) {
    %c0_i32 = arith.constant 0 : i32
    %c0_i32_0 = arith.constant 0 : i32
    %c0_i32_1 = arith.constant 0 : i32
    return %c0_i32, %c0_i32_0 : i32, i32
  }
  func.func @transform_3(%arg0: i32) -> i32 {
    %c0_i32 = arith.constant 0 : i32
    %c0_i32_0 = arith.constant 0 : i32
    return %c0_i32 : i32
  }
  func.func @transform_4(%arg0: i32) -> (i32, i32, i32) {
    %c0_i32 = arith.constant 0 : i32
    %c0_i32_0 = arith.constant 0 : i32
    %c0_i32_1 = arith.constant 0 : i32
    return %arg0, %c0_i32, %c0_i32_0 : i32, i32, i32
  }
}

module attributes {stable_mosaic.version = 11 : i64} {
  func.func @kernel(%arg0: i32, %arg1: memref<1x8x384xbf16, #tpu.memory_space<vmem>>, %arg2: memref<8x2x64xbf16, #tpu.memory_space<vmem>>, %arg3: memref<2x1xf32, #tpu.memory_space<vmem>>, %arg4: memref<1x2x2048xf32, #tpu.memory_space<vmem>>) attributes {dimension_semantics = [#tpu.dimension_semantics<parallel>], iteration_bounds = array<i64: 2>, scalar_prefetch = 0 : i64, scratch_operands = 0 : i64, tpu.core_type = #tpu.core_type<tc>, window_params = [{transform_indices = @transform_0, window_bounds = array<i64: 1, 8, 384>}, {pipeline_mode = #tpu.pipeline_mode<synchronous>, transform_indices = @transform_1, window_bounds = array<i64: 8, 2, 64>}, {pipeline_mode = #tpu.pipeline_mode<synchronous>, transform_indices = @transform_2, window_bounds = array<i64: 2, 1>}, {transform_indices = @transform_3, window_bounds = array<i64: 1, 2, 2048>}]} {
    %c0 = arith.constant 0 : index
    %c0_0 = arith.constant 0 : index
    %0 = vector.load %arg3[%c0, %c0_0] : memref<2x1xf32, #tpu.memory_space<vmem>>, vector<2x1xf32>
    %c0_1 = arith.constant 0 : index
    %c0_2 = arith.constant 0 : index
    %c43 = arith.constant 43 : index
    %1 = vector.load %arg1[%c0_1, %c0_2, %c43] : memref<1x8x384xbf16, #tpu.memory_space<vmem>>, vector<1x8x256xbf16>
    %2 = vector.shape_cast %1 : vector<1x8x256xbf16> to vector<8x256xbf16>
    %3 = arith.extf %2 : vector<8x256xbf16> to vector<8x256xf32>
    %c0_3 = arith.constant 0 : index
    %c0_4 = arith.constant 0 : index
    %c44 = arith.constant 44 : index
    %4 = vector.load %arg1[%c0_3, %c0_4, %c44] : memref<1x8x384xbf16, #tpu.memory_space<vmem>>, vector<1x8x256xbf16>
    %5 = vector.shape_cast %4 : vector<1x8x256xbf16> to vector<8x256xbf16>
    %6 = arith.extf %5 : vector<8x256xbf16> to vector<8x256xf32>
    %c0_5 = arith.constant 0 : index
    %c0_6 = arith.constant 0 : index
    %c49 = arith.constant 49 : index
    %7 = vector.load %arg1[%c0_5, %c0_6, %c49] : memref<1x8x384xbf16, #tpu.memory_space<vmem>>, vector<1x8x256xbf16>
    %8 = vector.shape_cast %7 : vector<1x8x256xbf16> to vector<8x256xbf16>
    %9 = arith.extf %8 : vector<8x256xbf16> to vector<8x256xf32>
    %c0_7 = arith.constant 0 : index
    %c0_8 = arith.constant 0 : index
    %c50 = arith.constant 50 : index
    %10 = vector.load %arg1[%c0_7, %c0_8, %c50] : memref<1x8x384xbf16, #tpu.memory_space<vmem>>, vector<1x8x256xbf16>
    %11 = vector.shape_cast %10 : vector<1x8x256xbf16> to vector<8x256xbf16>
    %12 = arith.extf %11 : vector<8x256xbf16> to vector<8x256xf32>
    %c0_9 = arith.constant 0 : index
    %c0_10 = arith.constant 0 : index
    %c79 = arith.constant 79 : index
    %13 = vector.load %arg1[%c0_9, %c0_10, %c79] : memref<1x8x384xbf16, #tpu.memory_space<vmem>>, vector<1x8x256xbf16>
    %14 = vector.shape_cast %13 : vector<1x8x256xbf16> to vector<8x256xbf16>
    %15 = arith.extf %14 : vector<8x256xbf16> to vector<8x256xf32>
    %c0_11 = arith.constant 0 : index
    %c0_12 = arith.constant 0 : index
    %c80 = arith.constant 80 : index
    %16 = vector.load %arg1[%c0_11, %c0_12, %c80] : memref<1x8x384xbf16, #tpu.memory_space<vmem>>, vector<1x8x256xbf16>
    %17 = vector.shape_cast %16 : vector<1x8x256xbf16> to vector<8x256xbf16>
    %18 = arith.extf %17 : vector<8x256xbf16> to vector<8x256xf32>
    %c0_13 = arith.constant 0 : index
    %c0_14 = arith.constant 0 : index
    %c85 = arith.constant 85 : index
    %19 = vector.load %arg1[%c0_13, %c0_14, %c85] : memref<1x8x384xbf16, #tpu.memory_space<vmem>>, vector<1x8x256xbf16>
    %20 = vector.shape_cast %19 : vector<1x8x256xbf16> to vector<8x256xbf16>
    %21 = arith.extf %20 : vector<8x256xbf16> to vector<8x256xf32>
    %c0_15 = arith.constant 0 : index
    %c0_16 = arith.constant 0 : index
    %c86 = arith.constant 86 : index
    %22 = vector.load %arg1[%c0_15, %c0_16, %c86] : memref<1x8x384xbf16, #tpu.memory_space<vmem>>, vector<1x8x256xbf16>
    %23 = vector.shape_cast %22 : vector<1x8x256xbf16> to vector<8x256xbf16>
    %24 = arith.extf %23 : vector<8x256xbf16> to vector<8x256xf32>
    %25 = tpu.concatenate %3, %6, %9, %12, %15, %18, %21, %24 in 0 : vector<8x256xf32>, vector<8x256xf32>, vector<8x256xf32>, vector<8x256xf32>, vector<8x256xf32>, vector<8x256xf32>, vector<8x256xf32>, vector<8x256xf32> -> vector<64x256xf32>
    %26 = arith.truncf %25 : vector<64x256xf32> to vector<64x256xbf16>
    %c0_17 = arith.constant 0 : index
    %c0_18 = arith.constant 0 : index
    %c0_19 = arith.constant 0 : index
    %27 = vector.load %arg2[%c0_17, %c0_18, %c0_19] : memref<8x2x64xbf16, #tpu.memory_space<vmem>>, vector<1x2x64xbf16>
    %28 = vector.shape_cast %27 : vector<1x2x64xbf16> to vector<2x64xbf16>
    %cst = arith.constant dense<0.000000e+00> : vector<2x256xf32>
    %29 = tpu.matmul %28, %26, %cst {dimension_numbers = #tpu.dot_dimension_numbers<[1], [0], [0], [1], [0, 0, 1, 1], [], []>} : vector<2x64xbf16>, vector<64x256xbf16>, vector<2x256xf32> -> vector<2x256xf32>
    %30 = vector.broadcast %0 : vector<2x1xf32> to vector<2x256xf32>
    %31 = arith.addf %29, %30 : vector<2x256xf32>
    %c0_20 = arith.constant 0 : index
    %c0_21 = arith.constant 0 : index
    %c0_22 = arith.constant 0 : index
    %32 = vector.load %arg4[%c0_20, %c0_21, %c0_22] : memref<1x2x2048xf32, #tpu.memory_space<vmem>>, vector<1x2x256xf32>
    %33 = vector.shape_cast %32 : vector<1x2x256xf32> to vector<2x256xf32>
    %34 = vector.shape_cast %31 : vector<2x256xf32> to vector<1x2x256xf32>
    tpu.vector_store %arg4[%c0_20, %c0_21, %c0_22], %34 {strides = array<i32>} : memref<1x2x2048xf32, #tpu.memory_space<vmem>>, vector<1x2x256xf32>,
    %c1 = arith.constant 1 : index
    %c0_23 = arith.constant 0 : index
    %c0_24 = arith.constant 0 : index
    %35 = vector.load %arg2[%c1, %c0_23, %c0_24] : memref<8x2x64xbf16, #tpu.memory_space<vmem>>, vector<1x2x64xbf16>
    %36 = vector.shape_cast %35 : vector<1x2x64xbf16> to vector<2x64xbf16>
    %cst_25 = arith.constant dense<0.000000e+00> : vector<2x256xf32>
    %37 = tpu.matmul %36, %26, %cst_25 {dimension_numbers = #tpu.dot_dimension_numbers<[1], [0], [0], [1], [0, 0, 1, 1], [], []>} : vector<2x64xbf16>, vector<64x256xbf16>, vector<2x256xf32> -> vector<2x256xf32>
    %38 = vector.broadcast %0 : vector<2x1xf32> to vector<2x256xf32>
    %39 = arith.addf %37, %38 : vector<2x256xf32>
    %c0_26 = arith.constant 0 : index
    %c0_27 = arith.constant 0 : index
    %c256 = arith.constant 256 : index
    %40 = vector.load %arg4[%c0_26, %c0_27, %c256] : memref<1x2x2048xf32, #tpu.memory_space<vmem>>, vector<1x2x256xf32>
    %41 = vector.shape_cast %40 : vector<1x2x256xf32> to vector<2x256xf32>
    %42 = vector.shape_cast %39 : vector<2x256xf32> to vector<1x2x256xf32>
    tpu.vector_store %arg4[%c0_26, %c0_27, %c256], %42 {strides = array<i32>} : memref<1x2x2048xf32, #tpu.memory_space<vmem>>, vector<1x2x256xf32>,
    %c2 = arith.constant 2 : index
    %c0_28 = arith.constant 0 : index
    %c0_29 = arith.constant 0 : index
    %43 = vector.load %arg2[%c2, %c0_28, %c0_29] : memref<8x2x64xbf16, #tpu.memory_space<vmem>>, vector<1x2x64xbf16>
    %44 = vector.shape_cast %43 : vector<1x2x64xbf16> to vector<2x64xbf16>
    %cst_30 = arith.constant dense<0.000000e+00> : vector<2x256xf32>
    %45 = tpu.matmul %44, %26, %cst_30 {dimension_numbers = #tpu.dot_dimension_numbers<[1], [0], [0], [1], [0, 0, 1, 1], [], []>} : vector<2x64xbf16>, vector<64x256xbf16>, vector<2x256xf32> -> vector<2x256xf32>
    %46 = vector.broadcast %0 : vector<2x1xf32> to vector<2x256xf32>
    %47 = arith.addf %45, %46 : vector<2x256xf32>
    %c0_31 = arith.constant 0 : index
    %c0_32 = arith.constant 0 : index
    %c512 = arith.constant 512 : index
    %48 = vector.load %arg4[%c0_31, %c0_32, %c512] : memref<1x2x2048xf32, #tpu.memory_space<vmem>>, vector<1x2x256xf32>
    %49 = vector.shape_cast %48 : vector<1x2x256xf32> to vector<2x256xf32>
    %50 = vector.shape_cast %47 : vector<2x256xf32> to vector<1x2x256xf32>
    tpu.vector_store %arg4[%c0_31, %c0_32, %c512], %50 {strides = array<i32>} : memref<1x2x2048xf32, #tpu.memory_space<vmem>>, vector<1x2x256xf32>,
    %c3 = arith.constant 3 : index
    %c0_33 = arith.constant 0 : index
    %c0_34 = arith.constant 0 : index
    %51 = vector.load %arg2[%c3, %c0_33, %c0_34] : memref<8x2x64xbf16, #tpu.memory_space<vmem>>, vector<1x2x64xbf16>
    %52 = vector.shape_cast %51 : vector<1x2x64xbf16> to vector<2x64xbf16>
    %cst_35 = arith.constant dense<0.000000e+00> : vector<2x256xf32>
    %53 = tpu.matmul %52, %26, %cst_35 {dimension_numbers = #tpu.dot_dimension_numbers<[1], [0], [0], [1], [0, 0, 1, 1], [], []>} : vector<2x64xbf16>, vector<64x256xbf16>, vector<2x256xf32> -> vector<2x256xf32>
    %54 = vector.broadcast %0 : vector<2x1xf32> to vector<2x256xf32>
    %55 = arith.addf %53, %54 : vector<2x256xf32>
    %c0_36 = arith.constant 0 : index
    %c0_37 = arith.constant 0 : index
    %c768 = arith.constant 768 : index
    %56 = vector.load %arg4[%c0_36, %c0_37, %c768] : memref<1x2x2048xf32, #tpu.memory_space<vmem>>, vector<1x2x256xf32>
    %57 = vector.shape_cast %56 : vector<1x2x256xf32> to vector<2x256xf32>
    %58 = vector.shape_cast %55 : vector<2x256xf32> to vector<1x2x256xf32>
    tpu.vector_store %arg4[%c0_36, %c0_37, %c768], %58 {strides = array<i32>} : memref<1x2x2048xf32, #tpu.memory_space<vmem>>, vector<1x2x256xf32>,
    %c4 = arith.constant 4 : index
    %c0_38 = arith.constant 0 : index
    %c0_39 = arith.constant 0 : index
    %59 = vector.load %arg2[%c4, %c0_38, %c0_39] : memref<8x2x64xbf16, #tpu.memory_space<vmem>>, vector<1x2x64xbf16>
    %60 = vector.shape_cast %59 : vector<1x2x64xbf16> to vector<2x64xbf16>
    %cst_40 = arith.constant dense<0.000000e+00> : vector<2x256xf32>
    %61 = tpu.matmul %60, %26, %cst_40 {dimension_numbers = #tpu.dot_dimension_numbers<[1], [0], [0], [1], [0, 0, 1, 1], [], []>} : vector<2x64xbf16>, vector<64x256xbf16>, vector<2x256xf32> -> vector<2x256xf32>
    %62 = vector.broadcast %0 : vector<2x1xf32> to vector<2x256xf32>
    %63 = arith.addf %61, %62 : vector<2x256xf32>
    %c0_41 = arith.constant 0 : index
    %c0_42 = arith.constant 0 : index
    %c1024 = arith.constant 1024 : index
    %64 = vector.load %arg4[%c0_41, %c0_42, %c1024] : memref<1x2x2048xf32, #tpu.memory_space<vmem>>, vector<1x2x256xf32>
    %65 = vector.shape_cast %64 : vector<1x2x256xf32> to vector<2x256xf32>
    %66 = vector.shape_cast %63 : vector<2x256xf32> to vector<1x2x256xf32>
    tpu.vector_store %arg4[%c0_41, %c0_42, %c1024], %66 {strides = array<i32>} : memref<1x2x2048xf32, #tpu.memory_space<vmem>>, vector<1x2x256xf32>,
    %c5 = arith.constant 5 : index
    %c0_43 = arith.constant 0 : index
    %c0_44 = arith.constant 0 : index
    %67 = vector.load %arg2[%c5, %c0_43, %c0_44] : memref<8x2x64xbf16, #tpu.memory_space<vmem>>, vector<1x2x64xbf16>
    %68 = vector.shape_cast %67 : vector<1x2x64xbf16> to vector<2x64xbf16>
    %cst_45 = arith.constant dense<0.000000e+00> : vector<2x256xf32>
    %69 = tpu.matmul %68, %26, %cst_45 {dimension_numbers = #tpu.dot_dimension_numbers<[1], [0], [0], [1], [0, 0, 1, 1], [], []>} : vector<2x64xbf16>, vector<64x256xbf16>, vector<2x256xf32> -> vector<2x256xf32>
    %70 = vector.broadcast %0 : vector<2x1xf32> to vector<2x256xf32>
    %71 = arith.addf %69, %70 : vector<2x256xf32>
    %c0_46 = arith.constant 0 : index
    %c0_47 = arith.constant 0 : index
    %c1280 = arith.constant 1280 : index
    %72 = vector.load %arg4[%c0_46, %c0_47, %c1280] : memref<1x2x2048xf32, #tpu.memory_space<vmem>>, vector<1x2x256xf32>
    %73 = vector.shape_cast %72 : vector<1x2x256xf32> to vector<2x256xf32>
    %74 = vector.shape_cast %71 : vector<2x256xf32> to vector<1x2x256xf32>
    tpu.vector_store %arg4[%c0_46, %c0_47, %c1280], %74 {strides = array<i32>} : memref<1x2x2048xf32, #tpu.memory_space<vmem>>, vector<1x2x256xf32>,
    %c6 = arith.constant 6 : index
    %c0_48 = arith.constant 0 : index
    %c0_49 = arith.constant 0 : index
    %75 = vector.load %arg2[%c6, %c0_48, %c0_49] : memref<8x2x64xbf16, #tpu.memory_space<vmem>>, vector<1x2x64xbf16>
    %76 = vector.shape_cast %75 : vector<1x2x64xbf16> to vector<2x64xbf16>
    %cst_50 = arith.constant dense<0.000000e+00> : vector<2x256xf32>
    %77 = tpu.matmul %76, %26, %cst_50 {dimension_numbers = #tpu.dot_dimension_numbers<[1], [0], [0], [1], [0, 0, 1, 1], [], []>} : vector<2x64xbf16>, vector<64x256xbf16>, vector<2x256xf32> -> vector<2x256xf32>
    %78 = vector.broadcast %0 : vector<2x1xf32> to vector<2x256xf32>
    %79 = arith.addf %77, %78 : vector<2x256xf32>
    %c0_51 = arith.constant 0 : index
    %c0_52 = arith.constant 0 : index
    %c1536 = arith.constant 1536 : index
    %80 = vector.load %arg4[%c0_51, %c0_52, %c1536] : memref<1x2x2048xf32, #tpu.memory_space<vmem>>, vector<1x2x256xf32>
    %81 = vector.shape_cast %80 : vector<1x2x256xf32> to vector<2x256xf32>
    %82 = vector.shape_cast %79 : vector<2x256xf32> to vector<1x2x256xf32>
    tpu.vector_store %arg4[%c0_51, %c0_52, %c1536], %82 {strides = array<i32>} : memref<1x2x2048xf32, #tpu.memory_space<vmem>>, vector<1x2x256xf32>,
    %c7 = arith.constant 7 : index
    %c0_53 = arith.constant 0 : index
    %c0_54 = arith.constant 0 : index
    %83 = vector.load %arg2[%c7, %c0_53, %c0_54] : memref<8x2x64xbf16, #tpu.memory_space<vmem>>, vector<1x2x64xbf16>
    %84 = vector.shape_cast %83 : vector<1x2x64xbf16> to vector<2x64xbf16>
    %cst_55 = arith.constant dense<0.000000e+00> : vector<2x256xf32>
    %85 = tpu.matmul %84, %26, %cst_55 {dimension_numbers = #tpu.dot_dimension_numbers<[1], [0], [0], [1], [0, 0, 1, 1], [], []>} : vector<2x64xbf16>, vector<64x256xbf16>, vector<2x256xf32> -> vector<2x256xf32>
    %86 = vector.broadcast %0 : vector<2x1xf32> to vector<2x256xf32>
    %87 = arith.addf %85, %86 : vector<2x256xf32>
    %c0_56 = arith.constant 0 : index
    %c0_57 = arith.constant 0 : index
    %c1792 = arith.constant 1792 : index
    %88 = vector.load %arg4[%c0_56, %c0_57, %c1792] : memref<1x2x2048xf32, #tpu.memory_space<vmem>>, vector<1x2x256xf32>
    %89 = vector.shape_cast %88 : vector<1x2x256xf32> to vector<2x256xf32>
    %90 = vector.shape_cast %87 : vector<2x256xf32> to vector<1x2x256xf32>
    tpu.vector_store %arg4[%c0_56, %c0_57, %c1792], %90 {strides = array<i32>} : memref<1x2x2048xf32, #tpu.memory_space<vmem>>, vector<1x2x256xf32>,
    return
  }
  func.func @transform_0(%arg0: i32) -> (i32, i32, i32) {
    %c0_i32 = arith.constant 0 : i32
    %c0_i32_0 = arith.constant 0 : i32
    %c0_i32_1 = arith.constant 0 : i32
    return %arg0, %c0_i32, %c0_i32_0 : i32, i32, i32
  }
  func.func @transform_1(%arg0: i32) -> (i32, i32, i32) {
    %c0_i32 = arith.constant 0 : i32
    %c0_i32_0 = arith.constant 0 : i32
    %c0_i32_1 = arith.constant 0 : i32
    %c0_i32_2 = arith.constant 0 : i32
    return %c0_i32, %c0_i32_0, %c0_i32_1 : i32, i32, i32
  }
  func.func @transform_2(%arg0: i32) -> (i32, i32) {
    %c0_i32 = arith.constant 0 : i32
    %c0_i32_0 = arith.constant 0 : i32
    %c0_i32_1 = arith.constant 0 : i32
    return %c0_i32, %c0_i32_0 : i32, i32
  }
  func.func @transform_3(%arg0: i32) -> (i32, i32, i32) {
    %c0_i32 = arith.constant 0 : i32
    %c0_i32_0 = arith.constant 0 : i32
    %c0_i32_1 = arith.constant 0 : i32
    return %arg0, %c0_i32, %c0_i32_0 : i32, i32, i32
  }
}

</mosaic_0001>

<llo_original>
// kernel: autoencoder3d_forward.4
$region0: #{autoencoder3d_forward.4}
  #allocation0 [shape = 'u32[]', space=smem, size = 0x4, offset = 0x4, fixed_abs, tag = 'smem constant byte address 0x4 - core index']
  #allocation1 [shape = 'u32[72,128]{1,0:T(1,128)}', space=vmem, size = 0x9000, scoped, tag = 'internal scratch']
  #allocation2 [shape = 'f32[4,128]{1,0:T(4,128)}', space=vmem, size = 0x800, scoped, tag = 'scratch operand']
  #allocation3 [shape = 'f32[1]{0:T(128)S(6)}', space=smem, size = 0x200, scoped, tag = 'scoped memory for autoencoder3d_forward.4']
  %s0 = inlined_call_operand.vmem [shape: bf16[2,64,256], index: 0, kind: input, shape index: {}]
  %s1 = inlined_call_operand.vmem [shape: bf16[8,4,64], index: 1, kind: input, shape index: {}]
  %s2 = inlined_call_operand.vmem [shape: f32[1,128], index: 2, kind: input, shape index: {}]
  %s3 = inlined_call_operand.<no memory space> [shape: f32[1], index: 3, kind: input, shape index: {}]
  %s4 = inlined_call_operand.vmem [shape: bf16[2,4,128], index: 4, kind: output, shape index: {}]
  %s5 = sld [smem:[#allocation0]]
  $region49: #{autoencoder3d_forward.4} parent=0
    _
  %s7 = ssub.s32 1, %s5
  %s8 = scalar_select 0, %s7, %s5
  %9 = sst [smem:[#allocation3]] %s3
  loop: start=0, step=1, limit=4
  $region2: #{autoencoder3d_forward.4} parent=0 // loop_pre_header
    _
  $region3: #{autoencoder3d_forward.4} parent=0 // loop_header
    %s11 = sphi 0, %s15
    %p12 = scmp.ge.s32.totalorder %s11, 4
    %s21 = sphi 0, %s23
    %s24 = sphi 0, %s21
    %s25 = sphi 0, %s24
    %s41 = sphi 0, %s25
    %s45 = sphi 0, %s45
    %s47 = sphi 0, %s45
    %s48 = sphi 0, %s47
    %s62 = sphi 0, %s48
    %s66 = sphi 0, %s66
    %s68 = sphi 0, %s66
    %s69 = sphi 0, %s68
    %s83 = sphi 0, %s69
    %s87 = sphi 0, %s87
    %s89 = sphi 0, %s87
    %s90 = sphi 0, %s89
    %s104 = sphi 0, %s90
    %s110 = sphi 0, %s112
    %s113 = sphi 0, %s110
    %s114 = sphi 0, %s113
    %s130 = sphi 0, %s114
  $region4: #{autoencoder3d_forward.4} parent=0 // loop_header_branch
    %14 = sbr.rel (%p12) target = $region8
  $region5: #{autoencoder3d_forward.4} parent=0 // loop_body
    %s16 = ssub.s32 %s11, 1
    %s17 = ssub.s32 %s11, 2
    %s18 = sadd.s32 %s11, 1
    %s19 = ssub.s32 %s11, %s18
    %p20 = scmp.eq.s32.totalorder %s19, 0
    %s22 = sadd.s32 %s21, 1
    %s23 = scalar_select %p20, %s21, %s22
    %p26 = pneg %p20
    %p27 = scmp.eq.s32.totalorder %s11, 1
    %p28 = por %p26, %p27
    %p29 = scmp.ne.s32.totalorder %s21, %s24
    %p30 = scmp.eq.s32.totalorder %s11, 0
    %p31 = por %p29, %p30
    %p32 = scmp.ne.s32.totalorder %s21, %s24
    %p33 = scmp.eq.s32.totalorder %s16, 1
    %p34 = por %p32, %p33
    %p35 = scmp.ne.s32.totalorder %s24, %s25
    %p36 = scmp.eq.s32.totalorder %s16, 0
    %p37 = por %p35, %p36
    %p38 = scmp.ne.s32.totalorder %s24, %s25
    %p39 = scmp.eq.s32.totalorder %s17, 1
    %p40 = por %p38, %p39
    %p42 = scmp.ne.s32.totalorder %s25, %s41
    %p43 = scmp.eq.s32.totalorder %s17, 0
    %p44 = por %p42, %p43
    %s46 = sadd.s32 %s45, 1
    %p49 = scmp.eq.s32.totalorder %s11, 1
    %p50 = scmp.ne.s32.totalorder %s45, %s47
    %p51 = scmp.eq.s32.totalorder %s11, 0
    %p52 = por %p50, %p51
    %p53 = scmp.ne.s32.totalorder %s45, %s47
    %p54 = scmp.eq.s32.totalorder %s16, 1
    %p55 = por %p53, %p54
    %p56 = scmp.ne.s32.totalorder %s47, %s48
    %p57 = scmp.eq.s32.totalorder %s16, 0
    %p58 = por %p56, %p57
    %p59 = scmp.ne.s32.totalorder %s47, %s48
    %p60 = scmp.eq.s32.totalorder %s17, 1
    %p61 = por %p59, %p60
    %p63 = scmp.ne.s32.totalorder %s48, %s62
    %p64 = scmp.eq.s32.totalorder %s17, 0
    %p65 = por %p63, %p64
    %s67 = sadd.s32 %s66, 1
    %p70 = scmp.eq.s32.totalorder %s11, 1
    %p71 = scmp.ne.s32.totalorder %s66, %s68
    %p72 = scmp.eq.s32.totalorder %s11, 0
    %p73 = por %p71, %p72
    %p74 = scmp.ne.s32.totalorder %s66, %s68
    %p75 = scmp.eq.s32.totalorder %s16, 1
    %p76 = por %p74, %p75
    %p77 = scmp.ne.s32.totalorder %s68, %s69
    %p78 = scmp.eq.s32.totalorder %s16, 0
    %p79 = por %p77, %p78
    %p80 = scmp.ne.s32.totalorder %s68, %s69
    %p81 = scmp.eq.s32.totalorder %s17, 1
    %p82 = por %p80, %p81
    %p84 = scmp.ne.s32.totalorder %s69, %s83
    %p85 = scmp.eq.s32.totalorder %s17, 0
    %p86 = por %p84, %p85
    %s88 = sadd.s32 %s87, 1
    %p91 = scmp.eq.s32.totalorder %s11, 1
    %p92 = scmp.ne.s32.totalorder %s87, %s89
    %p93 = scmp.eq.s32.totalorder %s11, 0
    %p94 = por %p92, %p93
    %p95 = scmp.ne.s32.totalorder %s87, %s89
    %p96 = scmp.eq.s32.totalorder %s16, 1
    %p97 = por %p95, %p96
    %p98 = scmp.ne.s32.totalorder %s89, %s90
    %p99 = scmp.eq.s32.totalorder %s16, 0
    %p100 = por %p98, %p99
    %p101 = scmp.ne.s32.totalorder %s89, %s90
    %p102 = scmp.eq.s32.totalorder %s17, 1
    %p103 = por %p101, %p102
    %p105 = scmp.ne.s32.totalorder %s90, %s104
    %p106 = scmp.eq.s32.totalorder %s17, 0
    %p107 = por %p105, %p106
    %s108 = ssub.s32 %s11, %s18
    %p109 = scmp.eq.s32.totalorder %s108, 0
    %s111 = sadd.s32 %s110, 1
    %s112 = scalar_select %p109, %s110, %s111
    %p115 = pneg %p109
    %p116 = scmp.eq.s32.totalorder %s11, 1
    %p117 = por %p115, %p116
    %p118 = scmp.ne.s32.totalorder %s110, %s113
    %p119 = scmp.eq.s32.totalorder %s11, 0
    %p120 = por %p118, %p119
    %p121 = scmp.ne.s32.totalorder %s110, %s113
    %p122 = scmp.eq.s32.totalorder %s16, 1
    %p123 = por %p121, %p122
    %p124 = scmp.ne.s32.totalorder %s113, %s114
    %p125 = scmp.eq.s32.totalorder %s16, 0
    %p126 = por %p124, %p125
    %p127 = scmp.ne.s32.totalorder %s113, %s114
    %p128 = scmp.eq.s32.totalorder %s17, 1
    %p129 = por %p127, %p128
    %p131 = scmp.ne.s32.totalorder %s114, %s130
    %p132 = scmp.eq.s32.totalorder %s17, 0
    %p133 = por %p131, %p132
    %p134 = scmp.le.s32.totalorder 1, %s11
    %p135 = scmp.lt.s32.totalorder %s11, 3
    %p136 = pnand %p134, %p135
    %p137 = pneg %p136
    // Predicated region
    $region9: #{autoencoder3d_forward.4} parent=5 // pred_check
      _
    $region10: #{autoencoder3d_forward.4} parent=5 // pred_check_branch
      %139 = sbr.rel (%p136) target = $region12
    $region11: #{autoencoder3d_forward.4} parent=5 // pred_region
      %s140 = ssub.s32 %s11, 1
      // Predicated region
      $region13: #{autoencoder3d_forward.4} parent=11 // pred_check
        %p141 = pneg %p58
      $region14: #{autoencoder3d_forward.4} parent=11 // pred_check_branch
        %143 = sbr.rel (%p141) target = $region16
      $region15: #{autoencoder3d_forward.4} parent=11 // pred_region
        _
      $region16: #{autoencoder3d_forward.4} parent=11 // pred_fallthru
        _
      // Predicated region
      $region17: #{autoencoder3d_forward.4} parent=11 // pred_check
        %p144 = pneg %p79
      $region18: #{autoencoder3d_forward.4} parent=11 // pred_check_branch
        %146 = sbr.rel (%p144) target = $region20
      $region19: #{autoencoder3d_forward.4} parent=11 // pred_region
        _
      $region20: #{autoencoder3d_forward.4} parent=11 // pred_fallthru
        _
      // Predicated region
      $region21: #{autoencoder3d_forward.4} parent=11 // pred_check
        %p147 = pneg %p100
      $region22: #{autoencoder3d_forward.4} parent=11 // pred_check_branch
        %149 = sbr.rel (%p147) target = $region24
      $region23: #{autoencoder3d_forward.4} parent=11 // pred_region
        _
      $region24: #{autoencoder3d_forward.4} parent=11 // pred_fallthru
        _
    $region12: #{autoencoder3d_forward.4} parent=5 // pred_fallthru
      _
    %p150 = scmp.lt.s32.totalorder %s11, 2
    // Predicated region
    $region25: #{autoencoder3d_forward.4} parent=5 // pred_check
      %p151 = pneg %p150
    $region26: #{autoencoder3d_forward.4} parent=5 // pred_check_branch
      %153 = sbr.rel (%p151) target = $region28
    $region27: #{autoencoder3d_forward.4} parent=5 // pred_region
      // Predicated region
      $region29: #{autoencoder3d_forward.4} parent=27 // pred_check
        %p154 = pneg %p31
      $region30: #{autoencoder3d_forward.4} parent=27 // pred_check_branch
        %156 = sbr.rel (%p154) target = $region32
      $region31: #{autoencoder3d_forward.4} parent=27 // pred_region
        %p157 = scmp.lt.s32.totalorder %s11, 1
        %s158 = scalar_select %p157, %s11, 1
        %s159 = smul.addr %s158, 16
        %s160 = smul.addr %s159, 4
        %s161 = scalar_lea.vmem %s0, %s160
      $region32: #{autoencoder3d_forward.4} parent=27 // pred_fallthru
        _
    $region28: #{autoencoder3d_forward.4} parent=5 // pred_fallthru
      _
    %p162 = scmp.le.s32.totalorder 1, %s11
    %p163 = scmp.lt.s32.totalorder %s11, 3
    %p164 = pnand %p162, %p163
    %p165 = pneg %p164
    // Predicated region
    $region33: #{autoencoder3d_forward.4} parent=5 // pred_check
      _
    $region34: #{autoencoder3d_forward.4} parent=5 // pred_check_branch
      %167 = sbr.rel (%p164) target = $region36
    $region35: #{autoencoder3d_forward.4} parent=5 // pred_region
      %s168 = ssub.s32 %s11, 1
      %p169 = scmp.lt.s32.totalorder %s16, 1
      %s170 = scalar_select %p169, %s16, 1
      %s171 = smul.addr %s170, 16
      %s172 = smul.addr %s171, 4
      %s173 = scalar_lea.vmem %s0, %s172
      %p174 = pneg %p37
      %p175 = pneg %p34
      %p176 = pneg %p58
      %p177 = pneg %p55
      %p178 = pneg %p79
      %p179 = pneg %p76
      %p180 = pneg %p100
      %p181 = pneg %p97
      %p182 = pneg %p126
      %p183 = pneg %p123
      %p184 = scmp.lt.s32.totalorder %s16, 1
      %s185 = scalar_select %p184, %s16, 1
      %s186 = smul.addr %s185, 2
      %s187 = scalar_lea.vmem %s4, %s186
      %p188 = scmp.lt.s32.totalorder %s16, 1
      %s189 = scalar_select %p188, %s16, 1
      %s190 = smul.addr %s189, 16
      %s191 = smul.addr %s190, 4
      %s192 = scalar_lea.vmem %s0, %s191
      %p193 = scmp.lt.s32.totalorder %s16, 1
      %s194 = scalar_select %p193, %s16, 1
      %s195 = smul.addr %s194, 2
      %s196 = scalar_lea.vmem %s4, %s195
      %v198 = vld [vmem:[%s2] sm:$0x1]
      %v199 = vld [vmem:[%s192] sm:$0xf]
      %v200 = vld [vmem:[%s192 + $0x8] sm:$0xf]
      %v201 = vld [vmem:[%s192 + $0x10] sm:$0xf]
      %v202 = vld [vmem:[%s192 + $0x18] sm:$0xf]
      %v203 = vld [vmem:[%s192 + $0x20] sm:$0xf]
      %v204 = vld [vmem:[%s192 + $0x28] sm:$0xf]
      %v205 = vld [vmem:[%s192 + $0x30] sm:$0xf]
      %v206 = vld [vmem:[%s192 + $0x38] sm:$0xf]
      %v207 = vld [vmem:[%s1] sm:$0x3]
      %v208 = vld [vmem:[%s192] sm:$0xff]
      %v209 = vld [vmem:[%s192 + $0x8] sm:$0xff]
      %v210 = vld [vmem:[%s192 + $0x10] sm:$0xff]
      %v211 = vld [vmem:[%s192 + $0x18] sm:$0xff]
      %v212 = vld [vmem:[%s192 + $0x20] sm:$0xff]
      %v213 = vld [vmem:[%s192 + $0x28] sm:$0xff]
      %v214 = vld [vmem:[%s192 + $0x30] sm:$0xff]
      %v215 = vld [vmem:[%s192 + $0x38] sm:$0xff]
      %s216 = scalar_lea.vmem %s1, 2
      %v217 = vld [vmem:[%s216] sm:$0x3]
      %v226 = vunpack.c.l.b16 %v208
      %v227 = vunpack.c.h.b16 %v208
      %v228 = vunpack.c.l.b16 %v209
      %v229 = vunpack.c.h.b16 %v209
      %v230 = vunpack.c.l.b16 %v210
      %v231 = vunpack.c.h.b16 %v210
      %v232 = vunpack.c.l.b16 %v211
      %v233 = vunpack.c.h.b16 %v211
      %v234 = vunpack.c.l.b16 %v212
      %v235 = vunpack.c.h.b16 %v212
      %v236 = vunpack.c.l.b16 %v213
      %v237 = vunpack.c.h.b16 %v213
      %v238 = vunpack.c.l.b16 %v214
      %v239 = vunpack.c.h.b16 %v214
      %v240 = vunpack.c.l.b16 %v215
      %v241 = vunpack.c.h.b16 %v215
      %v242 = vpack.c.b16 %v228, %v226
      %v243 = vpack.c.b16 %v229, %v227
      %v244 = vpack.c.b16 %v232, %v230
      %v245 = vpack.c.b16 %v233, %v231
      %v246 = vpack.c.b16 %v236, %v234
      %v247 = vpack.c.b16 %v237, %v235
      %v248 = vpack.c.b16 %v240, %v238
      %v249 = vpack.c.b16 %v241, %v239
      %250 = vrot.lane.b32.xlu0 %v242, 127
      %v251 = vpop.permute.xlu0 %250
      %252 = vrot.lane.b32.xlu0 %v243, 127
      %v253 = vpop.permute.xlu0 %252
      %254 = vrot.lane.b32.xlu0 %v244, 127
      %v255 = vpop.permute.xlu0 %254
      %256 = vrot.lane.b32.xlu0 %v245, 127
      %v257 = vpop.permute.xlu0 %256
      %258 = vrot.lane.b32.xlu0 %v246, 127
      %v259 = vpop.permute.xlu0 %258
      %260 = vrot.lane.b32.xlu0 %v247, 127
      %v261 = vpop.permute.xlu0 %260
      %262 = vrot.lane.b32.xlu0 %v248, 127
      %v263 = vpop.permute.xlu0 %262
      %264 = vrot.lane.b32.xlu0 %v249, 127
      %v265 = vpop.permute.xlu0 %264
      %vm266 = vcmask 1039360
      %v267 = vsel %vm266, %v251, %v253
      %v268 = vsel %vm266, %v255, %v257
      %v269 = vsel %vm266, %v259, %v261
      %v270 = vsel %vm266, %v263, %v265
      %vm275 = vcmask 523264
      %v277 = vsel %vm275, %v217, 0
      %279 = vmatpush.bf16.msra.mxu0 0
      %280 = vmatpush.bf16.msra.mxu0 0
      %281 = vmatpush.bf16.msra.mxu0 0
      %282 = vmatpush.bf16.msra.mxu0 0
      %283 = vmatpush.bf16.msra.mxu0 %v270
      %284 = vmatpush.bf16.msra.mxu0 %v269
      %285 = vmatpush.bf16.msra.mxu0 %v268
      %286 = vmatpush.bf16.msra.mxu0 %v267
      %287 = vmatmul.bf16.gmra.mxu0 %v277
      %v288 = vpop.f32.mrf.mxu0
      %v289 = vadd.f32 0.0, %v288
      %v290 = vpop.f32.mrf.mxu0
      %291 = vdwg.mxu0
      %v300 = vunpack.c.l.b16 %v199
      %v301 = vunpack.c.l.b16 %v200
      %v302 = vunpack.c.l.b16 %v201
      %v303 = vunpack.c.l.b16 %v202
      %v304 = vunpack.c.l.b16 %v203
      %v305 = vunpack.c.l.b16 %v204
      %v306 = vunpack.c.l.b16 %v205
      %v307 = vunpack.c.l.b16 %v206
      %v308 = vpack.c.b16 %v301, %v300
      %v309 = vpack.c.b16 %v303, %v302
      %v310 = vpack.c.b16 %v305, %v304
      %v311 = vpack.c.b16 %v307, %v306
      %v317 = vsel %vm275, %v207, 0
      %319 = vmatpush.bf16.msra.mxu0 0
      %320 = vmatpush.bf16.msra.mxu0 0
      %321 = vmatpush.bf16.msra.mxu0 0
      %322 = vmatpush.bf16.msra.mxu0 0
      %323 = vmatpush.bf16.msra.mxu0 %v311
      %324 = vmatpush.bf16.msra.mxu0 %v310
      %325 = vmatpush.bf16.msra.mxu0 %v309
      %326 = vmatpush.bf16.msra.mxu0 %v308
      %327 = vmatmul.bf16.gmra.mxu0 %v317
      %v328 = vpop.f32.mrf.mxu0
      %v329 = vadd.f32 %v289, %v328
      %v330 = vpop.f32.mrf.mxu0
      %331 = vdwg.mxu0
      %s332 = scalar_lea.vmem %s1, 4
      %v333 = vld [vmem:[%s332] sm:$0x3]
      %334 = vrot.lane.b32.xlu0 %v242, 123
      %v335 = vpop.permute.xlu0 %334
      %336 = vrot.lane.b32.xlu0 %v243, 123
      %v337 = vpop.permute.xlu0 %336
      %338 = vrot.lane.b32.xlu0 %v244, 123
      %v339 = vpop.permute.xlu0 %338
      %340 = vrot.lane.b32.xlu0 %v245, 123
      %v341 = vpop.permute.xlu0 %340
      %342 = vrot.lane.b32.xlu0 %v246, 123
      %v343 = vpop.permute.xlu0 %342
      %344 = vrot.lane.b32.xlu0 %v247, 123
      %v345 = vpop.permute.xlu0 %344
      %346 = vrot.lane.b32.xlu0 %v248, 123
      %v347 = vpop.permute.xlu0 %346
      %348 = vrot.lane.b32.xlu0 %v249, 123
      %v349 = vpop.permute.xlu0 %348
      %vm350 = vcmask 1006592
      %v351 = vsel %vm350, %v335, %v337
      %v352 = vsel %vm350, %v339, %v341
      %v353 = vsel %vm350, %v343, %v345
      %v354 = vsel %vm350, %v347, %v349
      %v360 = vsel %vm275, %v333, 0
      %362 = vmatpush.bf16.msra.mxu0 0
      %363 = vmatpush.bf16.msra.mxu0 0
      %364 = vmatpush.bf16.msra.mxu0 0
      %365 = vmatpush.bf16.msra.mxu0 0
      %366 = vmatpush.bf16.msra.mxu0 %v354
      %367 = vmatpush.bf16.msra.mxu0 %v353
      %368 = vmatpush.bf16.msra.mxu0 %v352
      %369 = vmatpush.bf16.msra.mxu0 %v351
      %370 = vmatmul.bf16.gmra.mxu0 %v360
      %v371 = vpop.f32.mrf.mxu0
      %v372 = vadd.f32 0.0, %v371
      %v373 = vpop.f32.mrf.mxu0
      %374 = vdwg.mxu0
      %v375 = vadd.f32 %v329, %v372
      %s376 = scalar_lea.vmem %s1, 6
      %v377 = vld [vmem:[%s376] sm:$0x3]
      %378 = vrot.lane.b32.xlu0 %v242, 122
      %v379 = vpop.permute.xlu0 %378
      %380 = vrot.lane.b32.xlu0 %v243, 122
      %v381 = vpop.permute.xlu0 %380
      %382 = vrot.lane.b32.xlu0 %v244, 122
      %v383 = vpop.permute.xlu0 %382
      %384 = vrot.lane.b32.xlu0 %v245, 122
      %v385 = vpop.permute.xlu0 %384
      %386 = vrot.lane.b32.xlu0 %v246, 122
      %v387 = vpop.permute.xlu0 %386
      %388 = vrot.lane.b32.xlu0 %v247, 122
      %v389 = vpop.permute.xlu0 %388
      %390 = vrot.lane.b32.xlu0 %v248, 122
      %v391 = vpop.permute.xlu0 %390
      %392 = vrot.lane.b32.xlu0 %v249, 122
      %v393 = vpop.permute.xlu0 %392
      %vm394 = vcmask 998400
      %v395 = vsel %vm394, %v379, %v381
      %v396 = vsel %vm394, %v383, %v385
      %v397 = vsel %vm394, %v387, %v389
      %v398 = vsel %vm394, %v391, %v393
      %v404 = vsel %vm275, %v377, 0
      %406 = vmatpush.bf16.msra.mxu0 0
      %407 = vmatpush.bf16.msra.mxu0 0
      %408 = vmatpush.bf16.msra.mxu0 0
      %409 = vmatpush.bf16.msra.mxu0 0
      %410 = vmatpush.bf16.msra.mxu0 %v398
      %411 = vmatpush.bf16.msra.mxu0 %v397
      %412 = vmatpush.bf16.msra.mxu0 %v396
      %413 = vmatpush.bf16.msra.mxu0 %v395
      %414 = vmatmul.bf16.gmra.mxu0 %v404
      %v415 = vpop.f32.mrf.mxu0
      %v416 = vadd.f32 0.0, %v415
      %v417 = vpop.f32.mrf.mxu0
      %418 = vdwg.mxu0
      %v419 = vadd.f32 %v375, %v416
      %s420 = scalar_lea.vmem %s1, 8
      %v421 = vld [vmem:[%s420] sm:$0x3]
      %422 = vrot.lane.b32.xlu0 %v242, 103
      %v423 = vpop.permute.xlu0 %422
      %424 = vrot.lane.b32.xlu0 %v243, 103
      %v425 = vpop.permute.xlu0 %424
      %426 = vrot.lane.b32.xlu0 %v244, 103
      %v427 = vpop.permute.xlu0 %426
      %428 = vrot.lane.b32.xlu0 %v245, 103
      %v429 = vpop.permute.xlu0 %428
      %430 = vrot.lane.b32.xlu0 %v246, 103
      %v431 = vpop.permute.xlu0 %430
      %432 = vrot.lane.b32.xlu0 %v247, 103
      %v433 = vpop.permute.xlu0 %432
      %434 = vrot.lane.b32.xlu0 %v248, 103
      %v435 = vpop.permute.xlu0 %434
      %436 = vrot.lane.b32.xlu0 %v249, 103
      %v437 = vpop.permute.xlu0 %436
      %vm438 = vcmask 842752
      %v439 = vsel %vm438, %v423, %v425
      %v440 = vsel %vm438, %v427, %v429
      %v441 = vsel %vm438, %v431, %v433
      %v442 = vsel %vm438, %v435, %v437
      %v448 = vsel %vm275, %v421, 0
      %450 = vmatpush.bf16.msra.mxu0 0
      %451 = vmatpush.bf16.msra.mxu0 0
      %452 = vmatpush.bf16.msra.mxu0 0
      %453 = vmatpush.bf16.msra.mxu0 0
      %454 = vmatpush.bf16.msra.mxu0 %v442
      %455 = vmatpush.bf16.msra.mxu0 %v441
      %456 = vmatpush.bf16.msra.mxu0 %v440
      %457 = vmatpush.bf16.msra.mxu0 %v439
      %458 = vmatmul.bf16.gmra.mxu0 %v448
      %v459 = vpop.f32.mrf.mxu0
      %v460 = vadd.f32 0.0, %v459
      %v461 = vpop.f32.mrf.mxu0
      %462 = vdwg.mxu0
      %v463 = vadd.f32 %v419, %v460
      %s464 = scalar_lea.vmem %s1, 10
      %v465 = vld [vmem:[%s464] sm:$0x3]
      %466 = vrot.lane.b32.xlu0 %v242, 102
      %v467 = vpop.permute.xlu0 %466
      %468 = vrot.lane.b32.xlu0 %v243, 102
      %v469 = vpop.permute.xlu0 %468
      %470 = vrot.lane.b32.xlu0 %v244, 102
      %v471 = vpop.permute.xlu0 %470
      %472 = vrot.lane.b32.xlu0 %v245, 102
      %v473 = vpop.permute.xlu0 %472
      %474 = vrot.lane.b32.xlu0 %v246, 102
      %v475 = vpop.permute.xlu0 %474
      %476 = vrot.lane.b32.xlu0 %v247, 102
      %v477 = vpop.permute.xlu0 %476
      %478 = vrot.lane.b32.xlu0 %v248, 102
      %v479 = vpop.permute.xlu0 %478
      %480 = vrot.lane.b32.xlu0 %v249, 102
      %v481 = vpop.permute.xlu0 %480
      %vm482 = vcmask 834560
      %v483 = vsel %vm482, %v467, %v469
      %v484 = vsel %vm482, %v471, %v473
      %v485 = vsel %vm482, %v475, %v477
      %v486 = vsel %vm482, %v479, %v481
      %v492 = vsel %vm275, %v465, 0
      %494 = vmatpush.bf16.msra.mxu0 0
      %495 = vmatpush.bf16.msra.mxu0 0
      %496 = vmatpush.bf16.msra.mxu0 0
      %497 = vmatpush.bf16.msra.mxu0 0
      %498 = vmatpush.bf16.msra.mxu0 %v486
      %499 = vmatpush.bf16.msra.mxu0 %v485
      %500 = vmatpush.bf16.msra.mxu0 %v484
      %501 = vmatpush.bf16.msra.mxu0 %v483
      %502 = vmatmul.bf16.gmra.mxu0 %v492
      %v503 = vpop.f32.mrf.mxu0
      %v504 = vadd.f32 0.0, %v503
      %v505 = vpop.f32.mrf.mxu0
      %506 = vdwg.mxu0
      %v507 = vadd.f32 %v463, %v504
      %s508 = scalar_lea.vmem %s1, 12
      %v509 = vld [vmem:[%s508] sm:$0x3]
      %510 = vrot.lane.b32.xlu0 %v242, 98
      %v511 = vpop.permute.xlu0 %510
      %512 = vrot.lane.b32.xlu0 %v243, 98
      %v513 = vpop.permute.xlu0 %512
      %514 = vrot.lane.b32.xlu0 %v244, 98
      %v515 = vpop.permute.xlu0 %514
      %516 = vrot.lane.b32.xlu0 %v245, 98
      %v517 = vpop.permute.xlu0 %516
      %518 = vrot.lane.b32.xlu0 %v246, 98
      %v519 = vpop.permute.xlu0 %518
      %520 = vrot.lane.b32.xlu0 %v247, 98
      %v521 = vpop.permute.xlu0 %520
      %522 = vrot.lane.b32.xlu0 %v248, 98
      %v523 = vpop.permute.xlu0 %522
      %524 = vrot.lane.b32.xlu0 %v249, 98
      %v525 = vpop.permute.xlu0 %524
      %vm526 = vcmask 801792
      %v527 = vsel %vm526, %v511, %v513
      %v528 = vsel %vm526, %v515, %v517
      %v529 = vsel %vm526, %v519, %v521
      %v530 = vsel %vm526, %v523, %v525
      %v536 = vsel %vm275, %v509, 0
      %538 = vmatpush.bf16.msra.mxu0 0
      %539 = vmatpush.bf16.msra.mxu0 0
      %540 = vmatpush.bf16.msra.mxu0 0
      %541 = vmatpush.bf16.msra.mxu0 0
      %542 = vmatpush.bf16.msra.mxu0 %v530
      %543 = vmatpush.bf16.msra.mxu0 %v529
      %544 = vmatpush.bf16.msra.mxu0 %v528
      %545 = vmatpush.bf16.msra.mxu0 %v527
      %546 = vmatmul.bf16.gmra.mxu0 %v536
      %v547 = vpop.f32.mrf.mxu0
      %v548 = vadd.f32 0.0, %v547
      %v549 = vpop.f32.mrf.mxu0
      %550 = vdwg.mxu0
      %v551 = vadd.f32 %v507, %v548
      %s552 = scalar_lea.vmem %s1, 14
      %v553 = vld [vmem:[%s552] sm:$0x3]
      %554 = vrot.lane.b32.xlu0 %v242, 97
      %v555 = vpop.permute.xlu0 %554
      %556 = vrot.lane.b32.xlu0 %v243, 97
      %v557 = vpop.permute.xlu0 %556
      %558 = vrot.lane.b32.xlu0 %v244, 97
      %v559 = vpop.permute.xlu0 %558
      %560 = vrot.lane.b32.xlu0 %v245, 97
      %v561 = vpop.permute.xlu0 %560
      %562 = vrot.lane.b32.xlu0 %v246, 97
      %v563 = vpop.permute.xlu0 %562
      %564 = vrot.lane.b32.xlu0 %v247, 97
      %v565 = vpop.permute.xlu0 %564
      %566 = vrot.lane.b32.xlu0 %v248, 97
      %v567 = vpop.permute.xlu0 %566
      %568 = vrot.lane.b32.xlu0 %v249, 97
      %v569 = vpop.permute.xlu0 %568
      %vm570 = vcmask 793600
      %v571 = vsel %vm570, %v555, %v557
      %v572 = vsel %vm570, %v559, %v561
      %v573 = vsel %vm570, %v563, %v565
      %v574 = vsel %vm570, %v567, %v569
      %v580 = vsel %vm275, %v553, 0
      %582 = vmatpush.bf16.msra.mxu0 0
      %583 = vmatpush.bf16.msra.mxu0 0
      %584 = vmatpush.bf16.msra.mxu0 0
      %585 = vmatpush.bf16.msra.mxu0 0
      %586 = vmatpush.bf16.msra.mxu0 %v574
      %587 = vmatpush.bf16.msra.mxu0 %v573
      %588 = vmatpush.bf16.msra.mxu0 %v572
      %589 = vmatpush.bf16.msra.mxu0 %v571
      %590 = vmatmul.bf16.gmra.mxu0 %v580
      %v591 = vpop.f32.mrf.mxu0
      %v592 = vadd.f32 0.0, %v591
      %v593 = vpop.f32.mrf.mxu0
      %594 = vdwg.mxu0
      %v595 = vadd.f32 %v551, %v592
      %v597 = vperm.slane %v198, 0
      %v599 = vmul.f32 %v595, %v597
      %vm600 = vcmask 1043456
      %v601 = vsel %vm600, %v599, 0.0
      %602 = vadd.xlane.f32.xlu0 %v601
      %v603 = vpop.xlane.xlu0 %602
      %v604 = vadd.f32 %v603, 0.0
      %v605 = vmul.f32 %v599, %v595
      %v606 = vsel %vm600, %v605, 0.0
      %607 = vadd.xlane.f32.xlu0 %v606
      %v608 = vpop.xlane.xlu0 %607
      %v609 = vadd.f32 %v608, 0.0
      %610 = vst [vmem:[#allocation2] sm:$0xf] %v595
      %v611 = vmul.f32 %v604, 0.015625
      %v612 = vmul.f32 %v609, 0.015625
      %v613 = vmul.f32 %v611, %v611
      %v614 = vsub.f32 %v612, %v613
      %v615 = vmax.f32 %v614, 0.0
      %v616 = vadd.f32 %v615, 1e-05
      %v617 = vrsqrt.pop %v616
      %v618 = vmul.f32 %v617, %v616
      %v619 = vmul.f32 %v618, %v617
      %v620 = vmul.f32 0.5, %v619
      %v621 = vsub.f32 1.5, %v620
      %v622 = vmul.f32 %v617, %v621
      %vm623 = vweird.f32 %v616
      %vm624 = vweird.f32 %v617
      %vm625 = vmor %vm623, %vm624
      %v626 = vsel %vm625, %v617, %v622
      %s627 = sld [smem:[#allocation3]]
      %v628 = vld [vmem:[#allocation2] sm:$0xf]
      %v629 = vsub.f32 %v628, %v611
      %v630 = vmul.f32 %v629, %v626
      %vm631 = vcmp.ge.f32.partialorder %v630, 0.0
      %v632 = vstv %s627
      %v633 = vmul.f32 %v632, %v630
      %v634 = vsel %vm631, %v630, %v633
      %v635 = vpack.c.bf16 %v634, %v634
      %636 = vst [vmem:[%s196] sm:$0x3] %v635
      %p637 = scmp.lt.s32.totalorder %s16, 1
      %s638 = scalar_select %p637, %s16, 1
      %s639 = smul.addr %s638, 2
      %s640 = scalar_lea.vmem %s4, %s639
      // Predicated region
      $region37: #{autoencoder3d_forward.4} parent=35 // pred_check
        %p641 = pneg %p123
      $region38: #{autoencoder3d_forward.4} parent=35 // pred_check_branch
        %643 = sbr.rel (%p641) target = $region40
      $region39: #{autoencoder3d_forward.4} parent=35 // pred_region
        _
      $region40: #{autoencoder3d_forward.4} parent=35 // pred_fallthru
        _
    $region36: #{autoencoder3d_forward.4} parent=5 // pred_fallthru
      _
    %p644 = scmp.le.s32.totalorder 2, %s11
    // Predicated region
    $region41: #{autoencoder3d_forward.4} parent=5 // pred_check
      %p645 = pneg %p644
    $region42: #{autoencoder3d_forward.4} parent=5 // pred_check_branch
      %647 = sbr.rel (%p645) target = $region44
    $region43: #{autoencoder3d_forward.4} parent=5 // pred_region
      %s648 = ssub.s32 %s11, 2
      // Predicated region
      $region45: #{autoencoder3d_forward.4} parent=43 // pred_check
        %p649 = pneg %p129
      $region46: #{autoencoder3d_forward.4} parent=43 // pred_check_branch
        %651 = sbr.rel (%p649) target = $region48
      $region47: #{autoencoder3d_forward.4} parent=43 // pred_region
        %p652 = scmp.lt.s32.totalorder %s17, 1
        %s653 = scalar_select %p652, %s17, 1
        %s654 = smul.addr %s653, 2
        %s655 = scalar_lea.vmem %s4, %s654
      $region48: #{autoencoder3d_forward.4} parent=43 // pred_fallthru
        _
    $region44: #{autoencoder3d_forward.4} parent=5 // pred_fallthru
      _
  $region6: #{autoencoder3d_forward.4} parent=0 // loop_footer
    %s15 = sadd.s32 1, %s11
  $region7: #{autoencoder3d_forward.4} parent=0 // loop_footer_branch
    %10 = sbr.rel target = $region3
  $region8: #{autoencoder3d_forward.4} parent=0 // loop_exit
    _

// kernel: autoencoder3d_forward.5
$region0: #{autoencoder3d_forward.5}
  #allocation0 [shape = 'u32[]', space=smem, size = 0x4, offset = 0x4, fixed_abs, tag = 'smem constant byte address 0x4 - core index']
  #allocation1 [shape = 'u32[72,128]{1,0:T(1,128)}', space=vmem, size = 0x9000, scoped, tag = 'internal scratch']
  #allocation2 [shape = 'f32[8,128]{1,0:T(8,128)}', space=vmem, size = 0x1000, scoped, tag = 'scratch operand']
  #allocation3 [shape = 'f32[1]{0:T(128)S(6)}', space=smem, size = 0x200, scoped, tag = 'scoped memory for autoencoder3d_forward.5']
  %s0 = inlined_call_operand.vmem [shape: bf16[2,64,256], index: 0, kind: input, shape index: {}]
  %s1 = inlined_call_operand.vmem [shape: bf16[8,8,64], index: 1, kind: input, shape index: {}]
  %s2 = inlined_call_operand.vmem [shape: f32[1,128], index: 2, kind: input, shape index: {}]
  %s3 = inlined_call_operand.<no memory space> [shape: f32[1], index: 3, kind: input, shape index: {}]
  %s4 = inlined_call_operand.vmem [shape: bf16[2,8,128], index: 4, kind: output, shape index: {}]
  %s5 = sld [smem:[#allocation0]]
  $region49: #{autoencoder3d_forward.5} parent=0
    _
  %s7 = ssub.s32 1, %s5
  %s8 = scalar_select 0, %s7, %s5
  %9 = sst [smem:[#allocation3]] %s3
  loop: start=0, step=1, limit=4
  $region2: #{autoencoder3d_forward.5} parent=0 // loop_pre_header
    _
  $region3: #{autoencoder3d_forward.5} parent=0 // loop_header
    %s11 = sphi 0, %s15
    %p12 = scmp.ge.s32.totalorder %s11, 4
    %s21 = sphi 0, %s23
    %s24 = sphi 0, %s21
    %s25 = sphi 0, %s24
    %s41 = sphi 0, %s25
    %s45 = sphi 0, %s45
    %s47 = sphi 0, %s45
    %s48 = sphi 0, %s47
    %s62 = sphi 0, %s48
    %s66 = sphi 0, %s66
    %s68 = sphi 0, %s66
    %s69 = sphi 0, %s68
    %s83 = sphi 0, %s69
    %s87 = sphi 0, %s87
    %s89 = sphi 0, %s87
    %s90 = sphi 0, %s89
    %s104 = sphi 0, %s90
    %s110 = sphi 0, %s112
    %s113 = sphi 0, %s110
    %s114 = sphi 0, %s113
    %s130 = sphi 0, %s114
  $region4: #{autoencoder3d_forward.5} parent=0 // loop_header_branch
    %14 = sbr.rel (%p12) target = $region8
  $region5: #{autoencoder3d_forward.5} parent=0 // loop_body
    %s16 = ssub.s32 %s11, 1
    %s17 = ssub.s32 %s11, 2
    %s18 = sadd.s32 %s11, 1
    %s19 = ssub.s32 %s11, %s18
    %p20 = scmp.eq.s32.totalorder %s19, 0
    %s22 = sadd.s32 %s21, 1
    %s23 = scalar_select %p20, %s21, %s22
    %p26 = pneg %p20
    %p27 = scmp.eq.s32.totalorder %s11, 1
    %p28 = por %p26, %p27
    %p29 = scmp.ne.s32.totalorder %s21, %s24
    %p30 = scmp.eq.s32.totalorder %s11, 0
    %p31 = por %p29, %p30
    %p32 = scmp.ne.s32.totalorder %s21, %s24
    %p33 = scmp.eq.s32.totalorder %s16, 1
    %p34 = por %p32, %p33
    %p35 = scmp.ne.s32.totalorder %s24, %s25
    %p36 = scmp.eq.s32.totalorder %s16, 0
    %p37 = por %p35, %p36
    %p38 = scmp.ne.s32.totalorder %s24, %s25
    %p39 = scmp.eq.s32.totalorder %s17, 1
    %p40 = por %p38, %p39
    %p42 = scmp.ne.s32.totalorder %s25, %s41
    %p43 = scmp.eq.s32.totalorder %s17, 0
    %p44 = por %p42, %p43
    %s46 = sadd.s32 %s45, 1
    %p49 = scmp.eq.s32.totalorder %s11, 1
    %p50 = scmp.ne.s32.totalorder %s45, %s47
    %p51 = scmp.eq.s32.totalorder %s11, 0
    %p52 = por %p50, %p51
    %p53 = scmp.ne.s32.totalorder %s45, %s47
    %p54 = scmp.eq.s32.totalorder %s16, 1
    %p55 = por %p53, %p54
    %p56 = scmp.ne.s32.totalorder %s47, %s48
    %p57 = scmp.eq.s32.totalorder %s16, 0
    %p58 = por %p56, %p57
    %p59 = scmp.ne.s32.totalorder %s47, %s48
    %p60 = scmp.eq.s32.totalorder %s17, 1
    %p61 = por %p59, %p60
    %p63 = scmp.ne.s32.totalorder %s48, %s62
    %p64 = scmp.eq.s32.totalorder %s17, 0
    %p65 = por %p63, %p64
    %s67 = sadd.s32 %s66, 1
    %p70 = scmp.eq.s32.totalorder %s11, 1
    %p71 = scmp.ne.s32.totalorder %s66, %s68
    %p72 = scmp.eq.s32.totalorder %s11, 0
    %p73 = por %p71, %p72
    %p74 = scmp.ne.s32.totalorder %s66, %s68
    %p75 = scmp.eq.s32.totalorder %s16, 1
    %p76 = por %p74, %p75
    %p77 = scmp.ne.s32.totalorder %s68, %s69
    %p78 = scmp.eq.s32.totalorder %s16, 0
    %p79 = por %p77, %p78
    %p80 = scmp.ne.s32.totalorder %s68, %s69
    %p81 = scmp.eq.s32.totalorder %s17, 1
    %p82 = por %p80, %p81
    %p84 = scmp.ne.s32.totalorder %s69, %s83
    %p85 = scmp.eq.s32.totalorder %s17, 0
    %p86 = por %p84, %p85
    %s88 = sadd.s32 %s87, 1
    %p91 = scmp.eq.s32.totalorder %s11, 1
    %p92 = scmp.ne.s32.totalorder %s87, %s89
    %p93 = scmp.eq.s32.totalorder %s11, 0
    %p94 = por %p92, %p93
    %p95 = scmp.ne.s32.totalorder %s87, %s89
    %p96 = scmp.eq.s32.totalorder %s16, 1
    %p97 = por %p95, %p96
    %p98 = scmp.ne.s32.totalorder %s89, %s90
    %p99 = scmp.eq.s32.totalorder %s16, 0
    %p100 = por %p98, %p99
    %p101 = scmp.ne.s32.totalorder %s89, %s90
    %p102 = scmp.eq.s32.totalorder %s17, 1
    %p103 = por %p101, %p102
    %p105 = scmp.ne.s32.totalorder %s90, %s104
    %p106 = scmp.eq.s32.totalorder %s17, 0
    %p107 = por %p105, %p106
    %s108 = ssub.s32 %s11, %s18
    %p109 = scmp.eq.s32.totalorder %s108, 0
    %s111 = sadd.s32 %s110, 1
    %s112 = scalar_select %p109, %s110, %s111
    %p115 = pneg %p109
    %p116 = scmp.eq.s32.totalorder %s11, 1
    %p117 = por %p115, %p116
    %p118 = scmp.ne.s32.totalorder %s110, %s113
    %p119 = scmp.eq.s32.totalorder %s11, 0
    %p120 = por %p118, %p119
    %p121 = scmp.ne.s32.totalorder %s110, %s113
    %p122 = scmp.eq.s32.totalorder %s16, 1
    %p123 = por %p121, %p122
    %p124 = scmp.ne.s32.totalorder %s113, %s114
    %p125 = scmp.eq.s32.totalorder %s16, 0
    %p126 = por %p124, %p125
    %p127 = scmp.ne.s32.totalorder %s113, %s114
    %p128 = scmp.eq.s32.totalorder %s17, 1
    %p129 = por %p127, %p128
    %p131 = scmp.ne.s32.totalorder %s114, %s130
    %p132 = scmp.eq.s32.totalorder %s17, 0
    %p133 = por %p131, %p132
    %p134 = scmp.le.s32.totalorder 1, %s11
    %p135 = scmp.lt.s32.totalorder %s11, 3
    %p136 = pnand %p134, %p135
    %p137 = pneg %p136
    // Predicated region
    $region9: #{autoencoder3d_forward.5} parent=5 // pred_check
      _
    $region10: #{autoencoder3d_forward.5} parent=5 // pred_check_branch
      %139 = sbr.rel (%p136) target = $region12
    $region11: #{autoencoder3d_forward.5} parent=5 // pred_region
      %s140 = ssub.s32 %s11, 1
      // Predicated region
      $region13: #{autoencoder3d_forward.5} parent=11 // pred_check
        %p141 = pneg %p58
      $region14: #{autoencoder3d_forward.5} parent=11 // pred_check_branch
        %143 = sbr.rel (%p141) target = $region16
      $region15: #{autoencoder3d_forward.5} parent=11 // pred_region
        _
      $region16: #{autoencoder3d_forward.5} parent=11 // pred_fallthru
        _
      // Predicated region
      $region17: #{autoencoder3d_forward.5} parent=11 // pred_check
        %p144 = pneg %p79
      $region18: #{autoencoder3d_forward.5} parent=11 // pred_check_branch
        %146 = sbr.rel (%p144) target = $region20
      $region19: #{autoencoder3d_forward.5} parent=11 // pred_region
        _
      $region20: #{autoencoder3d_forward.5} parent=11 // pred_fallthru
        _
      // Predicated region
      $region21: #{autoencoder3d_forward.5} parent=11 // pred_check
        %p147 = pneg %p100
      $region22: #{autoencoder3d_forward.5} parent=11 // pred_check_branch
        %149 = sbr.rel (%p147) target = $region24
      $region23: #{autoencoder3d_forward.5} parent=11 // pred_region
        _
      $region24: #{autoencoder3d_forward.5} parent=11 // pred_fallthru
        _
    $region12: #{autoencoder3d_forward.5} parent=5 // pred_fallthru
      _
    %p150 = scmp.lt.s32.totalorder %s11, 2
    // Predicated region
    $region25: #{autoencoder3d_forward.5} parent=5 // pred_check
      %p151 = pneg %p150
    $region26: #{autoencoder3d_forward.5} parent=5 // pred_check_branch
      %153 = sbr.rel (%p151) target = $region28
    $region27: #{autoencoder3d_forward.5} parent=5 // pred_region
      // Predicated region
      $region29: #{autoencoder3d_forward.5} parent=27 // pred_check
        %p154 = pneg %p31
      $region30: #{autoencoder3d_forward.5} parent=27 // pred_check_branch
        %156 = sbr.rel (%p154) target = $region32
      $region31: #{autoencoder3d_forward.5} parent=27 // pred_region
        %p157 = scmp.lt.s32.totalorder %s11, 1
        %s158 = scalar_select %p157, %s11, 1
        %s159 = smul.addr %s158, 16
        %s160 = smul.addr %s159, 4
        %s161 = scalar_lea.vmem %s0, %s160
      $region32: #{autoencoder3d_forward.5} parent=27 // pred_fallthru
        _
    $region28: #{autoencoder3d_forward.5} parent=5 // pred_fallthru
      _
    %p162 = scmp.le.s32.totalorder 1, %s11
    %p163 = scmp.lt.s32.totalorder %s11, 3
    %p164 = pnand %p162, %p163
    %p165 = pneg %p164
    // Predicated region
    $region33: #{autoencoder3d_forward.5} parent=5 // pred_check
      _
    $region34: #{autoencoder3d_forward.5} parent=5 // pred_check_branch
      %167 = sbr.rel (%p164) target = $region36
    $region35: #{autoencoder3d_forward.5} parent=5 // pred_region
      %s168 = ssub.s32 %s11, 1
      %p169 = scmp.lt.s32.totalorder %s16, 1
      %s170 = scalar_select %p169, %s16, 1
      %s171 = smul.addr %s170, 16
      %s172 = smul.addr %s171, 4
      %s173 = scalar_lea.vmem %s0, %s172
      %p174 = pneg %p37
      %p175 = pneg %p34
      %p176 = pneg %p58
      %p177 = pneg %p55
      %p178 = pneg %p79
      %p179 = pneg %p76
      %p180 = pneg %p100
      %p181 = pneg %p97
      %p182 = pneg %p126
      %p183 = pneg %p123
      %p184 = scmp.lt.s32.totalorder %s16, 1
      %s185 = scalar_select %p184, %s16, 1
      %s186 = smul.addr %s185, 4
      %s187 = scalar_lea.vmem %s4, %s186
      %p188 = scmp.lt.s32.totalorder %s16, 1
      %s189 = scalar_select %p188, %s16, 1
      %s190 = smul.addr %s189, 16
      %s191 = smul.addr %s190, 4
      %s192 = scalar_lea.vmem %s0, %s191
      %p193 = scmp.lt.s32.totalorder %s16, 1
      %s194 = scalar_select %p193, %s16, 1
      %s195 = smul.addr %s194, 4
      %s196 = scalar_lea.vmem %s4, %s195
      %v198 = vld [vmem:[%s2] sm:$0x1]
      %v199 = vld [vmem:[%s192] sm:$0xf]
      %v200 = vld [vmem:[%s192 + $0x8] sm:$0xf]
      %v201 = vld [vmem:[%s192 + $0x10] sm:$0xf]
      %v202 = vld [vmem:[%s192 + $0x18] sm:$0xf]
      %v203 = vld [vmem:[%s192 + $0x20] sm:$0xf]
      %v204 = vld [vmem:[%s192 + $0x28] sm:$0xf]
      %v205 = vld [vmem:[%s192 + $0x30] sm:$0xf]
      %v206 = vld [vmem:[%s192 + $0x38] sm:$0xf]
      %v207 = vld [vmem:[%s1] sm:$0xf]
      %v208 = vld [vmem:[%s192] sm:$0xff]
      %v209 = vld [vmem:[%s192 + $0x8] sm:$0xff]
      %v210 = vld [vmem:[%s192 + $0x10] sm:$0xff]
      %v211 = vld [vmem:[%s192 + $0x18] sm:$0xff]
      %v212 = vld [vmem:[%s192 + $0x20] sm:$0xff]
      %v213 = vld [vmem:[%s192 + $0x28] sm:$0xff]
      %v214 = vld [vmem:[%s192 + $0x30] sm:$0xff]
      %v215 = vld [vmem:[%s192 + $0x38] sm:$0xff]
      %s216 = scalar_lea.vmem %s1, 4
      %v217 = vld [vmem:[%s216] sm:$0xf]
      %v226 = vunpack.c.l.b16 %v208
      %v227 = vunpack.c.h.b16 %v208
      %v228 = vunpack.c.l.b16 %v209
      %v229 = vunpack.c.h.b16 %v209
      %v230 = vunpack.c.l.b16 %v210
      %v231 = vunpack.c.h.b16 %v210
      %v232 = vunpack.c.l.b16 %v211
      %v233 = vunpack.c.h.b16 %v211
      %v234 = vunpack.c.l.b16 %v212
      %v235 = vunpack.c.h.b16 %v212
      %v236 = vunpack.c.l.b16 %v213
      %v237 = vunpack.c.h.b16 %v213
      %v238 = vunpack.c.l.b16 %v214
      %v239 = vunpack.c.h.b16 %v214
      %v240 = vunpack.c.l.b16 %v215
      %v241 = vunpack.c.h.b16 %v215
      %v242 = vpack.c.b16 %v228, %v226
      %v243 = vpack.c.b16 %v229, %v227
      %v244 = vpack.c.b16 %v232, %v230
      %v245 = vpack.c.b16 %v233, %v231
      %v246 = vpack.c.b16 %v236, %v234
      %v247 = vpack.c.b16 %v237, %v235
      %v248 = vpack.c.b16 %v240, %v238
      %v249 = vpack.c.b16 %v241, %v239
      %250 = vrot.lane.b32.xlu0 %v242, 127
      %v251 = vpop.permute.xlu0 %250
      %252 = vrot.lane.b32.xlu0 %v243, 127
      %v253 = vpop.permute.xlu0 %252
      %254 = vrot.lane.b32.xlu0 %v244, 127
      %v255 = vpop.permute.xlu0 %254
      %256 = vrot.lane.b32.xlu0 %v245, 127
      %v257 = vpop.permute.xlu0 %256
      %258 = vrot.lane.b32.xlu0 %v246, 127
      %v259 = vpop.permute.xlu0 %258
      %260 = vrot.lane.b32.xlu0 %v247, 127
      %v261 = vpop.permute.xlu0 %260
      %262 = vrot.lane.b32.xlu0 %v248, 127
      %v263 = vpop.permute.xlu0 %262
      %264 = vrot.lane.b32.xlu0 %v249, 127
      %v265 = vpop.permute.xlu0 %264
      %vm266 = vcmask 1039360
      %v267 = vsel %vm266, %v251, %v253
      %v268 = vsel %vm266, %v255, %v257
      %v269 = vsel %vm266, %v259, %v261
      %v270 = vsel %vm266, %v263, %v265
      %vm275 = vcmask 523264
      %v277 = vsel %vm275, %v217, 0
      %279 = vmatpush.bf16.msra.mxu0 0
      %280 = vmatpush.bf16.msra.mxu0 0
      %281 = vmatpush.bf16.msra.mxu0 0
      %282 = vmatpush.bf16.msra.mxu0 0
      %283 = vmatpush.bf16.msra.mxu0 %v270
      %284 = vmatpush.bf16.msra.mxu0 %v269
      %285 = vmatpush.bf16.msra.mxu0 %v268
      %286 = vmatpush.bf16.msra.mxu0 %v267
      %287 = vmatmul.bf16.gmra.mxu0 %v277
      %v288 = vpop.f32.mrf.mxu0
      %v289 = vadd.f32 0.0, %v288
      %v290 = vpop.f32.mrf.mxu0
      %291 = vdwg.mxu0
      %v300 = vunpack.c.l.b16 %v199
      %v301 = vunpack.c.l.b16 %v200
      %v302 = vunpack.c.l.b16 %v201
      %v303 = vunpack.c.l.b16 %v202
      %v304 = vunpack.c.l.b16 %v203
      %v305 = vunpack.c.l.b16 %v204
      %v306 = vunpack.c.l.b16 %v205
      %v307 = vunpack.c.l.b16 %v206
      %v308 = vpack.c.b16 %v301, %v300
      %v309 = vpack.c.b16 %v303, %v302
      %v310 = vpack.c.b16 %v305, %v304
      %v311 = vpack.c.b16 %v307, %v306
      %v317 = vsel %vm275, %v207, 0
      %319 = vmatpush.bf16.msra.mxu0 0
      %320 = vmatpush.bf16.msra.mxu0 0
      %321 = vmatpush.bf16.msra.mxu0 0
      %322 = vmatpush.bf16.msra.mxu0 0
      %323 = vmatpush.bf16.msra.mxu0 %v311
      %324 = vmatpush.bf16.msra.mxu0 %v310
      %325 = vmatpush.bf16.msra.mxu0 %v309
      %326 = vmatpush.bf16.msra.mxu0 %v308
      %327 = vmatmul.bf16.gmra.mxu0 %v317
      %v328 = vpop.f32.mrf.mxu0
      %v329 = vadd.f32 %v289, %v328
      %v330 = vpop.f32.mrf.mxu0
      %331 = vdwg.mxu0
      %s332 = scalar_lea.vmem %s1, 8
      %v333 = vld [vmem:[%s332] sm:$0xf]
      %334 = vrot.lane.b32.xlu0 %v242, 125
      %v335 = vpop.permute.xlu0 %334
      %336 = vrot.lane.b32.xlu0 %v243, 125
      %v337 = vpop.permute.xlu0 %336
      %338 = vrot.lane.b32.xlu0 %v244, 125
      %v339 = vpop.permute.xlu0 %338
      %340 = vrot.lane.b32.xlu0 %v245, 125
      %v341 = vpop.permute.xlu0 %340
      %342 = vrot.lane.b32.xlu0 %v246, 125
      %v343 = vpop.permute.xlu0 %342
      %344 = vrot.lane.b32.xlu0 %v247, 125
      %v345 = vpop.permute.xlu0 %344
      %346 = vrot.lane.b32.xlu0 %v248, 125
      %v347 = vpop.permute.xlu0 %346
      %348 = vrot.lane.b32.xlu0 %v249, 125
      %v349 = vpop.permute.xlu0 %348
      %vm350 = vcmask 1022976
      %v351 = vsel %vm350, %v335, %v337
      %v352 = vsel %vm350, %v339, %v341
      %v353 = vsel %vm350, %v343, %v345
      %v354 = vsel %vm350, %v347, %v349
      %v360 = vsel %vm275, %v333, 0
      %362 = vmatpush.bf16.msra.mxu0 0
      %363 = vmatpush.bf16.msra.mxu0 0
      %364 = vmatpush.bf16.msra.mxu0 0
      %365 = vmatpush.bf16.msra.mxu0 0
      %366 = vmatpush.bf16.msra.mxu0 %v354
      %367 = vmatpush.bf16.msra.mxu0 %v353
      %368 = vmatpush.bf16.msra.mxu0 %v352
      %369 = vmatpush.bf16.msra.mxu0 %v351
      %370 = vmatmul.bf16.gmra.mxu0 %v360
      %v371 = vpop.f32.mrf.mxu0
      %v372 = vadd.f32 0.0, %v371
      %v373 = vpop.f32.mrf.mxu0
      %374 = vdwg.mxu0
      %v375 = vadd.f32 %v329, %v372
      %s376 = scalar_lea.vmem %s1, 12
      %v377 = vld [vmem:[%s376] sm:$0xf]
      %378 = vrot.lane.b32.xlu0 %v242, 124
      %v379 = vpop.permute.xlu0 %378
      %380 = vrot.lane.b32.xlu0 %v243, 124
      %v381 = vpop.permute.xlu0 %380
      %382 = vrot.lane.b32.xlu0 %v244, 124
      %v383 = vpop.permute.xlu0 %382
      %384 = vrot.lane.b32.xlu0 %v245, 124
      %v385 = vpop.permute.xlu0 %384
      %386 = vrot.lane.b32.xlu0 %v246, 124
      %v387 = vpop.permute.xlu0 %386
      %388 = vrot.lane.b32.xlu0 %v247, 124
      %v389 = vpop.permute.xlu0 %388
      %390 = vrot.lane.b32.xlu0 %v248, 124
      %v391 = vpop.permute.xlu0 %390
      %392 = vrot.lane.b32.xlu0 %v249, 124
      %v393 = vpop.permute.xlu0 %392
      %vm394 = vcmask 1014784
      %v395 = vsel %vm394, %v379, %v381
      %v396 = vsel %vm394, %v383, %v385
      %v397 = vsel %vm394, %v387, %v389
      %v398 = vsel %vm394, %v391, %v393
      %v404 = vsel %vm275, %v377, 0
      %406 = vmatpush.bf16.msra.mxu0 0
      %407 = vmatpush.bf16.msra.mxu0 0
      %408 = vmatpush.bf16.msra.mxu0 0
      %409 = vmatpush.bf16.msra.mxu0 0
      %410 = vmatpush.bf16.msra.mxu0 %v398
      %411 = vmatpush.bf16.msra.mxu0 %v397
      %412 = vmatpush.bf16.msra.mxu0 %v396
      %413 = vmatpush.bf16.msra.mxu0 %v395
      %414 = vmatmul.bf16.gmra.mxu0 %v404
      %v415 = vpop.f32.mrf.mxu0
      %v416 = vadd.f32 0.0, %v415
      %v417 = vpop.f32.mrf.mxu0
      %418 = vdwg.mxu0
      %v419 = vadd.f32 %v375, %v416
      %s420 = scalar_lea.vmem %s1, 16
      %v421 = vld [vmem:[%s420] sm:$0xf]
      %422 = vrot.lane.b32.xlu0 %v242, 119
      %v423 = vpop.permute.xlu0 %422
      %424 = vrot.lane.b32.xlu0 %v243, 119
      %v425 = vpop.permute.xlu0 %424
      %426 = vrot.lane.b32.xlu0 %v244, 119
      %v427 = vpop.permute.xlu0 %426
      %428 = vrot.lane.b32.xlu0 %v245, 119
      %v429 = vpop.permute.xlu0 %428
      %430 = vrot.lane.b32.xlu0 %v246, 119
      %v431 = vpop.permute.xlu0 %430
      %432 = vrot.lane.b32.xlu0 %v247, 119
      %v433 = vpop.permute.xlu0 %432
      %434 = vrot.lane.b32.xlu0 %v248, 119
      %v435 = vpop.permute.xlu0 %434
      %436 = vrot.lane.b32.xlu0 %v249, 119
      %v437 = vpop.permute.xlu0 %436
      %vm438 = vcmask 973824
      %v439 = vsel %vm438, %v423, %v425
      %v440 = vsel %vm438, %v427, %v429
      %v441 = vsel %vm438, %v431, %v433
      %v442 = vsel %vm438, %v435, %v437
      %v448 = vsel %vm275, %v421, 0
      %450 = vmatpush.bf16.msra.mxu0 0
      %451 = vmatpush.bf16.msra.mxu0 0
      %452 = vmatpush.bf16.msra.mxu0 0
      %453 = vmatpush.bf16.msra.mxu0 0
      %454 = vmatpush.bf16.msra.mxu0 %v442
      %455 = vmatpush.bf16.msra.mxu0 %v441
      %456 = vmatpush.bf16.msra.mxu0 %v440
      %457 = vmatpush.bf16.msra.mxu0 %v439
      %458 = vmatmul.bf16.gmra.mxu0 %v448
      %v459 = vpop.f32.mrf.mxu0
      %v460 = vadd.f32 0.0, %v459
      %v461 = vpop.f32.mrf.mxu0
      %462 = vdwg.mxu0
      %v463 = vadd.f32 %v419, %v460
      %s464 = scalar_lea.vmem %s1, 20
      %v465 = vld [vmem:[%s464] sm:$0xf]
      %466 = vrot.lane.b32.xlu0 %v242, 118
      %v467 = vpop.permute.xlu0 %466
      %468 = vrot.lane.b32.xlu0 %v243, 118
      %v469 = vpop.permute.xlu0 %468
      %470 = vrot.lane.b32.xlu0 %v244, 118
      %v471 = vpop.permute.xlu0 %470
      %472 = vrot.lane.b32.xlu0 %v245, 118
      %v473 = vpop.permute.xlu0 %472
      %474 = vrot.lane.b32.xlu0 %v246, 118
      %v475 = vpop.permute.xlu0 %474
      %476 = vrot.lane.b32.xlu0 %v247, 118
      %v477 = vpop.permute.xlu0 %476
      %478 = vrot.lane.b32.xlu0 %v248, 118
      %v479 = vpop.permute.xlu0 %478
      %480 = vrot.lane.b32.xlu0 %v249, 118
      %v481 = vpop.permute.xlu0 %480
      %vm482 = vcmask 965632
      %v483 = vsel %vm482, %v467, %v469
      %v484 = vsel %vm482, %v471, %v473
      %v485 = vsel %vm482, %v475, %v477
      %v486 = vsel %vm482, %v479, %v481
      %v492 = vsel %vm275, %v465, 0
      %494 = vmatpush.bf16.msra.mxu0 0
      %495 = vmatpush.bf16.msra.mxu0 0
      %496 = vmatpush.bf16.msra.mxu0 0
      %497 = vmatpush.bf16.msra.mxu0 0
      %498 = vmatpush.bf16.msra.mxu0 %v486
      %499 = vmatpush.bf16.msra.mxu0 %v485
      %500 = vmatpush.bf16.msra.mxu0 %v484
      %501 = vmatpush.bf16.msra.mxu0 %v483
      %502 = vmatmul.bf16.gmra.mxu0 %v492
      %v503 = vpop.f32.mrf.mxu0
      %v504 = vadd.f32 0.0, %v503
      %v505 = vpop.f32.mrf.mxu0
      %506 = vdwg.mxu0
      %v507 = vadd.f32 %v463, %v504
      %s508 = scalar_lea.vmem %s1, 24
      %v509 = vld [vmem:[%s508] sm:$0xf]
      %510 = vrot.lane.b32.xlu0 %v242, 116
      %v511 = vpop.permute.xlu0 %510
      %512 = vrot.lane.b32.xlu0 %v243, 116
      %v513 = vpop.permute.xlu0 %512
      %514 = vrot.lane.b32.xlu0 %v244, 116
      %v515 = vpop.permute.xlu0 %514
      %516 = vrot.lane.b32.xlu0 %v245, 116
      %v517 = vpop.permute.xlu0 %516
      %518 = vrot.lane.b32.xlu0 %v246, 116
      %v519 = vpop.permute.xlu0 %518
      %520 = vrot.lane.b32.xlu0 %v247, 116
      %v521 = vpop.permute.xlu0 %520
      %522 = vrot.lane.b32.xlu0 %v248, 116
      %v523 = vpop.permute.xlu0 %522
      %524 = vrot.lane.b32.xlu0 %v249, 116
      %v525 = vpop.permute.xlu0 %524
      %vm526 = vcmask 949248
      %v527 = vsel %vm526, %v511, %v513
      %v528 = vsel %vm526, %v515, %v517
      %v529 = vsel %vm526, %v519, %v521
      %v530 = vsel %vm526, %v523, %v525
      %v536 = vsel %vm275, %v509, 0
      %538 = vmatpush.bf16.msra.mxu0 0
      %539 = vmatpush.bf16.msra.mxu0 0
      %540 = vmatpush.bf16.msra.mxu0 0
      %541 = vmatpush.bf16.msra.mxu0 0
      %542 = vmatpush.bf16.msra.mxu0 %v530
      %543 = vmatpush.bf16.msra.mxu0 %v529
      %544 = vmatpush.bf16.msra.mxu0 %v528
      %545 = vmatpush.bf16.msra.mxu0 %v527
      %546 = vmatmul.bf16.gmra.mxu0 %v536
      %v547 = vpop.f32.mrf.mxu0
      %v548 = vadd.f32 0.0, %v547
      %v549 = vpop.f32.mrf.mxu0
      %550 = vdwg.mxu0
      %v551 = vadd.f32 %v507, %v548
      %s552 = scalar_lea.vmem %s1, 28
      %v553 = vld [vmem:[%s552] sm:$0xf]
      %554 = vrot.lane.b32.xlu0 %v242, 115
      %v555 = vpop.permute.xlu0 %554
      %556 = vrot.lane.b32.xlu0 %v243, 115
      %v557 = vpop.permute.xlu0 %556
      %558 = vrot.lane.b32.xlu0 %v244, 115
      %v559 = vpop.permute.xlu0 %558
      %560 = vrot.lane.b32.xlu0 %v245, 115
      %v561 = vpop.permute.xlu0 %560
      %562 = vrot.lane.b32.xlu0 %v246, 115
      %v563 = vpop.permute.xlu0 %562
      %564 = vrot.lane.b32.xlu0 %v247, 115
      %v565 = vpop.permute.xlu0 %564
      %566 = vrot.lane.b32.xlu0 %v248, 115
      %v567 = vpop.permute.xlu0 %566
      %568 = vrot.lane.b32.xlu0 %v249, 115
      %v569 = vpop.permute.xlu0 %568
      %vm570 = vcmask 941056
      %v571 = vsel %vm570, %v555, %v557
      %v572 = vsel %vm570, %v559, %v561
      %v573 = vsel %vm570, %v563, %v565
      %v574 = vsel %vm570, %v567, %v569
      %v580 = vsel %vm275, %v553, 0
      %582 = vmatpush.bf16.msra.mxu0 0
      %583 = vmatpush.bf16.msra.mxu0 0
      %584 = vmatpush.bf16.msra.mxu0 0
      %585 = vmatpush.bf16.msra.mxu0 0
      %586 = vmatpush.bf16.msra.mxu0 %v574
      %587 = vmatpush.bf16.msra.mxu0 %v573
      %588 = vmatpush.bf16.msra.mxu0 %v572
      %589 = vmatpush.bf16.msra.mxu0 %v571
      %590 = vmatmul.bf16.gmra.mxu0 %v580
      %v591 = vpop.f32.mrf.mxu0
      %v592 = vadd.f32 0.0, %v591
      %v593 = vpop.f32.mrf.mxu0
      %594 = vdwg.mxu0
      %v595 = vadd.f32 %v551, %v592
      %v597 = vperm.slane %v198, 0
      %v599 = vmul.f32 %v595, %v597
      %600 = vadd.xlane.f32.xlu0 %v599
      %v601 = vpop.xlane.xlu0 %600
      %v602 = vadd.f32 %v601, 0.0
      %v603 = vmul.f32 %v599, %v595
      %604 = vadd.xlane.f32.xlu0 %v603
      %v605 = vpop.xlane.xlu0 %604
      %v606 = vadd.f32 %v605, 0.0
      %607 = vst [vmem:[#allocation2] sm:$0xff] %v595
      %v608 = vmul.f32 %v602, 0.125
      %v609 = vmul.f32 %v606, 0.125
      %v610 = vmul.f32 %v608, %v608
      %v611 = vsub.f32 %v609, %v610
      %v612 = vmax.f32 %v611, 0.0
      %v613 = vadd.f32 %v612, 1e-05
      %v614 = vrsqrt.pop %v613
      %v615 = vmul.f32 %v614, %v613
      %v616 = vmul.f32 %v615, %v614
      %v617 = vmul.f32 0.5, %v616
      %v618 = vsub.f32 1.5, %v617
      %v619 = vmul.f32 %v614, %v618
      %vm620 = vweird.f32 %v613
      %vm621 = vweird.f32 %v614
      %vm622 = vmor %vm620, %vm621
      %v623 = vsel %vm622, %v614, %v619
      %s624 = sld [smem:[#allocation3]]
      %v625 = vld [vmem:[#allocation2] sm:$0xff]
      %v626 = vsub.f32 %v625, %v608
      %v627 = vmul.f32 %v626, %v623
      %vm628 = vcmp.ge.f32.partialorder %v627, 0.0
      %v629 = vstv %s624
      %v630 = vmul.f32 %v629, %v627
      %v631 = vsel %vm628, %v627, %v630
      %v632 = vpack.c.bf16 %v631, %v631
      %633 = vst [vmem:[%s196] sm:$0xf] %v632
      %p634 = scmp.lt.s32.totalorder %s16, 1
      %s635 = scalar_select %p634, %s16, 1
      %s636 = smul.addr %s635, 4
      %s637 = scalar_lea.vmem %s4, %s636
      // Predicated region
      $region37: #{autoencoder3d_forward.5} parent=35 // pred_check
        %p638 = pneg %p123
      $region38: #{autoencoder3d_forward.5} parent=35 // pred_check_branch
        %640 = sbr.rel (%p638) target = $region40
      $region39: #{autoencoder3d_forward.5} parent=35 // pred_region
        _
      $region40: #{autoencoder3d_forward.5} parent=35 // pred_fallthru
        _
    $region36: #{autoencoder3d_forward.5} parent=5 // pred_fallthru
      _
    %p641 = scmp.le.s32.totalorder 2, %s11
    // Predicated region
    $region41: #{autoencoder3d_forward.5} parent=5 // pred_check
      %p642 = pneg %p641
    $region42: #{autoencoder3d_forward.5} parent=5 // pred_check_branch
      %644 = sbr.rel (%p642) target = $region44
    $region43: #{autoencoder3d_forward.5} parent=5 // pred_region
      %s645 = ssub.s32 %s11, 2
      // Predicated region
      $region45: #{autoencoder3d_forward.5} parent=43 // pred_check
        %p646 = pneg %p129
      $region46: #{autoencoder3d_forward.5} parent=43 // pred_check_branch
        %648 = sbr.rel (%p646) target = $region48
      $region47: #{autoencoder3d_forward.5} parent=43 // pred_region
        %p649 = scmp.lt.s32.totalorder %s17, 1
        %s650 = scalar_select %p649, %s17, 1
        %s651 = smul.addr %s650, 4
        %s652 = scalar_lea.vmem %s4, %s651
      $region48: #{autoencoder3d_forward.5} parent=43 // pred_fallthru
        _
    $region44: #{autoencoder3d_forward.5} parent=5 // pred_fallthru
      _
  $region6: #{autoencoder3d_forward.5} parent=0 // loop_footer
    %s15 = sadd.s32 1, %s11
  $region7: #{autoencoder3d_forward.5} parent=0 // loop_footer_branch
    %10 = sbr.rel target = $region3
  $region8: #{autoencoder3d_forward.5} parent=0 // loop_exit
    _

// kernel: autoencoder3d_forward.6
$region0: #{autoencoder3d_forward.6}
  #allocation0 [shape = 'u32[]', space=smem, size = 0x4, offset = 0x4, fixed_abs, tag = 'smem constant byte address 0x4 - core index']
  #allocation1 [shape = 'u32[72,128]{1,0:T(1,128)}', space=vmem, size = 0x9000, scoped, tag = 'internal scratch']
  #allocation2 [shape = 'f32[4,1024]{1,0:T(4,128)}', space=vmem, size = 0x4000, scoped, tag = 'scratch operand']
  #allocation3 [shape = 'f32[1]{0:T(128)S(6)}', space=smem, size = 0x200, scoped, tag = 'scoped memory for autoencoder3d_forward.6']
  %s0 = inlined_call_operand.vmem [shape: bf16[2,8,256], index: 0, kind: input, shape index: {}]
  %s1 = inlined_call_operand.vmem [shape: bf16[8,4,64], index: 1, kind: input, shape index: {}]
  %s2 = inlined_call_operand.vmem [shape: f32[1,128], index: 2, kind: input, shape index: {}]
  %s3 = inlined_call_operand.<no memory space> [shape: f32[1], index: 3, kind: input, shape index: {}]
  %s4 = inlined_call_operand.vmem [shape: bf16[2,4,1024], index: 4, kind: output, shape index: {}]
  %s5 = sld [smem:[#allocation0]]
  $region49: #{autoencoder3d_forward.6} parent=0
    _
  %s7 = ssub.s32 1, %s5
  %s8 = scalar_select 0, %s7, %s5
  %9 = sst [smem:[#allocation3]] %s3
  loop: start=0, step=1, limit=4
  $region2: #{autoencoder3d_forward.6} parent=0 // loop_pre_header
    _
  $region3: #{autoencoder3d_forward.6} parent=0 // loop_header
    %s11 = sphi 0, %s15
    %p12 = scmp.ge.s32.totalorder %s11, 4
    %s21 = sphi 0, %s23
    %s24 = sphi 0, %s21
    %s25 = sphi 0, %s24
    %s41 = sphi 0, %s25
    %s45 = sphi 0, %s45
    %s47 = sphi 0, %s45
    %s48 = sphi 0, %s47
    %s62 = sphi 0, %s48
    %s66 = sphi 0, %s66
    %s68 = sphi 0, %s66
    %s69 = sphi 0, %s68
    %s83 = sphi 0, %s69
    %s87 = sphi 0, %s87
    %s89 = sphi 0, %s87
    %s90 = sphi 0, %s89
    %s104 = sphi 0, %s90
    %s110 = sphi 0, %s112
    %s113 = sphi 0, %s110
    %s114 = sphi 0, %s113
    %s130 = sphi 0, %s114
  $region4: #{autoencoder3d_forward.6} parent=0 // loop_header_branch
    %14 = sbr.rel (%p12) target = $region8
  $region5: #{autoencoder3d_forward.6} parent=0 // loop_body
    %s16 = ssub.s32 %s11, 1
    %s17 = ssub.s32 %s11, 2
    %s18 = sadd.s32 %s11, 1
    %s19 = ssub.s32 %s11, %s18
    %p20 = scmp.eq.s32.totalorder %s19, 0
    %s22 = sadd.s32 %s21, 1
    %s23 = scalar_select %p20, %s21, %s22
    %p26 = pneg %p20
    %p27 = scmp.eq.s32.totalorder %s11, 1
    %p28 = por %p26, %p27
    %p29 = scmp.ne.s32.totalorder %s21, %s24
    %p30 = scmp.eq.s32.totalorder %s11, 0
    %p31 = por %p29, %p30
    %p32 = scmp.ne.s32.totalorder %s21, %s24
    %p33 = scmp.eq.s32.totalorder %s16, 1
    %p34 = por %p32, %p33
    %p35 = scmp.ne.s32.totalorder %s24, %s25
    %p36 = scmp.eq.s32.totalorder %s16, 0
    %p37 = por %p35, %p36
    %p38 = scmp.ne.s32.totalorder %s24, %s25
    %p39 = scmp.eq.s32.totalorder %s17, 1
    %p40 = por %p38, %p39
    %p42 = scmp.ne.s32.totalorder %s25, %s41
    %p43 = scmp.eq.s32.totalorder %s17, 0
    %p44 = por %p42, %p43
    %s46 = sadd.s32 %s45, 1
    %p49 = scmp.eq.s32.totalorder %s11, 1
    %p50 = scmp.ne.s32.totalorder %s45, %s47
    %p51 = scmp.eq.s32.totalorder %s11, 0
    %p52 = por %p50, %p51
    %p53 = scmp.ne.s32.totalorder %s45, %s47
    %p54 = scmp.eq.s32.totalorder %s16, 1
    %p55 = por %p53, %p54
    %p56 = scmp.ne.s32.totalorder %s47, %s48
    %p57 = scmp.eq.s32.totalorder %s16, 0
    %p58 = por %p56, %p57
    %p59 = scmp.ne.s32.totalorder %s47, %s48
    %p60 = scmp.eq.s32.totalorder %s17, 1
    %p61 = por %p59, %p60
    %p63 = scmp.ne.s32.totalorder %s48, %s62
    %p64 = scmp.eq.s32.totalorder %s17, 0
    %p65 = por %p63, %p64
    %s67 = sadd.s32 %s66, 1
    %p70 = scmp.eq.s32.totalorder %s11, 1
    %p71 = scmp.ne.s32.totalorder %s66, %s68
    %p72 = scmp.eq.s32.totalorder %s11, 0
    %p73 = por %p71, %p72
    %p74 = scmp.ne.s32.totalorder %s66, %s68
    %p75 = scmp.eq.s32.totalorder %s16, 1
    %p76 = por %p74, %p75
    %p77 = scmp.ne.s32.totalorder %s68, %s69
    %p78 = scmp.eq.s32.totalorder %s16, 0
    %p79 = por %p77, %p78
    %p80 = scmp.ne.s32.totalorder %s68, %s69
    %p81 = scmp.eq.s32.totalorder %s17, 1
    %p82 = por %p80, %p81
    %p84 = scmp.ne.s32.totalorder %s69, %s83
    %p85 = scmp.eq.s32.totalorder %s17, 0
    %p86 = por %p84, %p85
    %s88 = sadd.s32 %s87, 1
    %p91 = scmp.eq.s32.totalorder %s11, 1
    %p92 = scmp.ne.s32.totalorder %s87, %s89
    %p93 = scmp.eq.s32.totalorder %s11, 0
    %p94 = por %p92, %p93
    %p95 = scmp.ne.s32.totalorder %s87, %s89
    %p96 = scmp.eq.s32.totalorder %s16, 1
    %p97 = por %p95, %p96
    %p98 = scmp.ne.s32.totalorder %s89, %s90
    %p99 = scmp.eq.s32.totalorder %s16, 0
    %p100 = por %p98, %p99
    %p101 = scmp.ne.s32.totalorder %s89, %s90
    %p102 = scmp.eq.s32.totalorder %s17, 1
    %p103 = por %p101, %p102
    %p105 = scmp.ne.s32.totalorder %s90, %s104
    %p106 = scmp.eq.s32.totalorder %s17, 0
    %p107 = por %p105, %p106
    %s108 = ssub.s32 %s11, %s18
    %p109 = scmp.eq.s32.totalorder %s108, 0
    %s111 = sadd.s32 %s110, 1
    %s112 = scalar_select %p109, %s110, %s111
    %p115 = pneg %p109
    %p116 = scmp.eq.s32.totalorder %s11, 1
    %p117 = por %p115, %p116
    %p118 = scmp.ne.s32.totalorder %s110, %s113
    %p119 = scmp.eq.s32.totalorder %s11, 0
    %p120 = por %p118, %p119
    %p121 = scmp.ne.s32.totalorder %s110, %s113
    %p122 = scmp.eq.s32.totalorder %s16, 1
    %p123 = por %p121, %p122
    %p124 = scmp.ne.s32.totalorder %s113, %s114
    %p125 = scmp.eq.s32.totalorder %s16, 0
    %p126 = por %p124, %p125
    %p127 = scmp.ne.s32.totalorder %s113, %s114
    %p128 = scmp.eq.s32.totalorder %s17, 1
    %p129 = por %p127, %p128
    %p131 = scmp.ne.s32.totalorder %s114, %s130
    %p132 = scmp.eq.s32.totalorder %s17, 0
    %p133 = por %p131, %p132
    %p134 = scmp.le.s32.totalorder 1, %s11
    %p135 = scmp.lt.s32.totalorder %s11, 3
    %p136 = pnand %p134, %p135
    %p137 = pneg %p136
    // Predicated region
    $region9: #{autoencoder3d_forward.6} parent=5 // pred_check
      _
    $region10: #{autoencoder3d_forward.6} parent=5 // pred_check_branch
      %139 = sbr.rel (%p136) target = $region12
    $region11: #{autoencoder3d_forward.6} parent=5 // pred_region
      %s140 = ssub.s32 %s11, 1
      // Predicated region
      $region13: #{autoencoder3d_forward.6} parent=11 // pred_check
        %p141 = pneg %p58
      $region14: #{autoencoder3d_forward.6} parent=11 // pred_check_branch
        %143 = sbr.rel (%p141) target = $region16
      $region15: #{autoencoder3d_forward.6} parent=11 // pred_region
        _
      $region16: #{autoencoder3d_forward.6} parent=11 // pred_fallthru
        _
      // Predicated region
      $region17: #{autoencoder3d_forward.6} parent=11 // pred_check
        %p144 = pneg %p79
      $region18: #{autoencoder3d_forward.6} parent=11 // pred_check_branch
        %146 = sbr.rel (%p144) target = $region20
      $region19: #{autoencoder3d_forward.6} parent=11 // pred_region
        _
      $region20: #{autoencoder3d_forward.6} parent=11 // pred_fallthru
        _
      // Predicated region
      $region21: #{autoencoder3d_forward.6} parent=11 // pred_check
        %p147 = pneg %p100
      $region22: #{autoencoder3d_forward.6} parent=11 // pred_check_branch
        %149 = sbr.rel (%p147) target = $region24
      $region23: #{autoencoder3d_forward.6} parent=11 // pred_region
        _
      $region24: #{autoencoder3d_forward.6} parent=11 // pred_fallthru
        _
    $region12: #{autoencoder3d_forward.6} parent=5 // pred_fallthru
      _
    %p150 = scmp.lt.s32.totalorder %s11, 2
    // Predicated region
    $region25: #{autoencoder3d_forward.6} parent=5 // pred_check
      %p151 = pneg %p150
    $region26: #{autoencoder3d_forward.6} parent=5 // pred_check_branch
      %153 = sbr.rel (%p151) target = $region28
    $region27: #{autoencoder3d_forward.6} parent=5 // pred_region
      // Predicated region
      $region29: #{autoencoder3d_forward.6} parent=27 // pred_check
        %p154 = pneg %p31
      $region30: #{autoencoder3d_forward.6} parent=27 // pred_check_branch
        %156 = sbr.rel (%p154) target = $region32
      $region31: #{autoencoder3d_forward.6} parent=27 // pred_region
        %p157 = scmp.lt.s32.totalorder %s11, 1
        %s158 = scalar_select %p157, %s11, 1
        %s159 = smul.addr %s158, 2
        %s160 = smul.addr %s159, 4
        %s161 = scalar_lea.vmem %s0, %s160
      $region32: #{autoencoder3d_forward.6} parent=27 // pred_fallthru
        _
    $region28: #{autoencoder3d_forward.6} parent=5 // pred_fallthru
      _
    %p162 = scmp.le.s32.totalorder 1, %s11
    %p163 = scmp.lt.s32.totalorder %s11, 3
    %p164 = pnand %p162, %p163
    %p165 = pneg %p164
    // Predicated region
    $region33: #{autoencoder3d_forward.6} parent=5 // pred_check
      _
    $region34: #{autoencoder3d_forward.6} parent=5 // pred_check_branch
      %167 = sbr.rel (%p164) target = $region36
    $region35: #{autoencoder3d_forward.6} parent=5 // pred_region
      %s168 = ssub.s32 %s11, 1
      %p169 = scmp.lt.s32.totalorder %s16, 1
      %s170 = scalar_select %p169, %s16, 1
      %s171 = smul.addr %s170, 2
      %s172 = smul.addr %s171, 4
      %s173 = scalar_lea.vmem %s0, %s172
      %p174 = pneg %p37
      %p175 = pneg %p34
      %p176 = pneg %p58
      %p177 = pneg %p55
      %p178 = pneg %p79
      %p179 = pneg %p76
      %p180 = pneg %p100
      %p181 = pneg %p97
      %p182 = pneg %p126
      %p183 = pneg %p123
      %p184 = scmp.lt.s32.totalorder %s16, 1
      %s185 = scalar_select %p184, %s16, 1
      %s186 = smul.addr %s185, 8
      %s187 = smul.addr %s186, 2
      %s188 = scalar_lea.vmem %s4, %s187
      %p189 = scmp.lt.s32.totalorder %s16, 1
      %s190 = scalar_select %p189, %s16, 1
      %s191 = smul.addr %s190, 2
      %s192 = smul.addr %s191, 4
      %s193 = scalar_lea.vmem %s0, %s192
      %p194 = scmp.lt.s32.totalorder %s16, 1
      %s195 = scalar_select %p194, %s16, 1
      %s196 = smul.addr %s195, 8
      %s197 = smul.addr %s196, 2
      %s198 = scalar_lea.vmem %s4, %s197
      %v200 = vld [vmem:[%s2] sm:$0x1]
      %v201 = vld [vmem:[%s193] sm:$0xff]
      %v202 = vunpack.c.l.bf16 %v201
      %v203 = vunpack.c.h.bf16 %v201
      %206 = vrot.lane.b32.xlu0 %v202, 127
      %v207 = vpop.permute.xlu0 %206
      %208 = vrot.lane.b32.xlu0 %v203, 127
      %v209 = vpop.permute.xlu0 %208
      %vm210 = vcmask 1039360
      %v211 = vsel %vm210, %v207, %v209
      %214 = vrot.lane.b32.xlu0 %v202, 124
      %v215 = vpop.permute.xlu0 %214
      %216 = vrot.lane.b32.xlu0 %v203, 124
      %v217 = vpop.permute.xlu0 %216
      %vm218 = vcmask 1014784
      %v219 = vsel %vm218, %v215, %v217
      %222 = vrot.lane.b32.xlu0 %v202, 123
      %v223 = vpop.permute.xlu0 %222
      %224 = vrot.lane.b32.xlu0 %v203, 123
      %v225 = vpop.permute.xlu0 %224
      %vm226 = vcmask 1006592
      %v227 = vsel %vm226, %v223, %v225
      %230 = vrot.lane.b32.xlu0 %v202, 112
      %v231 = vpop.permute.xlu0 %230
      %232 = vrot.lane.b32.xlu0 %v203, 112
      %v233 = vpop.permute.xlu0 %232
      %vm234 = vcmask 916480
      %v235 = vsel %vm234, %v231, %v233
      %238 = vrot.lane.b32.xlu0 %v202, 111
      %v239 = vpop.permute.xlu0 %238
      %240 = vrot.lane.b32.xlu0 %v203, 111
      %v241 = vpop.permute.xlu0 %240
      %vm242 = vcmask 908288
      %v243 = vsel %vm242, %v239, %v241
      %246 = vrot.lane.b32.xlu0 %v202, 108
      %v247 = vpop.permute.xlu0 %246
      %248 = vrot.lane.b32.xlu0 %v203, 108
      %v249 = vpop.permute.xlu0 %248
      %vm250 = vcmask 883712
      %v251 = vsel %vm250, %v247, %v249
      %254 = vrot.lane.b32.xlu0 %v202, 107
      %v255 = vpop.permute.xlu0 %254
      %256 = vrot.lane.b32.xlu0 %v203, 107
      %v257 = vpop.permute.xlu0 %256
      %vm258 = vcmask 875520
      %v259 = vsel %vm258, %v255, %v257
      %v262 = vpack.c.bf16 %v211, %v202
      %v263 = vpack.c.bf16 %v209, %v203
      %v264 = vpack.c.bf16 %v227, %v219
      %v265 = vpack.c.bf16 %v225, %v217
      %v266 = vpack.c.bf16 %v243, %v235
      %v267 = vpack.c.bf16 %v241, %v233
      %v268 = vpack.c.bf16 %v259, %v251
      %v269 = vpack.c.bf16 %v257, %v249
      %v270 = vld [vmem:[%s1] sm:$0x3]
      %279 = vrot.lane.b32.xlu0 %v262, 107
      %v280 = vpop.permute.xlu0 %279
      %281 = vrot.lane.b32.xlu0 %v263, 107
      %v282 = vpop.permute.xlu0 %281
      %283 = vrot.lane.b32.xlu0 %v264, 107
      %v284 = vpop.permute.xlu0 %283
      %285 = vrot.lane.b32.xlu0 %v265, 107
      %v286 = vpop.permute.xlu0 %285
      %287 = vrot.lane.b32.xlu0 %v266, 107
      %v288 = vpop.permute.xlu0 %287
      %289 = vrot.lane.b32.xlu0 %v267, 107
      %v290 = vpop.permute.xlu0 %289
      %291 = vrot.lane.b32.xlu0 %v268, 107
      %v292 = vpop.permute.xlu0 %291
      %293 = vrot.lane.b32.xlu0 %v269, 107
      %v294 = vpop.permute.xlu0 %293
      %vm295 = vcmask 875520
      %v296 = vsel %vm295, %v280, %v282
      %v297 = vsel %vm295, %v284, %v286
      %v298 = vsel %vm295, %v288, %v290
      %v299 = vsel %vm295, %v292, %v294
      %vm304 = vcmask 523264
      %v306 = vsel %vm304, %v270, 0
      %308 = vmatpush.bf16.msra.mxu0 0
      %309 = vmatpush.bf16.msra.mxu0 0
      %310 = vmatpush.bf16.msra.mxu0 0
      %311 = vmatpush.bf16.msra.mxu0 0
      %312 = vmatpush.bf16.msra.mxu0 %v299
      %313 = vmatpush.bf16.msra.mxu0 %v298
      %314 = vmatpush.bf16.msra.mxu0 %v297
      %315 = vmatpush.bf16.msra.mxu0 %v296
      %316 = vmatmul.bf16.gmra.mxu0 %v306
      %v317 = vpop.f32.mrf.mxu0
      %v318 = vadd.f32 0.0, %v317
      %v319 = vpop.f32.mrf.mxu0
      %320 = vdwg.mxu0
      %v322 = vperm.slane %v200, 0
      %v324 = vmul.f32 %v318, %v322
      %vm325 = vcmask 1043456
      %v326 = vsel %vm325, %v324, 0.0
      %327 = vadd.xlane.f32.xlu0 %v326
      %v328 = vpop.xlane.xlu0 %327
      %v329 = vadd.f32 %v328, 0.0
      %v330 = vmul.f32 %v324, %v318
      %v331 = vsel %vm325, %v330, 0.0
      %332 = vadd.xlane.f32.xlu0 %v331
      %v333 = vpop.xlane.xlu0 %332
      %v334 = vadd.f32 %v333, 0.0
      %335 = vst [vmem:[#allocation2] sm:$0xf] %v318
      %s336 = scalar_lea.vmem %s1, 2
      %v337 = vld [vmem:[%s336] sm:$0x3]
      %v339 = vsel %vm304, %v337, 0
      %341 = vmatpush.bf16.msra.mxu0 0
      %342 = vmatpush.bf16.msra.mxu0 0
      %343 = vmatpush.bf16.msra.mxu0 0
      %344 = vmatpush.bf16.msra.mxu0 0
      %345 = vmatpush.bf16.msra.mxu0 %v299
      %346 = vmatpush.bf16.msra.mxu0 %v298
      %347 = vmatpush.bf16.msra.mxu0 %v297
      %348 = vmatpush.bf16.msra.mxu0 %v296
      %349 = vmatmul.bf16.gmra.mxu0 %v339
      %v350 = vpop.f32.mrf.mxu0
      %v351 = vadd.f32 0.0, %v350
      %v352 = vpop.f32.mrf.mxu0
      %353 = vdwg.mxu0
      %v354 = vmul.f32 %v351, %v322
      %v355 = vsel %vm325, %v354, 0.0
      %356 = vadd.xlane.f32.xlu0 %v355
      %v357 = vpop.xlane.xlu0 %356
      %v358 = vadd.f32 %v329, %v357
      %v359 = vmul.f32 %v354, %v351
      %v360 = vsel %vm325, %v359, 0.0
      %361 = vadd.xlane.f32.xlu0 %v360
      %v362 = vpop.xlane.xlu0 %361
      %v363 = vadd.f32 %v334, %v362
      %364 = vst [vmem:[#allocation2 + $0x4] sm:$0xf] %v351
      %s365 = scalar_lea.vmem %s1, 4
      %v366 = vld [vmem:[%s365] sm:$0x3]
      %v368 = vsel %vm304, %v366, 0
      %370 = vmatpush.bf16.msra.mxu0 0
      %371 = vmatpush.bf16.msra.mxu0 0
      %372 = vmatpush.bf16.msra.mxu0 0
      %373 = vmatpush.bf16.msra.mxu0 0
      %374 = vmatpush.bf16.msra.mxu0 %v299
      %375 = vmatpush.bf16.msra.mxu0 %v298
      %376 = vmatpush.bf16.msra.mxu0 %v297
      %377 = vmatpush.bf16.msra.mxu0 %v296
      %378 = vmatmul.bf16.gmra.mxu0 %v368
      %v379 = vpop.f32.mrf.mxu0
      %v380 = vadd.f32 0.0, %v379
      %v381 = vpop.f32.mrf.mxu0
      %382 = vdwg.mxu0
      %v383 = vmul.f32 %v380, %v322
      %v384 = vsel %vm325, %v383, 0.0
      %385 = vadd.xlane.f32.xlu0 %v384
      %v386 = vpop.xlane.xlu0 %385
      %v387 = vadd.f32 %v358, %v386
      %v388 = vmul.f32 %v383, %v380
      %v389 = vsel %vm325, %v388, 0.0
      %390 = vadd.xlane.f32.xlu0 %v389
      %v391 = vpop.xlane.xlu0 %390
      %v392 = vadd.f32 %v363, %v391
      %393 = vst [vmem:[#allocation2 + $0x8] sm:$0xf] %v380
      %s394 = scalar_lea.vmem %s1, 6
      %v395 = vld [vmem:[%s394] sm:$0x3]
      %v397 = vsel %vm304, %v395, 0
      %399 = vmatpush.bf16.msra.mxu0 0
      %400 = vmatpush.bf16.msra.mxu0 0
      %401 = vmatpush.bf16.msra.mxu0 0
      %402 = vmatpush.bf16.msra.mxu0 0
      %403 = vmatpush.bf16.msra.mxu0 %v299
      %404 = vmatpush.bf16.msra.mxu0 %v298
      %405 = vmatpush.bf16.msra.mxu0 %v297
      %406 = vmatpush.bf16.msra.mxu0 %v296
      %407 = vmatmul.bf16.gmra.mxu0 %v397
      %v408 = vpop.f32.mrf.mxu0
      %v409 = vadd.f32 0.0, %v408
      %v410 = vpop.f32.mrf.mxu0
      %411 = vdwg.mxu0
      %v412 = vmul.f32 %v409, %v322
      %v413 = vsel %vm325, %v412, 0.0
      %414 = vadd.xlane.f32.xlu0 %v413
      %v415 = vpop.xlane.xlu0 %414
      %v416 = vadd.f32 %v387, %v415
      %v417 = vmul.f32 %v412, %v409
      %v418 = vsel %vm325, %v417, 0.0
      %419 = vadd.xlane.f32.xlu0 %v418
      %v420 = vpop.xlane.xlu0 %419
      %v421 = vadd.f32 %v392, %v420
      %422 = vst [vmem:[#allocation2 + $0xc] sm:$0xf] %v409
      %s423 = scalar_lea.vmem %s1, 8
      %v424 = vld [vmem:[%s423] sm:$0x3]
      %v426 = vsel %vm304, %v424, 0
      %428 = vmatpush.bf16.msra.mxu0 0
      %429 = vmatpush.bf16.msra.mxu0 0
      %430 = vmatpush.bf16.msra.mxu0 0
      %431 = vmatpush.bf16.msra.mxu0 0
      %432 = vmatpush.bf16.msra.mxu0 %v299
      %433 = vmatpush.bf16.msra.mxu0 %v298
      %434 = vmatpush.bf16.msra.mxu0 %v297
      %435 = vmatpush.bf16.msra.mxu0 %v296
      %436 = vmatmul.bf16.gmra.mxu0 %v426
      %v437 = vpop.f32.mrf.mxu0
      %v438 = vadd.f32 0.0, %v437
      %v439 = vpop.f32.mrf.mxu0
      %440 = vdwg.mxu0
      %v441 = vmul.f32 %v438, %v322
      %v442 = vsel %vm325, %v441, 0.0
      %443 = vadd.xlane.f32.xlu0 %v442
      %v444 = vpop.xlane.xlu0 %443
      %v445 = vadd.f32 %v416, %v444
      %v446 = vmul.f32 %v441, %v438
      %v447 = vsel %vm325, %v446, 0.0
      %448 = vadd.xlane.f32.xlu0 %v447
      %v449 = vpop.xlane.xlu0 %448
      %v450 = vadd.f32 %v421, %v449
      %451 = vst [vmem:[#allocation2 + $0x10] sm:$0xf] %v438
      %s452 = scalar_lea.vmem %s1, 10
      %v453 = vld [vmem:[%s452] sm:$0x3]
      %v455 = vsel %vm304, %v453, 0
      %457 = vmatpush.bf16.msra.mxu0 0
      %458 = vmatpush.bf16.msra.mxu0 0
      %459 = vmatpush.bf16.msra.mxu0 0
      %460 = vmatpush.bf16.msra.mxu0 0
      %461 = vmatpush.bf16.msra.mxu0 %v299
      %462 = vmatpush.bf16.msra.mxu0 %v298
      %463 = vmatpush.bf16.msra.mxu0 %v297
      %464 = vmatpush.bf16.msra.mxu0 %v296
      %465 = vmatmul.bf16.gmra.mxu0 %v455
      %v466 = vpop.f32.mrf.mxu0
      %v467 = vadd.f32 0.0, %v466
      %v468 = vpop.f32.mrf.mxu0
      %469 = vdwg.mxu0
      %v470 = vmul.f32 %v467, %v322
      %v471 = vsel %vm325, %v470, 0.0
      %472 = vadd.xlane.f32.xlu0 %v471
      %v473 = vpop.xlane.xlu0 %472
      %v474 = vadd.f32 %v445, %v473
      %v475 = vmul.f32 %v470, %v467
      %v476 = vsel %vm325, %v475, 0.0
      %477 = vadd.xlane.f32.xlu0 %v476
      %v478 = vpop.xlane.xlu0 %477
      %v479 = vadd.f32 %v450, %v478
      %480 = vst [vmem:[#allocation2 + $0x14] sm:$0xf] %v467
      %s481 = scalar_lea.vmem %s1, 12
      %v482 = vld [vmem:[%s481] sm:$0x3]
      %v484 = vsel %vm304, %v482, 0
      %486 = vmatpush.bf16.msra.mxu0 0
      %487 = vmatpush.bf16.msra.mxu0 0
      %488 = vmatpush.bf16.msra.mxu0 0
      %489 = vmatpush.bf16.msra.mxu0 0
      %490 = vmatpush.bf16.msra.mxu0 %v299
      %491 = vmatpush.bf16.msra.mxu0 %v298
      %492 = vmatpush.bf16.msra.mxu0 %v297
      %493 = vmatpush.bf16.msra.mxu0 %v296
      %494 = vmatmul.bf16.gmra.mxu0 %v484
      %v495 = vpop.f32.mrf.mxu0
      %v496 = vadd.f32 0.0, %v495
      %v497 = vpop.f32.mrf.mxu0
      %498 = vdwg.mxu0
      %v499 = vmul.f32 %v496, %v322
      %v500 = vsel %vm325, %v499, 0.0
      %501 = vadd.xlane.f32.xlu0 %v500
      %v502 = vpop.xlane.xlu0 %501
      %v503 = vadd.f32 %v474, %v502
      %v504 = vmul.f32 %v499, %v496
      %v505 = vsel %vm325, %v504, 0.0
      %506 = vadd.xlane.f32.xlu0 %v505
      %v507 = vpop.xlane.xlu0 %506
      %v508 = vadd.f32 %v479, %v507
      %509 = vst [vmem:[#allocation2 + $0x18] sm:$0xf] %v496
      %s510 = scalar_lea.vmem %s1, 14
      %v511 = vld [vmem:[%s510] sm:$0x3]
      %v513 = vsel %vm304, %v511, 0
      %515 = vmatpush.bf16.msra.mxu0 0
      %516 = vmatpush.bf16.msra.mxu0 0
      %517 = vmatpush.bf16.msra.mxu0 0
      %518 = vmatpush.bf16.msra.mxu0 0
      %519 = vmatpush.bf16.msra.mxu0 %v299
      %520 = vmatpush.bf16.msra.mxu0 %v298
      %521 = vmatpush.bf16.msra.mxu0 %v297
      %522 = vmatpush.bf16.msra.mxu0 %v296
      %523 = vmatmul.bf16.gmra.mxu0 %v513
      %v524 = vpop.f32.mrf.mxu0
      %v525 = vadd.f32 0.0, %v524
      %v526 = vpop.f32.mrf.mxu0
      %527 = vdwg.mxu0
      %v528 = vmul.f32 %v525, %v322
      %v529 = vsel %vm325, %v528, 0.0
      %530 = vadd.xlane.f32.xlu0 %v529
      %v531 = vpop.xlane.xlu0 %530
      %v532 = vadd.f32 %v503, %v531
      %v533 = vmul.f32 %v528, %v525
      %v534 = vsel %vm325, %v533, 0.0
      %535 = vadd.xlane.f32.xlu0 %v534
      %v536 = vpop.xlane.xlu0 %535
      %v537 = vadd.f32 %v508, %v536
      %538 = vst [vmem:[#allocation2 + $0x1c] sm:$0xf] %v525
      %v539 = vmul.f32 %v532, 0.015625
      %v540 = vmul.f32 %v537, 0.015625
      %v541 = vmul.f32 %v539, %v539
      %v542 = vsub.f32 %v540, %v541
      %v543 = vmax.f32 %v542, 0.0
      %v544 = vadd.f32 %v543, 1e-05
      %v545 = vrsqrt.pop %v544
      %v546 = vmul.f32 %v545, %v544
      %v547 = vmul.f32 %v546, %v545
      %v548 = vmul.f32 0.5, %v547
      %v549 = vsub.f32 1.5, %v548
      %v550 = vmul.f32 %v545, %v549
      %vm551 = vweird.f32 %v544
      %vm552 = vweird.f32 %v545
      %vm553 = vmor %vm551, %vm552
      %v554 = vsel %vm553, %v545, %v550
      %s555 = sld [smem:[#allocation3]]
      %v556 = vld [vmem:[#allocation2] sm:$0xf]
      %v557 = vsub.f32 %v556, %v539
      %v558 = vmul.f32 %v557, %v554
      %vm559 = vcmp.ge.f32.partialorder %v558, 0.0
      %v560 = vstv %s555
      %v561 = vmul.f32 %v560, %v558
      %v562 = vsel %vm559, %v558, %v561
      %v563 = vpack.c.bf16 %v562, %v562
      %564 = vst [vmem:[%s198] sm:$0x3] %v563
      %v565 = vld [vmem:[#allocation2 + $0x4] sm:$0xf]
      %v566 = vsub.f32 %v565, %v539
      %v567 = vmul.f32 %v566, %v554
      %vm568 = vcmp.ge.f32.partialorder %v567, 0.0
      %v569 = vmul.f32 %v560, %v567
      %v570 = vsel %vm568, %v567, %v569
      %v571 = vpack.c.bf16 %v570, %v570
      %572 = vst [vmem:[%s198 + $0x2] sm:$0x3] %v571
      %v573 = vld [vmem:[#allocation2 + $0x8] sm:$0xf]
      %v574 = vsub.f32 %v573, %v539
      %v575 = vmul.f32 %v574, %v554
      %vm576 = vcmp.ge.f32.partialorder %v575, 0.0
      %v577 = vmul.f32 %v560, %v575
      %v578 = vsel %vm576, %v575, %v577
      %v579 = vpack.c.bf16 %v578, %v578
      %580 = vst [vmem:[%s198 + $0x4] sm:$0x3] %v579
      %v581 = vld [vmem:[#allocation2 + $0xc] sm:$0xf]
      %v582 = vsub.f32 %v581, %v539
      %v583 = vmul.f32 %v582, %v554
      %vm584 = vcmp.ge.f32.partialorder %v583, 0.0
      %v585 = vmul.f32 %v560, %v583
      %v586 = vsel %vm584, %v583, %v585
      %v587 = vpack.c.bf16 %v586, %v586
      %588 = vst [vmem:[%s198 + $0x6] sm:$0x3] %v587
      %v589 = vld [vmem:[#allocation2 + $0x10] sm:$0xf]
      %v590 = vsub.f32 %v589, %v539
      %v591 = vmul.f32 %v590, %v554
      %vm592 = vcmp.ge.f32.partialorder %v591, 0.0
      %v593 = vmul.f32 %v560, %v591
      %v594 = vsel %vm592, %v591, %v593
      %v595 = vpack.c.bf16 %v594, %v594
      %596 = vst [vmem:[%s198 + $0x8] sm:$0x3] %v595
      %v597 = vld [vmem:[#allocation2 + $0x14] sm:$0xf]
      %v598 = vsub.f32 %v597, %v539
      %v599 = vmul.f32 %v598, %v554
      %vm600 = vcmp.ge.f32.partialorder %v599, 0.0
      %v601 = vmul.f32 %v560, %v599
      %v602 = vsel %vm600, %v599, %v601
      %v603 = vpack.c.bf16 %v602, %v602
      %604 = vst [vmem:[%s198 + $0xa] sm:$0x3] %v603
      %v605 = vld [vmem:[#allocation2 + $0x18] sm:$0xf]
      %v606 = vsub.f32 %v605, %v539
      %v607 = vmul.f32 %v606, %v554
      %vm608 = vcmp.ge.f32.partialorder %v607, 0.0
      %v609 = vmul.f32 %v560, %v607
      %v610 = vsel %vm608, %v607, %v609
      %v611 = vpack.c.bf16 %v610, %v610
      %612 = vst [vmem:[%s198 + $0xc] sm:$0x3] %v611
      %v613 = vld [vmem:[#allocation2 + $0x1c] sm:$0xf]
      %v614 = vsub.f32 %v613, %v539
      %v615 = vmul.f32 %v614, %v554
      %vm616 = vcmp.ge.f32.partialorder %v615, 0.0
      %v617 = vmul.f32 %v560, %v615
      %v618 = vsel %vm616, %v615, %v617
      %v619 = vpack.c.bf16 %v618, %v618
      %620 = vst [vmem:[%s198 + $0xe] sm:$0x3] %v619
      %p621 = scmp.lt.s32.totalorder %s16, 1
      %s622 = scalar_select %p621, %s16, 1
      %s623 = smul.addr %s622, 8
      %s624 = smul.addr %s623, 2
      %s625 = scalar_lea.vmem %s4, %s624
      // Predicated region
      $region37: #{autoencoder3d_forward.6} parent=35 // pred_check
        %p626 = pneg %p123
      $region38: #{autoencoder3d_forward.6} parent=35 // pred_check_branch
        %628 = sbr.rel (%p626) target = $region40
      $region39: #{autoencoder3d_forward.6} parent=35 // pred_region
        _
      $region40: #{autoencoder3d_forward.6} parent=35 // pred_fallthru
        _
    $region36: #{autoencoder3d_forward.6} parent=5 // pred_fallthru
      _
    %p629 = scmp.le.s32.totalorder 2, %s11
    // Predicated region
    $region41: #{autoencoder3d_forward.6} parent=5 // pred_check
      %p630 = pneg %p629
    $region42: #{autoencoder3d_forward.6} parent=5 // pred_check_branch
      %632 = sbr.rel (%p630) target = $region44
    $region43: #{autoencoder3d_forward.6} parent=5 // pred_region
      %s633 = ssub.s32 %s11, 2
      // Predicated region
      $region45: #{autoencoder3d_forward.6} parent=43 // pred_check
        %p634 = pneg %p129
      $region46: #{autoencoder3d_forward.6} parent=43 // pred_check_branch
        %636 = sbr.rel (%p634) target = $region48
      $region47: #{autoencoder3d_forward.6} parent=43 // pred_region
        %p637 = scmp.lt.s32.totalorder %s17, 1
        %s638 = scalar_select %p637, %s17, 1
        %s639 = smul.addr %s638, 8
        %s640 = smul.addr %s639, 2
        %s641 = scalar_lea.vmem %s4, %s640
      $region48: #{autoencoder3d_forward.6} parent=43 // pred_fallthru
        _
    $region44: #{autoencoder3d_forward.6} parent=5 // pred_fallthru
      _
  $region6: #{autoencoder3d_forward.6} parent=0 // loop_footer
    %s15 = sadd.s32 1, %s11
  $region7: #{autoencoder3d_forward.6} parent=0 // loop_footer_branch
    %10 = sbr.rel target = $region3
  $region8: #{autoencoder3d_forward.6} parent=0 // loop_exit
    _

// kernel: autoencoder3d_forward.7
$region0: #{autoencoder3d_forward.7}
  #allocation0 [shape = 'u32[]', space=smem, size = 0x4, offset = 0x4, fixed_abs, tag = 'smem constant byte address 0x4 - core index']
  #allocation1 [shape = 'u32[72,128]{1,0:T(1,128)}', space=vmem, size = 0x9000, scoped, tag = 'internal scratch']
  %s0 = inlined_call_operand.vmem [shape: bf16[2,8,384], index: 0, kind: input, shape index: {}]
  %s1 = inlined_call_operand.vmem [shape: bf16[8,2,64], index: 1, kind: input, shape index: {}]
  %s2 = inlined_call_operand.vmem [shape: f32[2,1], index: 2, kind: input, shape index: {}]
  %s3 = inlined_call_operand.vmem [shape: f32[2,2,2048], index: 3, kind: output, shape index: {}]
  %s4 = sld [smem:[#allocation0]]
  $region45: #{autoencoder3d_forward.7} parent=0
    _
  %s6 = ssub.s32 1, %s4
  %s7 = scalar_select 0, %s6, %s4
  loop: start=0, step=1, limit=4
  $region2: #{autoencoder3d_forward.7} parent=0 // loop_pre_header
    _
  $region3: #{autoencoder3d_forward.7} parent=0 // loop_header
    %s9 = sphi 0, %s13
    %p10 = scmp.ge.s32.totalorder %s9, 4
    %s19 = sphi 0, %s21
    %s22 = sphi 0, %s19
    %s23 = sphi 0, %s22
    %s39 = sphi 0, %s23
    %s43 = sphi 0, %s43
    %s45 = sphi 0, %s43
    %s46 = sphi 0, %s45
    %s60 = sphi 0, %s46
    %s64 = sphi 0, %s64
    %s66 = sphi 0, %s64
    %s67 = sphi 0, %s66
    %s81 = sphi 0, %s67
    %s87 = sphi 0, %s89
    %s90 = sphi 0, %s87
    %s91 = sphi 0, %s90
    %s107 = sphi 0, %s91
  $region4: #{autoencoder3d_forward.7} parent=0 // loop_header_branch
    %12 = sbr.rel (%p10) target = $region8
  $region5: #{autoencoder3d_forward.7} parent=0 // loop_body
    %s14 = ssub.s32 %s9, 1
    %s15 = ssub.s32 %s9, 2
    %s16 = sadd.s32 %s9, 1
    %s17 = ssub.s32 %s9, %s16
    %p18 = scmp.eq.s32.totalorder %s17, 0
    %s20 = sadd.s32 %s19, 1
    %s21 = scalar_select %p18, %s19, %s20
    %p24 = pneg %p18
    %p25 = scmp.eq.s32.totalorder %s9, 1
    %p26 = por %p24, %p25
    %p27 = scmp.ne.s32.totalorder %s19, %s22
    %p28 = scmp.eq.s32.totalorder %s9, 0
    %p29 = por %p27, %p28
    %p30 = scmp.ne.s32.totalorder %s19, %s22
    %p31 = scmp.eq.s32.totalorder %s14, 1
    %p32 = por %p30, %p31
    %p33 = scmp.ne.s32.totalorder %s22, %s23
    %p34 = scmp.eq.s32.totalorder %s14, 0
    %p35 = por %p33, %p34
    %p36 = scmp.ne.s32.totalorder %s22, %s23
    %p37 = scmp.eq.s32.totalorder %s15, 1
    %p38 = por %p36, %p37
    %p40 = scmp.ne.s32.totalorder %s23, %s39
    %p41 = scmp.eq.s32.totalorder %s15, 0
    %p42 = por %p40, %p41
    %s44 = sadd.s32 %s43, 1
    %p47 = scmp.eq.s32.totalorder %s9, 1
    %p48 = scmp.ne.s32.totalorder %s43, %s45
    %p49 = scmp.eq.s32.totalorder %s9, 0
    %p50 = por %p48, %p49
    %p51 = scmp.ne.s32.totalorder %s43, %s45
    %p52 = scmp.eq.s32.totalorder %s14, 1
    %p53 = por %p51, %p52
    %p54 = scmp.ne.s32.totalorder %s45, %s46
    %p55 = scmp.eq.s32.totalorder %s14, 0
    %p56 = por %p54, %p55
    %p57 = scmp.ne.s32.totalorder %s45, %s46
    %p58 = scmp.eq.s32.totalorder %s15, 1
    %p59 = por %p57, %p58
    %p61 = scmp.ne.s32.totalorder %s46, %s60
    %p62 = scmp.eq.s32.totalorder %s15, 0
    %p63 = por %p61, %p62
    %s65 = sadd.s32 %s64, 1
    %p68 = scmp.eq.s32.totalorder %s9, 1
    %p69 = scmp.ne.s32.totalorder %s64, %s66
    %p70 = scmp.eq.s32.totalorder %s9, 0
    %p71 = por %p69, %p70
    %p72 = scmp.ne.s32.totalorder %s64, %s66
    %p73 = scmp.eq.s32.totalorder %s14, 1
    %p74 = por %p72, %p73
    %p75 = scmp.ne.s32.totalorder %s66, %s67
    %p76 = scmp.eq.s32.totalorder %s14, 0
    %p77 = por %p75, %p76
    %p78 = scmp.ne.s32.totalorder %s66, %s67
    %p79 = scmp.eq.s32.totalorder %s15, 1
    %p80 = por %p78, %p79
    %p82 = scmp.ne.s32.totalorder %s67, %s81
    %p83 = scmp.eq.s32.totalorder %s15, 0
    %p84 = por %p82, %p83
    %s85 = ssub.s32 %s9, %s16
    %p86 = scmp.eq.s32.totalorder %s85, 0
    %s88 = sadd.s32 %s87, 1
    %s89 = scalar_select %p86, %s87, %s88
    %p92 = pneg %p86
    %p93 = scmp.eq.s32.totalorder %s9, 1
    %p94 = por %p92, %p93
    %p95 = scmp.ne.s32.totalorder %s87, %s90
    %p96 = scmp.eq.s32.totalorder %s9, 0
    %p97 = por %p95, %p96
    %p98 = scmp.ne.s32.totalorder %s87, %s90
    %p99 = scmp.eq.s32.totalorder %s14, 1
    %p100 = por %p98, %p99
    %p101 = scmp.ne.s32.totalorder %s90, %s91
    %p102 = scmp.eq.s32.totalorder %s14, 0
    %p103 = por %p101, %p102
    %p104 = scmp.ne.s32.totalorder %s90, %s91
    %p105 = scmp.eq.s32.totalorder %s15, 1
    %p106 = por %p104, %p105
    %p108 = scmp.ne.s32.totalorder %s91, %s107
    %p109 = scmp.eq.s32.totalorder %s15, 0
    %p110 = por %p108, %p109
    %p111 = scmp.le.s32.totalorder 1, %s9
    %p112 = scmp.lt.s32.totalorder %s9, 3
    %p113 = pnand %p111, %p112
    %p114 = pneg %p113
    // Predicated region
    $region9: #{autoencoder3d_forward.7} parent=5 // pred_check
      _
    $region10: #{autoencoder3d_forward.7} parent=5 // pred_check_branch
      %116 = sbr.rel (%p113) target = $region12
    $region11: #{autoencoder3d_forward.7} parent=5 // pred_region
      %s117 = ssub.s32 %s9, 1
      // Predicated region
      $region13: #{autoencoder3d_forward.7} parent=11 // pred_check
        %p118 = pneg %p56
      $region14: #{autoencoder3d_forward.7} parent=11 // pred_check_branch
        %120 = sbr.rel (%p118) target = $region16
      $region15: #{autoencoder3d_forward.7} parent=11 // pred_region
        _
      $region16: #{autoencoder3d_forward.7} parent=11 // pred_fallthru
        _
      // Predicated region
      $region17: #{autoencoder3d_forward.7} parent=11 // pred_check
        %p121 = pneg %p77
      $region18: #{autoencoder3d_forward.7} parent=11 // pred_check_branch
        %123 = sbr.rel (%p121) target = $region20
      $region19: #{autoencoder3d_forward.7} parent=11 // pred_region
        _
      $region20: #{autoencoder3d_forward.7} parent=11 // pred_fallthru
        _
    $region12: #{autoencoder3d_forward.7} parent=5 // pred_fallthru
      _
    %p124 = scmp.lt.s32.totalorder %s9, 2
    // Predicated region
    $region21: #{autoencoder3d_forward.7} parent=5 // pred_check
      %p125 = pneg %p124
    $region22: #{autoencoder3d_forward.7} parent=5 // pred_check_branch
      %127 = sbr.rel (%p125) target = $region24
    $region23: #{autoencoder3d_forward.7} parent=5 // pred_region
      // Predicated region
      $region25: #{autoencoder3d_forward.7} parent=23 // pred_check
        %p128 = pneg %p29
      $region26: #{autoencoder3d_forward.7} parent=23 // pred_check_branch
        %130 = sbr.rel (%p128) target = $region28
      $region27: #{autoencoder3d_forward.7} parent=23 // pred_region
        %p131 = scmp.lt.s32.totalorder %s9, 1
        %s132 = scalar_select %p131, %s9, 1
        %s133 = smul.addr %s132, 3
        %s134 = smul.addr %s133, 4
        %s135 = scalar_lea.vmem %s0, %s134
      $region28: #{autoencoder3d_forward.7} parent=23 // pred_fallthru
        _
    $region24: #{autoencoder3d_forward.7} parent=5 // pred_fallthru
      _
    %p136 = scmp.le.s32.totalorder 1, %s9
    %p137 = scmp.lt.s32.totalorder %s9, 3
    %p138 = pnand %p136, %p137
    %p139 = pneg %p138
    // Predicated region
    $region29: #{autoencoder3d_forward.7} parent=5 // pred_check
      _
    $region30: #{autoencoder3d_forward.7} parent=5 // pred_check_branch
      %141 = sbr.rel (%p138) target = $region32
    $region31: #{autoencoder3d_forward.7} parent=5 // pred_region
      %s142 = ssub.s32 %s9, 1
      %p143 = scmp.lt.s32.totalorder %s14, 1
      %s144 = scalar_select %p143, %s14, 1
      %s145 = smul.addr %s144, 3
      %s146 = smul.addr %s145, 4
      %s147 = scalar_lea.vmem %s0, %s146
      %p148 = pneg %p35
      %p149 = pneg %p32
      %p150 = pneg %p56
      %p151 = pneg %p53
      %p152 = pneg %p77
      %p153 = pneg %p74
      %p154 = pneg %p103
      %p155 = pneg %p100
      %p156 = scmp.lt.s32.totalorder %s14, 1
      %s157 = scalar_select %p156, %s14, 1
      %s158 = smul.addr %s157, 16
      %s159 = smul.addr %s158, 2
      %s160 = scalar_lea.vmem %s3, %s159
      %p161 = scmp.lt.s32.totalorder %s14, 1
      %s162 = scalar_select %p161, %s14, 1
      %s163 = smul.addr %s162, 3
      %s164 = smul.addr %s163, 4
      %s165 = scalar_lea.vmem %s0, %s164
      %p166 = scmp.lt.s32.totalorder %s14, 1
      %s167 = scalar_select %p166, %s14, 1
      %s168 = smul.addr %s167, 16
      %s169 = smul.addr %s168, 2
      %s170 = scalar_lea.vmem %s3, %s169
      %v172 = vld [vmem:[%s2] sm:$0x3]
      %v173 = vld [vmem:[%s165] sm:$0xff]
      %v174 = vld [vmem:[%s165 + $0x8] sm:$0xf]
      %v175 = vunpack.c.l.bf16 %v173
      %v176 = vunpack.c.h.bf16 %v173
      %v177 = vunpack.c.l.bf16 %v174
      %181 = vrot.lane.b32.xlu0 %v175, 127
      %v182 = vpop.permute.xlu0 %181
      %183 = vrot.lane.b32.xlu0 %v176, 127
      %v184 = vpop.permute.xlu0 %183
      %185 = vrot.lane.b32.xlu0 %v177, 127
      %v186 = vpop.permute.xlu0 %185
      %vm187 = vcmask 1039360
      %v188 = vsel %vm187, %v182, %v184
      %v189 = vsel %vm187, %v184, %v186
      %193 = vrot.lane.b32.xlu0 %v175, 122
      %v194 = vpop.permute.xlu0 %193
      %195 = vrot.lane.b32.xlu0 %v176, 122
      %v196 = vpop.permute.xlu0 %195
      %197 = vrot.lane.b32.xlu0 %v177, 122
      %v198 = vpop.permute.xlu0 %197
      %vm199 = vcmask 998400
      %v200 = vsel %vm199, %v194, %v196
      %v201 = vsel %vm199, %v196, %v198
      %205 = vrot.lane.b32.xlu0 %v175, 121
      %v206 = vpop.permute.xlu0 %205
      %207 = vrot.lane.b32.xlu0 %v176, 121
      %v208 = vpop.permute.xlu0 %207
      %209 = vrot.lane.b32.xlu0 %v177, 121
      %v210 = vpop.permute.xlu0 %209
      %vm211 = vcmask 990208
      %v212 = vsel %vm211, %v206, %v208
      %v213 = vsel %vm211, %v208, %v210
      %217 = vrot.lane.b32.xlu0 %v175, 92
      %v218 = vpop.permute.xlu0 %217
      %219 = vrot.lane.b32.xlu0 %v176, 92
      %v220 = vpop.permute.xlu0 %219
      %221 = vrot.lane.b32.xlu0 %v177, 92
      %v222 = vpop.permute.xlu0 %221
      %vm223 = vcmask 752640
      %v224 = vsel %vm223, %v218, %v220
      %v225 = vsel %vm223, %v220, %v222
      %229 = vrot.lane.b32.xlu0 %v175, 91
      %v230 = vpop.permute.xlu0 %229
      %231 = vrot.lane.b32.xlu0 %v176, 91
      %v232 = vpop.permute.xlu0 %231
      %233 = vrot.lane.b32.xlu0 %v177, 91
      %v234 = vpop.permute.xlu0 %233
      %vm235 = vcmask 744448
      %v236 = vsel %vm235, %v230, %v232
      %v237 = vsel %vm235, %v232, %v234
      %241 = vrot.lane.b32.xlu0 %v175, 86
      %v242 = vpop.permute.xlu0 %241
      %243 = vrot.lane.b32.xlu0 %v176, 86
      %v244 = vpop.permute.xlu0 %243
      %245 = vrot.lane.b32.xlu0 %v177, 86
      %v246 = vpop.permute.xlu0 %245
      %vm247 = vcmask 703488
      %v248 = vsel %vm247, %v242, %v244
      %v249 = vsel %vm247, %v244, %v246
      %253 = vrot.lane.b32.xlu0 %v175, 85
      %v254 = vpop.permute.xlu0 %253
      %255 = vrot.lane.b32.xlu0 %v176, 85
      %v256 = vpop.permute.xlu0 %255
      %257 = vrot.lane.b32.xlu0 %v177, 85
      %v258 = vpop.permute.xlu0 %257
      %vm259 = vcmask 695296
      %v260 = vsel %vm259, %v254, %v256
      %v261 = vsel %vm259, %v256, %v258
      %v265 = vpack.c.bf16 %v188, %v175
      %v266 = vpack.c.bf16 %v189, %v176
      %v267 = vpack.c.bf16 %v186, %v177
      %v268 = vpack.c.bf16 %v212, %v200
      %v269 = vpack.c.bf16 %v213, %v201
      %v270 = vpack.c.bf16 %v210, %v198
      %v271 = vpack.c.bf16 %v236, %v224
      %v272 = vpack.c.bf16 %v237, %v225
      %v273 = vpack.c.bf16 %v234, %v222
      %v274 = vpack.c.bf16 %v260, %v248
      %v275 = vpack.c.bf16 %v261, %v249
      %v276 = vpack.c.bf16 %v258, %v246
      %v277 = vld [vmem:[%s1] sm:$0x1]
      %279 = vset.pattern.permute.xlu0 0
      %280 = vperm.xlu0 %279, %v172
      %v281 = vpop.permute.xlu0 %280
      %295 = vrot.lane.b32.xlu0 %v265, 85
      %v296 = vpop.permute.xlu0 %295
      %297 = vrot.lane.b32.xlu0 %v266, 85
      %v298 = vpop.permute.xlu0 %297
      %299 = vrot.lane.b32.xlu0 %v267, 85
      %v300 = vpop.permute.xlu0 %299
      %301 = vrot.lane.b32.xlu0 %v268, 85
      %v302 = vpop.permute.xlu0 %301
      %303 = vrot.lane.b32.xlu0 %v269, 85
      %v304 = vpop.permute.xlu0 %303
      %305 = vrot.lane.b32.xlu0 %v270, 85
      %v306 = vpop.permute.xlu0 %305
      %307 = vrot.lane.b32.xlu0 %v271, 85
      %v308 = vpop.permute.xlu0 %307
      %309 = vrot.lane.b32.xlu0 %v272, 85
      %v310 = vpop.permute.xlu0 %309
      %311 = vrot.lane.b32.xlu0 %v273, 85
      %v312 = vpop.permute.xlu0 %311
      %313 = vrot.lane.b32.xlu0 %v274, 85
      %v314 = vpop.permute.xlu0 %313
      %315 = vrot.lane.b32.xlu0 %v275, 85
      %v316 = vpop.permute.xlu0 %315
      %317 = vrot.lane.b32.xlu0 %v276, 85
      %v318 = vpop.permute.xlu0 %317
      %vm319 = vcmask 695296
      %v320 = vsel %vm319, %v296, %v298
      %v321 = vsel %vm319, %v298, %v300
      %v322 = vsel %vm319, %v302, %v304
      %v323 = vsel %vm319, %v304, %v306
      %v324 = vsel %vm319, %v308, %v310
      %v325 = vsel %vm319, %v310, %v312
      %v326 = vsel %vm319, %v314, %v316
      %v327 = vsel %vm319, %v316, %v318
      %vm336 = vcmask 523264
      %v338 = vsel %vm336, %v277, 0
      %340 = vmatpush.bf16.msra.mxu0 0
      %341 = vmatpush.bf16.msra.mxu0 0
      %342 = vmatpush.bf16.msra.mxu0 0
      %343 = vmatpush.bf16.msra.mxu0 0
      %344 = vmatpush.bf16.msra.mxu0 %v326
      %345 = vmatpush.bf16.msra.mxu0 %v324
      %346 = vmatpush.bf16.msra.mxu0 %v322
      %347 = vmatpush.bf16.msra.mxu0 %v320
      %348 = vmatmul.bf16.gmra.mxu0 %v338
      %v349 = vpop.f32.mrf.mxu0
      %v350 = vadd.f32 %v281, %v349
      %v351 = vpop.f32.mrf.mxu0
      %352 = vdwg.mxu0
      %353 = vmatpush.bf16.msra.mxu0 0
      %354 = vmatpush.bf16.msra.mxu0 0
      %355 = vmatpush.bf16.msra.mxu0 0
      %356 = vmatpush.bf16.msra.mxu0 0
      %357 = vmatpush.bf16.msra.mxu0 %v327
      %358 = vmatpush.bf16.msra.mxu0 %v325
      %359 = vmatpush.bf16.msra.mxu0 %v323
      %360 = vmatpush.bf16.msra.mxu0 %v321
      %361 = vmatmul.bf16.gmra.mxu0 %v338
      %v362 = vpop.f32.mrf.mxu0
      %v363 = vadd.f32 %v281, %v362
      %v364 = vpop.f32.mrf.mxu0
      %365 = vdwg.mxu0
      %v368 = vrot.slane %v363, 6
      %vm369 = vcmask 1041408
      %v370 = vsel %vm369, %v350, %v368
      %372 = vst [vmem:[%s170] sm:$0xf] %v370
      %s373 = scalar_lea.vmem %s1, 1
      %v374 = vld [vmem:[%s373] sm:$0x1]
      %v376 = vsel %vm336, %v374, 0
      %378 = vmatpush.bf16.msra.mxu0 0
      %379 = vmatpush.bf16.msra.mxu0 0
      %380 = vmatpush.bf16.msra.mxu0 0
      %381 = vmatpush.bf16.msra.mxu0 0
      %382 = vmatpush.bf16.msra.mxu0 %v326
      %383 = vmatpush.bf16.msra.mxu0 %v324
      %384 = vmatpush.bf16.msra.mxu0 %v322
      %385 = vmatpush.bf16.msra.mxu0 %v320
      %386 = vmatmul.bf16.gmra.mxu0 %v376
      %v387 = vpop.f32.mrf.mxu0
      %v388 = vadd.f32 %v281, %v387
      %v389 = vpop.f32.mrf.mxu0
      %390 = vdwg.mxu0
      %391 = vmatpush.bf16.msra.mxu0 0
      %392 = vmatpush.bf16.msra.mxu0 0
      %393 = vmatpush.bf16.msra.mxu0 0
      %394 = vmatpush.bf16.msra.mxu0 0
      %395 = vmatpush.bf16.msra.mxu0 %v327
      %396 = vmatpush.bf16.msra.mxu0 %v325
      %397 = vmatpush.bf16.msra.mxu0 %v323
      %398 = vmatpush.bf16.msra.mxu0 %v321
      %399 = vmatmul.bf16.gmra.mxu0 %v376
      %v400 = vpop.f32.mrf.mxu0
      %v401 = vadd.f32 %v281, %v400
      %v402 = vpop.f32.mrf.mxu0
      %403 = vdwg.mxu0
      %v406 = vrot.slane %v401, 6
      %v407 = vsel %vm369, %v388, %v406
      %409 = vst [vmem:[%s170 + $0x4] sm:$0xf] %v407
      %s410 = scalar_lea.vmem %s1, 2
      %v411 = vld [vmem:[%s410] sm:$0x1]
      %v413 = vsel %vm336, %v411, 0
      %415 = vmatpush.bf16.msra.mxu0 0
      %416 = vmatpush.bf16.msra.mxu0 0
      %417 = vmatpush.bf16.msra.mxu0 0
      %418 = vmatpush.bf16.msra.mxu0 0
      %419 = vmatpush.bf16.msra.mxu0 %v326
      %420 = vmatpush.bf16.msra.mxu0 %v324
      %421 = vmatpush.bf16.msra.mxu0 %v322
      %422 = vmatpush.bf16.msra.mxu0 %v320
      %423 = vmatmul.bf16.gmra.mxu0 %v413
      %v424 = vpop.f32.mrf.mxu0
      %v425 = vadd.f32 %v281, %v424
      %v426 = vpop.f32.mrf.mxu0
      %427 = vdwg.mxu0
      %428 = vmatpush.bf16.msra.mxu0 0
      %429 = vmatpush.bf16.msra.mxu0 0
      %430 = vmatpush.bf16.msra.mxu0 0
      %431 = vmatpush.bf16.msra.mxu0 0
      %432 = vmatpush.bf16.msra.mxu0 %v327
      %433 = vmatpush.bf16.msra.mxu0 %v325
      %434 = vmatpush.bf16.msra.mxu0 %v323
      %435 = vmatpush.bf16.msra.mxu0 %v321
      %436 = vmatmul.bf16.gmra.mxu0 %v413
      %v437 = vpop.f32.mrf.mxu0
      %v438 = vadd.f32 %v281, %v437
      %v439 = vpop.f32.mrf.mxu0
      %440 = vdwg.mxu0
      %v443 = vrot.slane %v438, 6
      %v444 = vsel %vm369, %v425, %v443
      %446 = vst [vmem:[%s170 + $0x8] sm:$0xf] %v444
      %s447 = scalar_lea.vmem %s1, 3
      %v448 = vld [vmem:[%s447] sm:$0x1]
      %v450 = vsel %vm336, %v448, 0
      %452 = vmatpush.bf16.msra.mxu0 0
      %453 = vmatpush.bf16.msra.mxu0 0
      %454 = vmatpush.bf16.msra.mxu0 0
      %455 = vmatpush.bf16.msra.mxu0 0
      %456 = vmatpush.bf16.msra.mxu0 %v326
      %457 = vmatpush.bf16.msra.mxu0 %v324
      %458 = vmatpush.bf16.msra.mxu0 %v322
      %459 = vmatpush.bf16.msra.mxu0 %v320
      %460 = vmatmul.bf16.gmra.mxu0 %v450
      %v461 = vpop.f32.mrf.mxu0
      %v462 = vadd.f32 %v281, %v461
      %v463 = vpop.f32.mrf.mxu0
      %464 = vdwg.mxu0
      %465 = vmatpush.bf16.msra.mxu0 0
      %466 = vmatpush.bf16.msra.mxu0 0
      %467 = vmatpush.bf16.msra.mxu0 0
      %468 = vmatpush.bf16.msra.mxu0 0
      %469 = vmatpush.bf16.msra.mxu0 %v327
      %470 = vmatpush.bf16.msra.mxu0 %v325
      %471 = vmatpush.bf16.msra.mxu0 %v323
      %472 = vmatpush.bf16.msra.mxu0 %v321
      %473 = vmatmul.bf16.gmra.mxu0 %v450
      %v474 = vpop.f32.mrf.mxu0
      %v475 = vadd.f32 %v281, %v474
      %v476 = vpop.f32.mrf.mxu0
      %477 = vdwg.mxu0
      %v480 = vrot.slane %v475, 6
      %v481 = vsel %vm369, %v462, %v480
      %483 = vst [vmem:[%s170 + $0xc] sm:$0xf] %v481
      %s484 = scalar_lea.vmem %s1, 4
      %v485 = vld [vmem:[%s484] sm:$0x1]
      %v487 = vsel %vm336, %v485, 0
      %489 = vmatpush.bf16.msra.mxu0 0
      %490 = vmatpush.bf16.msra.mxu0 0
      %491 = vmatpush.bf16.msra.mxu0 0
      %492 = vmatpush.bf16.msra.mxu0 0
      %493 = vmatpush.bf16.msra.mxu0 %v326
      %494 = vmatpush.bf16.msra.mxu0 %v324
      %495 = vmatpush.bf16.msra.mxu0 %v322
      %496 = vmatpush.bf16.msra.mxu0 %v320
      %497 = vmatmul.bf16.gmra.mxu0 %v487
      %v498 = vpop.f32.mrf.mxu0
      %v499 = vadd.f32 %v281, %v498
      %v500 = vpop.f32.mrf.mxu0
      %501 = vdwg.mxu0
      %502 = vmatpush.bf16.msra.mxu0 0
      %503 = vmatpush.bf16.msra.mxu0 0
      %504 = vmatpush.bf16.msra.mxu0 0
      %505 = vmatpush.bf16.msra.mxu0 0
      %506 = vmatpush.bf16.msra.mxu0 %v327
      %507 = vmatpush.bf16.msra.mxu0 %v325
      %508 = vmatpush.bf16.msra.mxu0 %v323
      %509 = vmatpush.bf16.msra.mxu0 %v321
      %510 = vmatmul.bf16.gmra.mxu0 %v487
      %v511 = vpop.f32.mrf.mxu0
      %v512 = vadd.f32 %v281, %v511
      %v513 = vpop.f32.mrf.mxu0
      %514 = vdwg.mxu0
      %v517 = vrot.slane %v512, 6
      %v518 = vsel %vm369, %v499, %v517
      %520 = vst [vmem:[%s170 + $0x10] sm:$0xf] %v518
      %s521 = scalar_lea.vmem %s1, 5
      %v522 = vld [vmem:[%s521] sm:$0x1]
      %v524 = vsel %vm336, %v522, 0
      %526 = vmatpush.bf16.msra.mxu0 0
      %527 = vmatpush.bf16.msra.mxu0 0
      %528 = vmatpush.bf16.msra.mxu0 0
      %529 = vmatpush.bf16.msra.mxu0 0
      %530 = vmatpush.bf16.msra.mxu0 %v326
      %531 = vmatpush.bf16.msra.mxu0 %v324
      %532 = vmatpush.bf16.msra.mxu0 %v322
      %533 = vmatpush.bf16.msra.mxu0 %v320
      %534 = vmatmul.bf16.gmra.mxu0 %v524
      %v535 = vpop.f32.mrf.mxu0
      %v536 = vadd.f32 %v281, %v535
      %v537 = vpop.f32.mrf.mxu0
      %538 = vdwg.mxu0
      %539 = vmatpush.bf16.msra.mxu0 0
      %540 = vmatpush.bf16.msra.mxu0 0
      %541 = vmatpush.bf16.msra.mxu0 0
      %542 = vmatpush.bf16.msra.mxu0 0
      %543 = vmatpush.bf16.msra.mxu0 %v327
      %544 = vmatpush.bf16.msra.mxu0 %v325
      %545 = vmatpush.bf16.msra.mxu0 %v323
      %546 = vmatpush.bf16.msra.mxu0 %v321
      %547 = vmatmul.bf16.gmra.mxu0 %v524
      %v548 = vpop.f32.mrf.mxu0
      %v549 = vadd.f32 %v281, %v548
      %v550 = vpop.f32.mrf.mxu0
      %551 = vdwg.mxu0
      %v554 = vrot.slane %v549, 6
      %v555 = vsel %vm369, %v536, %v554
      %557 = vst [vmem:[%s170 + $0x14] sm:$0xf] %v555
      %s558 = scalar_lea.vmem %s1, 6
      %v559 = vld [vmem:[%s558] sm:$0x1]
      %v561 = vsel %vm336, %v559, 0
      %563 = vmatpush.bf16.msra.mxu0 0
      %564 = vmatpush.bf16.msra.mxu0 0
      %565 = vmatpush.bf16.msra.mxu0 0
      %566 = vmatpush.bf16.msra.mxu0 0
      %567 = vmatpush.bf16.msra.mxu0 %v326
      %568 = vmatpush.bf16.msra.mxu0 %v324
      %569 = vmatpush.bf16.msra.mxu0 %v322
      %570 = vmatpush.bf16.msra.mxu0 %v320
      %571 = vmatmul.bf16.gmra.mxu0 %v561
      %v572 = vpop.f32.mrf.mxu0
      %v573 = vadd.f32 %v281, %v572
      %v574 = vpop.f32.mrf.mxu0
      %575 = vdwg.mxu0
      %576 = vmatpush.bf16.msra.mxu0 0
      %577 = vmatpush.bf16.msra.mxu0 0
      %578 = vmatpush.bf16.msra.mxu0 0
      %579 = vmatpush.bf16.msra.mxu0 0
      %580 = vmatpush.bf16.msra.mxu0 %v327
      %581 = vmatpush.bf16.msra.mxu0 %v325
      %582 = vmatpush.bf16.msra.mxu0 %v323
      %583 = vmatpush.bf16.msra.mxu0 %v321
      %584 = vmatmul.bf16.gmra.mxu0 %v561
      %v585 = vpop.f32.mrf.mxu0
      %v586 = vadd.f32 %v281, %v585
      %v587 = vpop.f32.mrf.mxu0
      %588 = vdwg.mxu0
      %v591 = vrot.slane %v586, 6
      %v592 = vsel %vm369, %v573, %v591
      %594 = vst [vmem:[%s170 + $0x18] sm:$0xf] %v592
      %s595 = scalar_lea.vmem %s1, 7
      %v596 = vld [vmem:[%s595] sm:$0x1]
      %v598 = vsel %vm336, %v596, 0
      %600 = vmatpush.bf16.msra.mxu0 0
      %601 = vmatpush.bf16.msra.mxu0 0
      %602 = vmatpush.bf16.msra.mxu0 0
      %603 = vmatpush.bf16.msra.mxu0 0
      %604 = vmatpush.bf16.msra.mxu0 %v326
      %605 = vmatpush.bf16.msra.mxu0 %v324
      %606 = vmatpush.bf16.msra.mxu0 %v322
      %607 = vmatpush.bf16.msra.mxu0 %v320
      %608 = vmatmul.bf16.gmra.mxu0 %v598
      %v609 = vpop.f32.mrf.mxu0
      %v610 = vadd.f32 %v281, %v609
      %v611 = vpop.f32.mrf.mxu0
      %612 = vdwg.mxu0
      %613 = vmatpush.bf16.msra.mxu0 0
      %614 = vmatpush.bf16.msra.mxu0 0
      %615 = vmatpush.bf16.msra.mxu0 0
      %616 = vmatpush.bf16.msra.mxu0 0
      %617 = vmatpush.bf16.msra.mxu0 %v327
      %618 = vmatpush.bf16.msra.mxu0 %v325
      %619 = vmatpush.bf16.msra.mxu0 %v323
      %620 = vmatpush.bf16.msra.mxu0 %v321
      %621 = vmatmul.bf16.gmra.mxu0 %v598
      %v622 = vpop.f32.mrf.mxu0
      %v623 = vadd.f32 %v281, %v622
      %v624 = vpop.f32.mrf.mxu0
      %625 = vdwg.mxu0
      %v628 = vrot.slane %v623, 6
      %v629 = vsel %vm369, %v610, %v628
      %631 = vst [vmem:[%s170 + $0x1c] sm:$0xf] %v629
      %p632 = scmp.lt.s32.totalorder %s14, 1
      %s633 = scalar_select %p632, %s14, 1
      %s634 = smul.addr %s633, 16
      %s635 = smul.addr %s634, 2
      %s636 = scalar_lea.vmem %s3, %s635
      // Predicated region
      $region33: #{autoencoder3d_forward.7} parent=31 // pred_check
        %p637 = pneg %p100
      $region34: #{autoencoder3d_forward.7} parent=31 // pred_check_branch
        %639 = sbr.rel (%p637) target = $region36
      $region35: #{autoencoder3d_forward.7} parent=31 // pred_region
        _
      $region36: #{autoencoder3d_forward.7} parent=31 // pred_fallthru
        _
    $region32: #{autoencoder3d_forward.7} parent=5 // pred_fallthru
      _
    %p640 = scmp.le.s32.totalorder 2, %s9
    // Predicated region
    $region37: #{autoencoder3d_forward.7} parent=5 // pred_check
      %p641 = pneg %p640
    $region38: #{autoencoder3d_forward.7} parent=5 // pred_check_branch
      %643 = sbr.rel (%p641) target = $region40
    $region39: #{autoencoder3d_forward.7} parent=5 // pred_region
      %s644 = ssub.s32 %s9, 2
      // Predicated region
      $region41: #{autoencoder3d_forward.7} parent=39 // pred_check
        %p645 = pneg %p106
      $region42: #{autoencoder3d_forward.7} parent=39 // pred_check_branch
        %647 = sbr.rel (%p645) target = $region44
      $region43: #{autoencoder3d_forward.7} parent=39 // pred_region
        %p648 = scmp.lt.s32.totalorder %s15, 1
        %s649 = scalar_select %p648, %s15, 1
        %s650 = smul.addr %s649, 16
        %s651 = smul.addr %s650, 2
        %s652 = scalar_lea.vmem %s3, %s651
      $region44: #{autoencoder3d_forward.7} parent=39 // pred_fallthru
        _
    $region40: #{autoencoder3d_forward.7} parent=5 // pred_fallthru
      _
  $region6: #{autoencoder3d_forward.7} parent=0 // loop_footer
    %s13 = sadd.s32 1, %s9
  $region7: #{autoencoder3d_forward.7} parent=0 // loop_footer_branch
    %8 = sbr.rel target = $region3
  $region8: #{autoencoder3d_forward.7} parent=0 // loop_exit
    _

</llo_original>
